<compile_context>
chip_gen: v7x
topology: tpu7x:2x2x1
jax: 0.10.0
libtpu: 0.0.40
codegen_flags: <defaults>
</compile_context>

<pallas_src>
import functools

import jax
import jax.numpy as jnp
from jax.experimental import pallas as pl
from jax.experimental.pallas import tpu as pltpu

ALPHA = 0.05


def _leaky(v, alpha):
    # max(v, alpha*v) == LeakyReLU for 0 < alpha < 1 (one fewer VPU op than
    # cmp+select).
    return jnp.maximum(v, alpha * v)


def mka_kernel(x_ref, w2s_ref, b21_ref, w3s_ref, b3_ref, wr_ref, br_ref,
               o_ref, xpad_ref, *, H, W, C, alpha, cdt):
    """One image per grid step.

    x_ref   : (1, H, W, C) f32     input block (conv source + residual)
    w2s_ref : (3, 3C, 2C)  cdt     dx-major K-stacked 3x3 weights; center tap
                                   (dx=1, dy=1) carries the fused 1x1 conv in
                                   output columns [C:2C]
    b21_ref : (1, 2C) f32          [b2 | b1]
    w3s_ref : (5, 5C, C)   cdt     dx-major K-stacked 5x5 weights
    b3_ref  : (1, C)  f32
    wr_ref  : (3C, C) cdt          reduce weights, rows [wr2; wr1; wr3]
    br_ref  : (1, C)  f32
    o_ref   : (1, H, W, C) f32
    xpad_ref: (H+4, W+4, C) cdt    VMEM scratch with a 2-px zero halo
    """
    HW = H * W
    x = x_ref[0]                                    # (H, W, C) f32, contiguous

    # ---- in-kernel halo padding (replaces the external jnp.pad / xp DMA) ----
    xpad_ref[...] = jnp.zeros((H + 4, W + 4, C), cdt)
    xpad_ref[2:H + 2, 2:W + 2, :] = x.astype(cdt)

    # ---- transposed im2col: one sublane-shifted column slice per dx, shared
    # ---- by the 3x3 (column offsets 1..3) and 5x5 (0..4) branches.
    cols = [xpad_ref[:, dx:dx + W, :] for dx in range(5)]   # each (H+4, W, C)

    # ---- 3x3 conv (pad=1) with the 1x1 conv fused on the center tap ----
    acc21 = jnp.zeros((HW, 2 * C), jnp.float32)
    for dx in range(3):
        col = cols[dx + 1]
        slab = jnp.concatenate([col[1 + dy:1 + dy + H] for dy in range(3)],
                               axis=-1).reshape(HW, 3 * C)
        acc21 = acc21 + jnp.dot(slab, w2s_ref[dx],
                                preferred_element_type=jnp.float32)
    o21 = _leaky(acc21 + b21_ref[...], alpha)       # (HW, 2C) = [o2 | o1]

    # ---- 5x5 conv (pad=2) ----
    acc3 = jnp.zeros((HW, C), jnp.float32)
    for dx in range(5):
        slab = jnp.concatenate([cols[dx][dy:dy + H] for dy in range(5)],
                               axis=-1).reshape(HW, 5 * C)
        acc3 = acc3 + jnp.dot(slab, w3s_ref[dx],
                              preferred_element_type=jnp.float32)
    o3 = _leaky(acc3 + b3_ref[...], alpha)          # (HW, C)

    # ---- single K=3C reduce matmul, bias + LeakyReLU + residual ----
    cat = jnp.concatenate([o21, o3], axis=-1)       # (HW, 3C) = [o2 | o1 | o3]
    red = jnp.dot(cat.astype(cdt), wr_ref[...],
                  preferred_element_type=jnp.float32)
    red = _leaky(red + br_ref[...], alpha)
    o_ref[0] = (x + red.reshape(H, W, C)).astype(o_ref.dtype)


def _pack_params(params, C, cdt):
    """Pre-stack weights to match the kernel's dx-major im2col slab order."""
    w1, b1, w2, b2, w3, b3, wr1, wr2, wr3, br = params
    # (dy, dx, ci, co) -> (dx, dy*C + ci, co)
    w2t = jnp.transpose(w2, (1, 0, 2, 3)).reshape(3, 3 * C, C)
    w2s = jnp.zeros((3, 3 * C, 2 * C), jnp.float32)
    w2s = w2s.at[:, :, :C].set(w2t)
    # Fuse the 1x1 conv as extra output columns on the center tap (dx=1, dy=1).
    w2s = w2s.at[1, C:2 * C, C:].set(w1)
    b21 = jnp.concatenate([b2.reshape(1, C), b1.reshape(1, C)], axis=-1)
    w3s = jnp.transpose(w3, (1, 0, 2, 3)).reshape(5, 5 * C, C)
    b3v = b3.reshape(1, C)
    # Reduce rows ordered to match the in-kernel cat lane order [o2 | o1 | o3].
    wr = jnp.concatenate([wr2, wr1, wr3], axis=0)
    brv = br.reshape(1, C)
    return (w2s.astype(cdt), b21, w3s.astype(cdt), b3v, wr.astype(cdt), brv)


def mka_forward(x, params, *, alpha=ALPHA, compute_dtype=jnp.bfloat16):
    """x: (N, H, W, C) float32 NHWC.  compute_dtype only affects MXU operands;
    accumulation, biases, LeakyReLU and the residual add stay float32."""
    N, H, W, C = x.shape
    cdt = compute_dtype
    w2s, b21, w3s, b3v, wr, brv = _pack_params(params, C, cdt)

    # TODO(synk): for large images (or N=1 on v7x), add spatial H-tiling with a
    # manual halo DMA (pl.ANY + make_async_copy) so the per-step working set
    # respects v7x's 64 MiB VMEM and both TensorCores get parallel grid work,
    # and single-buffer the constant weight specs; at the demo sizes the
    # whole-image block (~2 MiB incl. weights) fits every scoped VMEM limit.
    kernel = functools.partial(mka_kernel, H=H, W=W, C=C, alpha=alpha, cdt=cdt)

    def full_spec(a):
        nd = a.ndim
        return pl.BlockSpec(a.shape, lambda n, _nd=nd: (0,) * _nd)

    grid_spec = pltpu.PrefetchScalarGridSpec(
        num_scalar_prefetch=0,
        grid=(N,),
        in_specs=[
            pl.BlockSpec((1, H, W, C), lambda n: (n, 0, 0, 0)),   # x
            full_spec(w2s), full_spec(b21),
            full_spec(w3s), full_spec(b3v),
            full_spec(wr), full_spec(brv),
        ],
        out_specs=pl.BlockSpec((1, H, W, C), lambda n: (n, 0, 0, 0)),
        scratch_shapes=[pltpu.VMEM((H + 4, W + 4, C), cdt)],
    )

    return pl.pallas_call(
        kernel,
        out_shape=jax.ShapeDtypeStruct((N, H, W, C), jnp.float32),
        grid_spec=grid_spec,
        compiler_params=pltpu.CompilerParams(
            dimension_semantics=("parallel",),
            vmem_limit_bytes=32 * 1024 * 1024),
    )(x, w2s, b21, w3s, b3v, wr, brv)


def init_params(key, C):
    """Deterministic PyTorch-like uniform init (bound = 1/sqrt(fan_in))."""
    keys = jax.random.split(key, 10)

    def u(k, shape, fan_in):
        bound = 1.0 / (fan_in ** 0.5)
        return jax.random.uniform(k, shape, jnp.float32, -bound, bound)

    w1 = u(keys[0], (C, C), C)                 # 1x1 conv, (in, out)
    b1 = u(keys[1], (1, 1, C), C)
    w2 = u(keys[2], (3, 3, C, C), 9 * C)       # HWIO
    b2 = u(keys[3], (1, 1, C), 9 * C)
    w3 = u(keys[4], (5, 5, C, C), 25 * C)      # HWIO
    b3 = u(keys[5], (1, 1, C), 25 * C)
    wr1 = u(keys[6], (C, C), 3 * C)            # reduce weight split per branch
    wr2 = u(keys[7], (C, C), 3 * C)
    wr3 = u(keys[8], (C, C), 3 * C)
    br = u(keys[9], (1, 1, C), 3 * C)
    return (w1, b1, w2, b2, w3, b3, wr1, wr2, wr3, br)


def ref_forward(x, params, alpha=ALPHA):
    """Pure-JAX reference (mirrors the PyTorch forward in NHWC)."""
    w1, b1, w2, b2, w3, b3, wr1, wr2, wr3, br = params
    C = x.shape[-1]

    def conv(inp, w_hwio, b, pad):
        y = jax.lax.conv_general_dilated(
            inp, w_hwio, (1, 1), [(pad, pad), (pad, pad)],
            dimension_numbers=('NHWC', 'HWIO', 'NHWC'))
        return y + b.reshape(1, 1, 1, -1)

    def leaky(v):
        return jnp.where(v > 0, v, alpha * v)

    o1 = leaky(conv(x, w1.reshape(1, 1, C, C), b1, 0))
    o2 = leaky(conv(x, w2, b2, 1))
    o3 = leaky(conv(x, w3, b3, 2))
    cat = jnp.concatenate([o1, o2, o3], axis=-1)
    wr = jnp.concatenate([wr1, wr2, wr3], axis=0).reshape(1, 1, 3 * C, C)
    red = leaky(conv(cat, wr, br, 0))
    return x + red


if __name__ == "__main__":
    N, H, W, C = 2, 16, 16, 64   # n_feats=64 (module default), small spatial

    key = jax.random.PRNGKey(0)
    kx, kp = jax.random.split(key)
    x = jax.random.normal(kx, (N, H, W, C), dtype=jnp.float32)
    params = init_params(kp, C)

    ref = jax.block_until_ready(ref_forward(x, params))

    # f32 MXU path: faithful to the PyTorch module's numerics (parity check).
    out_f32 = jax.block_until_ready(
        mka_forward(x, params, compute_dtype=jnp.float32))
    assert out_f32.shape == (N, H, W, C)
    assert jnp.allclose(out_f32, ref, rtol=1e-4, atol=1e-4), \
        float(jnp.max(jnp.abs(out_f32 - ref)))

    # Default (bf16 MXU operands, f32 accumulate/bias/leaky/residual).
    out_bf16 = jax.block_until_ready(mka_forward(x, params))
    assert jnp.allclose(out_bf16, ref, rtol=5e-2, atol=5e-2), \
        float(jnp.max(jnp.abs(out_bf16 - ref)))

    print("KERNEL_OK")
</pallas_src>

<mosaic_0001>
module attributes {stable_mosaic.version = 11 : i64} {
  func.func @mka_kernel(%arg0: i32, %arg1: memref<1x16x16x64xf32, #tpu.memory_space<vmem>>, %arg2: memref<3x192x128xf32, #tpu.memory_space<vmem>>, %arg3: memref<1x128xf32, #tpu.memory_space<vmem>>, %arg4: memref<5x320x64xf32, #tpu.memory_space<vmem>>, %arg5: memref<1x64xf32, #tpu.memory_space<vmem>>, %arg6: memref<192x64xf32, #tpu.memory_space<vmem>>, %arg7: memref<1x64xf32, #tpu.memory_space<vmem>>, %arg8: memref<1x16x16x64xf32, #tpu.memory_space<vmem>>, %arg9: memref<20x20x64xf32, #tpu.memory_space<vmem>>) attributes {dimension_semantics = [#tpu.dimension_semantics<parallel>], iteration_bounds = array<i64: 2>, scalar_prefetch = 0 : i64, scratch_operands = 1 : i64, tpu.core_type = #tpu.core_type<tc>, window_params = [{transform_indices = @transform_0, window_bounds = array<i64: 1, 16, 16, 64>}, {pipeline_mode = #tpu.pipeline_mode<synchronous>, transform_indices = @transform_1, window_bounds = array<i64: 3, 192, 128>}, {pipeline_mode = #tpu.pipeline_mode<synchronous>, transform_indices = @transform_2, window_bounds = array<i64: 1, 128>}, {pipeline_mode = #tpu.pipeline_mode<synchronous>, transform_indices = @transform_3, window_bounds = array<i64: 5, 320, 64>}, {pipeline_mode = #tpu.pipeline_mode<synchronous>, transform_indices = @transform_4, window_bounds = array<i64: 1, 64>}, {pipeline_mode = #tpu.pipeline_mode<synchronous>, transform_indices = @transform_5, window_bounds = array<i64: 192, 64>}, {pipeline_mode = #tpu.pipeline_mode<synchronous>, transform_indices = @transform_6, window_bounds = array<i64: 1, 64>}, {transform_indices = @transform_7, window_bounds = array<i64: 1, 16, 16, 64>}]} {
    %c0 = arith.constant 0 : index
    %c0_0 = arith.constant 0 : index
    %c0_1 = arith.constant 0 : index
    %c0_2 = arith.constant 0 : index
    %0 = vector.load %arg1[%c0, %c0_0, %c0_1, %c0_2] : memref<1x16x16x64xf32, #tpu.memory_space<vmem>>, vector<1x16x16x64xf32>
    %1 = vector.shape_cast %0 : vector<1x16x16x64xf32> to vector<16x16x64xf32>
    %cst = arith.constant 0.000000e+00 : f32
    %2 = vector.broadcast %cst : f32 to vector<20x20x64xf32>
    %c0_3 = arith.constant 0 : index
    %c0_4 = arith.constant 0 : index
    %c0_5 = arith.constant 0 : index
    %3 = vector.load %arg9[%c0_3, %c0_4, %c0_5] : memref<20x20x64xf32, #tpu.memory_space<vmem>>, vector<20x20x64xf32>
    tpu.vector_store %arg9[%c0_3, %c0_4, %c0_5], %2 {strides = array<i32>} : memref<20x20x64xf32, #tpu.memory_space<vmem>>, vector<20x20x64xf32>,
    %c2 = arith.constant 2 : index
    %c2_6 = arith.constant 2 : index
    %c0_7 = arith.constant 0 : index
    %4 = vector.load %arg9[%c2, %c2_6, %c0_7] : memref<20x20x64xf32, #tpu.memory_space<vmem>>, vector<16x16x64xf32>
    tpu.vector_store %arg9[%c2, %c2_6, %c0_7], %1 {strides = array<i32>} : memref<20x20x64xf32, #tpu.memory_space<vmem>>, vector<16x16x64xf32>,
    %c0_8 = arith.constant 0 : index
    %c0_9 = arith.constant 0 : index
    %c0_10 = arith.constant 0 : index
    %5 = vector.load %arg9[%c0_8, %c0_9, %c0_10] : memref<20x20x64xf32, #tpu.memory_space<vmem>>, vector<20x16x64xf32>
    %c0_11 = arith.constant 0 : index
    %c1 = arith.constant 1 : index
    %c0_12 = arith.constant 0 : index
    %6 = vector.load %arg9[%c0_11, %c1, %c0_12] : memref<20x20x64xf32, #tpu.memory_space<vmem>>, vector<20x16x64xf32>
    %c0_13 = arith.constant 0 : index
    %c2_14 = arith.constant 2 : index
    %c0_15 = arith.constant 0 : index
    %7 = vector.load %arg9[%c0_13, %c2_14, %c0_15] : memref<20x20x64xf32, #tpu.memory_space<vmem>>, vector<20x16x64xf32>
    %c0_16 = arith.constant 0 : index
    %c3 = arith.constant 3 : index
    %c0_17 = arith.constant 0 : index
    %8 = vector.load %arg9[%c0_16, %c3, %c0_17] : memref<20x20x64xf32, #tpu.memory_space<vmem>>, vector<20x16x64xf32>
    %c0_18 = arith.constant 0 : index
    %c4 = arith.constant 4 : index
    %c0_19 = arith.constant 0 : index
    %9 = vector.load %arg9[%c0_18, %c4, %c0_19] : memref<20x20x64xf32, #tpu.memory_space<vmem>>, vector<20x16x64xf32>
    %cst_20 = arith.constant 0.000000e+00 : f32
    %10 = vector.broadcast %cst_20 : f32 to vector<256x128xf32>
    %11 = vector.extract_strided_slice %6 {offsets = [1, 0, 0], sizes = [16, 16, 64], strides = [1, 1, 1]} : vector<20x16x64xf32> to vector<16x16x64xf32>
    %12 = vector.extract_strided_slice %6 {offsets = [2, 0, 0], sizes = [16, 16, 64], strides = [1, 1, 1]} : vector<20x16x64xf32> to vector<16x16x64xf32>
    %13 = vector.extract_strided_slice %6 {offsets = [3, 0, 0], sizes = [16, 16, 64], strides = [1, 1, 1]} : vector<20x16x64xf32> to vector<16x16x64xf32>
    %14 = tpu.concatenate %11, %12, %13 in 2 : vector<16x16x64xf32>, vector<16x16x64xf32>, vector<16x16x64xf32> -> vector<16x16x192xf32>
    %15 = vector.shape_cast %14 : vector<16x16x192xf32> to vector<256x192xf32>
    %c0_21 = arith.constant 0 : index
    %c0_22 = arith.constant 0 : index
    %c0_23 = arith.constant 0 : index
    %16 = vector.load %arg2[%c0_21, %c0_22, %c0_23] : memref<3x192x128xf32, #tpu.memory_space<vmem>>, vector<1x192x128xf32>
    %17 = vector.shape_cast %16 : vector<1x192x128xf32> to vector<192x128xf32>
    %cst_24 = arith.constant dense<0.000000e+00> : vector<256x128xf32>
    %18 = tpu.matmul %15, %17, %cst_24 {dimension_numbers = #tpu.dot_dimension_numbers<[1], [0], [0], [1], [0, 0, 1, 1], [], []>} : vector<256x192xf32>, vector<192x128xf32>, vector<256x128xf32> -> vector<256x128xf32>
    %19 = arith.addf %10, %18 : vector<256x128xf32>
    %20 = vector.extract_strided_slice %7 {offsets = [1, 0, 0], sizes = [16, 16, 64], strides = [1, 1, 1]} : vector<20x16x64xf32> to vector<16x16x64xf32>
    %21 = vector.extract_strided_slice %7 {offsets = [2, 0, 0], sizes = [16, 16, 64], strides = [1, 1, 1]} : vector<20x16x64xf32> to vector<16x16x64xf32>
    %22 = vector.extract_strided_slice %7 {offsets = [3, 0, 0], sizes = [16, 16, 64], strides = [1, 1, 1]} : vector<20x16x64xf32> to vector<16x16x64xf32>
    %23 = tpu.concatenate %20, %21, %22 in 2 : vector<16x16x64xf32>, vector<16x16x64xf32>, vector<16x16x64xf32> -> vector<16x16x192xf32>
    %24 = vector.shape_cast %23 : vector<16x16x192xf32> to vector<256x192xf32>
    %c1_25 = arith.constant 1 : index
    %c0_26 = arith.constant 0 : index
    %c0_27 = arith.constant 0 : index
    %25 = vector.load %arg2[%c1_25, %c0_26, %c0_27] : memref<3x192x128xf32, #tpu.memory_space<vmem>>, vector<1x192x128xf32>
    %26 = vector.shape_cast %25 : vector<1x192x128xf32> to vector<192x128xf32>
    %cst_28 = arith.constant dense<0.000000e+00> : vector<256x128xf32>
    %27 = tpu.matmul %24, %26, %cst_28 {dimension_numbers = #tpu.dot_dimension_numbers<[1], [0], [0], [1], [0, 0, 1, 1], [], []>} : vector<256x192xf32>, vector<192x128xf32>, vector<256x128xf32> -> vector<256x128xf32>
    %28 = arith.addf %19, %27 : vector<256x128xf32>
    %29 = vector.extract_strided_slice %8 {offsets = [1, 0, 0], sizes = [16, 16, 64], strides = [1, 1, 1]} : vector<20x16x64xf32> to vector<16x16x64xf32>
    %30 = vector.extract_strided_slice %8 {offsets = [2, 0, 0], sizes = [16, 16, 64], strides = [1, 1, 1]} : vector<20x16x64xf32> to vector<16x16x64xf32>
    %31 = vector.extract_strided_slice %8 {offsets = [3, 0, 0], sizes = [16, 16, 64], strides = [1, 1, 1]} : vector<20x16x64xf32> to vector<16x16x64xf32>
    %32 = tpu.concatenate %29, %30, %31 in 2 : vector<16x16x64xf32>, vector<16x16x64xf32>, vector<16x16x64xf32> -> vector<16x16x192xf32>
    %33 = vector.shape_cast %32 : vector<16x16x192xf32> to vector<256x192xf32>
    %c2_29 = arith.constant 2 : index
    %c0_30 = arith.constant 0 : index
    %c0_31 = arith.constant 0 : index
    %34 = vector.load %arg2[%c2_29, %c0_30, %c0_31] : memref<3x192x128xf32, #tpu.memory_space<vmem>>, vector<1x192x128xf32>
    %35 = vector.shape_cast %34 : vector<1x192x128xf32> to vector<192x128xf32>
    %cst_32 = arith.constant dense<0.000000e+00> : vector<256x128xf32>
    %36 = tpu.matmul %33, %35, %cst_32 {dimension_numbers = #tpu.dot_dimension_numbers<[1], [0], [0], [1], [0, 0, 1, 1], [], []>} : vector<256x192xf32>, vector<192x128xf32>, vector<256x128xf32> -> vector<256x128xf32>
    %37 = arith.addf %28, %36 : vector<256x128xf32>
    %c0_33 = arith.constant 0 : index
    %c0_34 = arith.constant 0 : index
    %38 = vector.load %arg3[%c0_33, %c0_34] : memref<1x128xf32, #tpu.memory_space<vmem>>, vector<1x128xf32>
    %39 = vector.broadcast %38 : vector<1x128xf32> to vector<256x128xf32>
    %40 = arith.addf %37, %39 : vector<256x128xf32>
    %cst_35 = arith.constant 5.000000e-02 : f32
    %41 = vector.broadcast %cst_35 : f32 to vector<256x128xf32>
    %42 = arith.mulf %41, %40 : vector<256x128xf32>
    %43 = arith.maximumf %40, %42 : vector<256x128xf32>
    %cst_36 = arith.constant 0.000000e+00 : f32
    %44 = vector.broadcast %cst_36 : f32 to vector<256x64xf32>
    %45 = vector.extract_strided_slice %5 {offsets = [0, 0, 0], sizes = [16, 16, 64], strides = [1, 1, 1]} : vector<20x16x64xf32> to vector<16x16x64xf32>
    %46 = vector.extract_strided_slice %5 {offsets = [1, 0, 0], sizes = [16, 16, 64], strides = [1, 1, 1]} : vector<20x16x64xf32> to vector<16x16x64xf32>
    %47 = vector.extract_strided_slice %5 {offsets = [2, 0, 0], sizes = [16, 16, 64], strides = [1, 1, 1]} : vector<20x16x64xf32> to vector<16x16x64xf32>
    %48 = vector.extract_strided_slice %5 {offsets = [3, 0, 0], sizes = [16, 16, 64], strides = [1, 1, 1]} : vector<20x16x64xf32> to vector<16x16x64xf32>
    %49 = vector.extract_strided_slice %5 {offsets = [4, 0, 0], sizes = [16, 16, 64], strides = [1, 1, 1]} : vector<20x16x64xf32> to vector<16x16x64xf32>
    %50 = tpu.concatenate %45, %46, %47, %48, %49 in 2 : vector<16x16x64xf32>, vector<16x16x64xf32>, vector<16x16x64xf32>, vector<16x16x64xf32>, vector<16x16x64xf32> -> vector<16x16x320xf32>
    %51 = vector.shape_cast %50 : vector<16x16x320xf32> to vector<256x320xf32>
    %c0_37 = arith.constant 0 : index
    %c0_38 = arith.constant 0 : index
    %c0_39 = arith.constant 0 : index
    %52 = vector.load %arg4[%c0_37, %c0_38, %c0_39] : memref<5x320x64xf32, #tpu.memory_space<vmem>>, vector<1x320x64xf32>
    %53 = vector.shape_cast %52 : vector<1x320x64xf32> to vector<320x64xf32>
    %cst_40 = arith.constant dense<0.000000e+00> : vector<256x64xf32>
    %54 = tpu.matmul %51, %53, %cst_40 {dimension_numbers = #tpu.dot_dimension_numbers<[1], [0], [0], [1], [0, 0, 1, 1], [], []>} : vector<256x320xf32>, vector<320x64xf32>, vector<256x64xf32> -> vector<256x64xf32>
    %55 = arith.addf %44, %54 : vector<256x64xf32>
    %56 = vector.extract_strided_slice %6 {offsets = [0, 0, 0], sizes = [16, 16, 64], strides = [1, 1, 1]} : vector<20x16x64xf32> to vector<16x16x64xf32>
    %57 = vector.extract_strided_slice %6 {offsets = [1, 0, 0], sizes = [16, 16, 64], strides = [1, 1, 1]} : vector<20x16x64xf32> to vector<16x16x64xf32>
    %58 = vector.extract_strided_slice %6 {offsets = [2, 0, 0], sizes = [16, 16, 64], strides = [1, 1, 1]} : vector<20x16x64xf32> to vector<16x16x64xf32>
    %59 = vector.extract_strided_slice %6 {offsets = [3, 0, 0], sizes = [16, 16, 64], strides = [1, 1, 1]} : vector<20x16x64xf32> to vector<16x16x64xf32>
    %60 = vector.extract_strided_slice %6 {offsets = [4, 0, 0], sizes = [16, 16, 64], strides = [1, 1, 1]} : vector<20x16x64xf32> to vector<16x16x64xf32>
    %61 = tpu.concatenate %56, %57, %58, %59, %60 in 2 : vector<16x16x64xf32>, vector<16x16x64xf32>, vector<16x16x64xf32>, vector<16x16x64xf32>, vector<16x16x64xf32> -> vector<16x16x320xf32>
    %62 = vector.shape_cast %61 : vector<16x16x320xf32> to vector<256x320xf32>
    %c1_41 = arith.constant 1 : index
    %c0_42 = arith.constant 0 : index
    %c0_43 = arith.constant 0 : index
    %63 = vector.load %arg4[%c1_41, %c0_42, %c0_43] : memref<5x320x64xf32, #tpu.memory_space<vmem>>, vector<1x320x64xf32>
    %64 = vector.shape_cast %63 : vector<1x320x64xf32> to vector<320x64xf32>
    %cst_44 = arith.constant dense<0.000000e+00> : vector<256x64xf32>
    %65 = tpu.matmul %62, %64, %cst_44 {dimension_numbers = #tpu.dot_dimension_numbers<[1], [0], [0], [1], [0, 0, 1, 1], [], []>} : vector<256x320xf32>, vector<320x64xf32>, vector<256x64xf32> -> vector<256x64xf32>
    %66 = arith.addf %55, %65 : vector<256x64xf32>
    %67 = vector.extract_strided_slice %7 {offsets = [0, 0, 0], sizes = [16, 16, 64], strides = [1, 1, 1]} : vector<20x16x64xf32> to vector<16x16x64xf32>
    %68 = vector.extract_strided_slice %7 {offsets = [1, 0, 0], sizes = [16, 16, 64], strides = [1, 1, 1]} : vector<20x16x64xf32> to vector<16x16x64xf32>
    %69 = vector.extract_strided_slice %7 {offsets = [2, 0, 0], sizes = [16, 16, 64], strides = [1, 1, 1]} : vector<20x16x64xf32> to vector<16x16x64xf32>
    %70 = vector.extract_strided_slice %7 {offsets = [3, 0, 0], sizes = [16, 16, 64], strides = [1, 1, 1]} : vector<20x16x64xf32> to vector<16x16x64xf32>
    %71 = vector.extract_strided_slice %7 {offsets = [4, 0, 0], sizes = [16, 16, 64], strides = [1, 1, 1]} : vector<20x16x64xf32> to vector<16x16x64xf32>
    %72 = tpu.concatenate %67, %68, %69, %70, %71 in 2 : vector<16x16x64xf32>, vector<16x16x64xf32>, vector<16x16x64xf32>, vector<16x16x64xf32>, vector<16x16x64xf32> -> vector<16x16x320xf32>
    %73 = vector.shape_cast %72 : vector<16x16x320xf32> to vector<256x320xf32>
    %c2_45 = arith.constant 2 : index
    %c0_46 = arith.constant 0 : index
    %c0_47 = arith.constant 0 : index
    %74 = vector.load %arg4[%c2_45, %c0_46, %c0_47] : memref<5x320x64xf32, #tpu.memory_space<vmem>>, vector<1x320x64xf32>
    %75 = vector.shape_cast %74 : vector<1x320x64xf32> to vector<320x64xf32>
    %cst_48 = arith.constant dense<0.000000e+00> : vector<256x64xf32>
    %76 = tpu.matmul %73, %75, %cst_48 {dimension_numbers = #tpu.dot_dimension_numbers<[1], [0], [0], [1], [0, 0, 1, 1], [], []>} : vector<256x320xf32>, vector<320x64xf32>, vector<256x64xf32> -> vector<256x64xf32>
    %77 = arith.addf %66, %76 : vector<256x64xf32>
    %78 = vector.extract_strided_slice %8 {offsets = [0, 0, 0], sizes = [16, 16, 64], strides = [1, 1, 1]} : vector<20x16x64xf32> to vector<16x16x64xf32>
    %79 = vector.extract_strided_slice %8 {offsets = [1, 0, 0], sizes = [16, 16, 64], strides = [1, 1, 1]} : vector<20x16x64xf32> to vector<16x16x64xf32>
    %80 = vector.extract_strided_slice %8 {offsets = [2, 0, 0], sizes = [16, 16, 64], strides = [1, 1, 1]} : vector<20x16x64xf32> to vector<16x16x64xf32>
    %81 = vector.extract_strided_slice %8 {offsets = [3, 0, 0], sizes = [16, 16, 64], strides = [1, 1, 1]} : vector<20x16x64xf32> to vector<16x16x64xf32>
    %82 = vector.extract_strided_slice %8 {offsets = [4, 0, 0], sizes = [16, 16, 64], strides = [1, 1, 1]} : vector<20x16x64xf32> to vector<16x16x64xf32>
    %83 = tpu.concatenate %78, %79, %80, %81, %82 in 2 : vector<16x16x64xf32>, vector<16x16x64xf32>, vector<16x16x64xf32>, vector<16x16x64xf32>, vector<16x16x64xf32> -> vector<16x16x320xf32>
    %84 = vector.shape_cast %83 : vector<16x16x320xf32> to vector<256x320xf32>
    %c3_49 = arith.constant 3 : index
    %c0_50 = arith.constant 0 : index
    %c0_51 = arith.constant 0 : index
    %85 = vector.load %arg4[%c3_49, %c0_50, %c0_51] : memref<5x320x64xf32, #tpu.memory_space<vmem>>, vector<1x320x64xf32>
    %86 = vector.shape_cast %85 : vector<1x320x64xf32> to vector<320x64xf32>
    %cst_52 = arith.constant dense<0.000000e+00> : vector<256x64xf32>
    %87 = tpu.matmul %84, %86, %cst_52 {dimension_numbers = #tpu.dot_dimension_numbers<[1], [0], [0], [1], [0, 0, 1, 1], [], []>} : vector<256x320xf32>, vector<320x64xf32>, vector<256x64xf32> -> vector<256x64xf32>
    %88 = arith.addf %77, %87 : vector<256x64xf32>
    %89 = vector.extract_strided_slice %9 {offsets = [0, 0, 0], sizes = [16, 16, 64], strides = [1, 1, 1]} : vector<20x16x64xf32> to vector<16x16x64xf32>
    %90 = vector.extract_strided_slice %9 {offsets = [1, 0, 0], sizes = [16, 16, 64], strides = [1, 1, 1]} : vector<20x16x64xf32> to vector<16x16x64xf32>
    %91 = vector.extract_strided_slice %9 {offsets = [2, 0, 0], sizes = [16, 16, 64], strides = [1, 1, 1]} : vector<20x16x64xf32> to vector<16x16x64xf32>
    %92 = vector.extract_strided_slice %9 {offsets = [3, 0, 0], sizes = [16, 16, 64], strides = [1, 1, 1]} : vector<20x16x64xf32> to vector<16x16x64xf32>
    %93 = vector.extract_strided_slice %9 {offsets = [4, 0, 0], sizes = [16, 16, 64], strides = [1, 1, 1]} : vector<20x16x64xf32> to vector<16x16x64xf32>
    %94 = tpu.concatenate %89, %90, %91, %92, %93 in 2 : vector<16x16x64xf32>, vector<16x16x64xf32>, vector<16x16x64xf32>, vector<16x16x64xf32>, vector<16x16x64xf32> -> vector<16x16x320xf32>
    %95 = vector.shape_cast %94 : vector<16x16x320xf32> to vector<256x320xf32>
    %c4_53 = arith.constant 4 : index
    %c0_54 = arith.constant 0 : index
    %c0_55 = arith.constant 0 : index
    %96 = vector.load %arg4[%c4_53, %c0_54, %c0_55] : memref<5x320x64xf32, #tpu.memory_space<vmem>>, vector<1x320x64xf32>
    %97 = vector.shape_cast %96 : vector<1x320x64xf32> to vector<320x64xf32>
    %cst_56 = arith.constant dense<0.000000e+00> : vector<256x64xf32>
    %98 = tpu.matmul %95, %97, %cst_56 {dimension_numbers = #tpu.dot_dimension_numbers<[1], [0], [0], [1], [0, 0, 1, 1], [], []>} : vector<256x320xf32>, vector<320x64xf32>, vector<256x64xf32> -> vector<256x64xf32>
    %99 = arith.addf %88, %98 : vector<256x64xf32>
    %c0_57 = arith.constant 0 : index
    %c0_58 = arith.constant 0 : index
    %100 = vector.load %arg5[%c0_57, %c0_58] : memref<1x64xf32, #tpu.memory_space<vmem>>, vector<1x64xf32>
    %101 = vector.broadcast %100 : vector<1x64xf32> to vector<256x64xf32>
    %102 = arith.addf %99, %101 : vector<256x64xf32>
    %cst_59 = arith.constant 5.000000e-02 : f32
    %103 = vector.broadcast %cst_59 : f32 to vector<256x64xf32>
    %104 = arith.mulf %103, %102 : vector<256x64xf32>
    %105 = arith.maximumf %102, %104 : vector<256x64xf32>
    %106 = tpu.concatenate %43, %105 in 1 : vector<256x128xf32>, vector<256x64xf32> -> vector<256x192xf32>
    %c0_60 = arith.constant 0 : index
    %c0_61 = arith.constant 0 : index
    %107 = vector.load %arg6[%c0_60, %c0_61] : memref<192x64xf32, #tpu.memory_space<vmem>>, vector<192x64xf32>
    %cst_62 = arith.constant dense<0.000000e+00> : vector<256x64xf32>
    %108 = tpu.matmul %106, %107, %cst_62 {dimension_numbers = #tpu.dot_dimension_numbers<[1], [0], [0], [1], [0, 0, 1, 1], [], []>} : vector<256x192xf32>, vector<192x64xf32>, vector<256x64xf32> -> vector<256x64xf32>
    %c0_63 = arith.constant 0 : index
    %c0_64 = arith.constant 0 : index
    %109 = vector.load %arg7[%c0_63, %c0_64] : memref<1x64xf32, #tpu.memory_space<vmem>>, vector<1x64xf32>
    %110 = vector.broadcast %109 : vector<1x64xf32> to vector<256x64xf32>
    %111 = arith.addf %108, %110 : vector<256x64xf32>
    %cst_65 = arith.constant 5.000000e-02 : f32
    %112 = vector.broadcast %cst_65 : f32 to vector<256x64xf32>
    %113 = arith.mulf %112, %111 : vector<256x64xf32>
    %114 = arith.maximumf %111, %113 : vector<256x64xf32>
    %115 = vector.shape_cast %114 : vector<256x64xf32> to vector<16x16x64xf32>
    %116 = arith.addf %1, %115 : vector<16x16x64xf32>
    %c0_66 = arith.constant 0 : index
    %c0_67 = arith.constant 0 : index
    %c0_68 = arith.constant 0 : index
    %c0_69 = arith.constant 0 : index
    %117 = vector.load %arg8[%c0_66, %c0_67, %c0_68, %c0_69] : memref<1x16x16x64xf32, #tpu.memory_space<vmem>>, vector<1x16x16x64xf32>
    %118 = vector.shape_cast %117 : vector<1x16x16x64xf32> to vector<16x16x64xf32>
    %119 = vector.shape_cast %116 : vector<16x16x64xf32> to vector<1x16x16x64xf32>
    tpu.vector_store %arg8[%c0_66, %c0_67, %c0_68, %c0_69], %119 {strides = array<i32>} : memref<1x16x16x64xf32, #tpu.memory_space<vmem>>, vector<1x16x16x64xf32>,
    return
  }
  func.func @transform_0(%arg0: i32) -> (i32, i32, i32, i32) {
    %c0_i32 = arith.constant 0 : i32
    %c0_i32_0 = arith.constant 0 : i32
    %c0_i32_1 = arith.constant 0 : i32
    %c0_i32_2 = arith.constant 0 : i32
    return %arg0, %c0_i32, %c0_i32_0, %c0_i32_1 : i32, i32, i32, i32
  }
  func.func @transform_1(%arg0: i32) -> (i32, i32, i32) {
    %c0_i32 = arith.constant 0 : i32
    %c0_i32_0 = arith.constant 0 : i32
    %c0_i32_1 = arith.constant 0 : i32
    %c0_i32_2 = arith.constant 0 : i32
    return %c0_i32, %c0_i32_0, %c0_i32_1 : i32, i32, i32
  }
  func.func @transform_2(%arg0: i32) -> (i32, i32) {
    %c0_i32 = arith.constant 0 : i32
    %c0_i32_0 = arith.constant 0 : i32
    %c0_i32_1 = arith.constant 0 : i32
    return %c0_i32, %c0_i32_0 : i32, i32
  }
  func.func @transform_3(%arg0: i32) -> (i32, i32, i32) {
    %c0_i32 = arith.constant 0 : i32
    %c0_i32_0 = arith.constant 0 : i32
    %c0_i32_1 = arith.constant 0 : i32
    %c0_i32_2 = arith.constant 0 : i32
    return %c0_i32, %c0_i32_0, %c0_i32_1 : i32, i32, i32
  }
  func.func @transform_4(%arg0: i32) -> (i32, i32) {
    %c0_i32 = arith.constant 0 : i32
    %c0_i32_0 = arith.constant 0 : i32
    %c0_i32_1 = arith.constant 0 : i32
    return %c0_i32, %c0_i32_0 : i32, i32
  }
  func.func @transform_5(%arg0: i32) -> (i32, i32) {
    %c0_i32 = arith.constant 0 : i32
    %c0_i32_0 = arith.constant 0 : i32
    %c0_i32_1 = arith.constant 0 : i32
    return %c0_i32, %c0_i32_0 : i32, i32
  }
  func.func @transform_6(%arg0: i32) -> (i32, i32) {
    %c0_i32 = arith.constant 0 : i32
    %c0_i32_0 = arith.constant 0 : i32
    %c0_i32_1 = arith.constant 0 : i32
    return %c0_i32, %c0_i32_0 : i32, i32
  }
  func.func @transform_7(%arg0: i32) -> (i32, i32, i32, i32) {
    %c0_i32 = arith.constant 0 : i32
    %c0_i32_0 = arith.constant 0 : i32
    %c0_i32_1 = arith.constant 0 : i32
    %c0_i32_2 = arith.constant 0 : i32
    return %arg0, %c0_i32, %c0_i32_0, %c0_i32_1 : i32, i32, i32, i32
  }
}

</mosaic_0001>

<llo_original>
// kernel: tpu_custom_call.1
$region0: #{tpu_custom_call.1}
  #allocation0 [shape = 'u32[]', space=smem, size = 0x4, offset = 0x4, fixed_abs, tag = 'smem constant byte address 0x4 - core index']
  #allocation1 [shape = 'u32[144,128]{1,0:T(1,128)}', space=vmem, size = 0x12000, scoped, tag = 'internal scratch']
  #allocation2 [shape = 'f32[20,20,64]{2,1,0:T(8,128)}', space=vmem, size = 0x3c000, scoped, tag = 'scratch operand']
  %s0 = inlined_call_operand.vmem [shape: f32[2,16,16,64], index: 0, kind: input, shape index: {}]
  %s1 = inlined_call_operand.vmem [shape: f32[3,192,128], index: 1, kind: input, shape index: {}]
  %s2 = inlined_call_operand.vmem [shape: f32[1,128], index: 2, kind: input, shape index: {}]
  %s3 = inlined_call_operand.vmem [shape: f32[5,320,64], index: 3, kind: input, shape index: {}]
  %s4 = inlined_call_operand.vmem [shape: f32[1,64], index: 4, kind: input, shape index: {}]
  %s5 = inlined_call_operand.vmem [shape: f32[192,64], index: 5, kind: input, shape index: {}]
  %s6 = inlined_call_operand.vmem [shape: f32[1,64], index: 6, kind: input, shape index: {}]
  %s7 = inlined_call_operand.hbm [shape: f32[2,16,16,64], index: 7, kind: output, shape index: {}]
  %s8 = sld [smem:[#allocation0]]
  $region61: #{tpu_custom_call.1} parent=0
    _
  %s10 = ssub.s32 1, %s8
  %s11 = scalar_select 0, %s10, %s8
  $region1: #{tpu_custom_call.1} parent=0
    #allocation3 [shape = 'u8[262144]{0}', space=vmem, size = 0x40000, scoped, tag = 'output window, operand 0']
    #allocation4 [shape = 's32[2]{0}', space=sflag, size = 0x8, scoped, tag = 'scoped memory for tpu_custom_call.1']
    %12 = vsyncpa [#allocation4], 0
    %s13 = scalar_lea.sflag [#allocation4], 1
    %14 = vsyncpa %s13, 0
    loop: start=0, step=1, limit=4
    $region2: #{tpu_custom_call.1} parent=1 // loop_pre_header
      _
    $region3: #{tpu_custom_call.1} parent=1 // loop_header
      %s16 = sphi 0, %s20
      %p17 = scmp.ge.s32.totalorder %s16, 4
      %s26 = sphi 0, %s28
      %s29 = sphi 0, %s26
      %s30 = sphi 0, %s29
      %s46 = sphi 0, %s30
      %s50 = sphi 0, %s50
      %s52 = sphi 0, %s50
      %s53 = sphi 0, %s52
      %s67 = sphi 0, %s53
      %s71 = sphi 0, %s71
      %s73 = sphi 0, %s71
      %s74 = sphi 0, %s73
      %s88 = sphi 0, %s74
      %s92 = sphi 0, %s92
      %s94 = sphi 0, %s92
      %s95 = sphi 0, %s94
      %s109 = sphi 0, %s95
      %s113 = sphi 0, %s113
      %s115 = sphi 0, %s113
      %s116 = sphi 0, %s115
      %s130 = sphi 0, %s116
      %s134 = sphi 0, %s134
      %s136 = sphi 0, %s134
      %s137 = sphi 0, %s136
      %s151 = sphi 0, %s137
      %s155 = sphi 0, %s155
      %s157 = sphi 0, %s155
      %s158 = sphi 0, %s157
      %s172 = sphi 0, %s158
      %s178 = sphi 0, %s180
      %s181 = sphi 0, %s178
      %s182 = sphi 0, %s181
      %s198 = sphi 0, %s182
    $region4: #{tpu_custom_call.1} parent=1 // loop_header_branch
      %19 = sbr.rel (%p17) target = $region8
    $region5: #{tpu_custom_call.1} parent=1 // loop_body
      %s21 = ssub.s32 %s16, 1
      %s22 = ssub.s32 %s16, 2
      %s23 = sadd.s32 %s16, 1
      %s24 = ssub.s32 %s16, %s23
      %p25 = scmp.eq.s32.totalorder %s24, 0
      %s27 = sadd.s32 %s26, 1
      %s28 = scalar_select %p25, %s26, %s27
      %p31 = pneg %p25
      %p32 = scmp.eq.s32.totalorder %s16, 1
      %p33 = por %p31, %p32
      %p34 = scmp.ne.s32.totalorder %s26, %s29
      %p35 = scmp.eq.s32.totalorder %s16, 0
      %p36 = por %p34, %p35
      %p37 = scmp.ne.s32.totalorder %s26, %s29
      %p38 = scmp.eq.s32.totalorder %s21, 1
      %p39 = por %p37, %p38
      %p40 = scmp.ne.s32.totalorder %s29, %s30
      %p41 = scmp.eq.s32.totalorder %s21, 0
      %p42 = por %p40, %p41
      %p43 = scmp.ne.s32.totalorder %s29, %s30
      %p44 = scmp.eq.s32.totalorder %s22, 1
      %p45 = por %p43, %p44
      %p47 = scmp.ne.s32.totalorder %s30, %s46
      %p48 = scmp.eq.s32.totalorder %s22, 0
      %p49 = por %p47, %p48
      %s51 = sadd.s32 %s50, 1
      %p54 = scmp.eq.s32.totalorder %s16, 1
      %p55 = scmp.ne.s32.totalorder %s50, %s52
      %p56 = scmp.eq.s32.totalorder %s16, 0
      %p57 = por %p55, %p56
      %p58 = scmp.ne.s32.totalorder %s50, %s52
      %p59 = scmp.eq.s32.totalorder %s21, 1
      %p60 = por %p58, %p59
      %p61 = scmp.ne.s32.totalorder %s52, %s53
      %p62 = scmp.eq.s32.totalorder %s21, 0
      %p63 = por %p61, %p62
      %p64 = scmp.ne.s32.totalorder %s52, %s53
      %p65 = scmp.eq.s32.totalorder %s22, 1
      %p66 = por %p64, %p65
      %p68 = scmp.ne.s32.totalorder %s53, %s67
      %p69 = scmp.eq.s32.totalorder %s22, 0
      %p70 = por %p68, %p69
      %s72 = sadd.s32 %s71, 1
      %p75 = scmp.eq.s32.totalorder %s16, 1
      %p76 = scmp.ne.s32.totalorder %s71, %s73
      %p77 = scmp.eq.s32.totalorder %s16, 0
      %p78 = por %p76, %p77
      %p79 = scmp.ne.s32.totalorder %s71, %s73
      %p80 = scmp.eq.s32.totalorder %s21, 1
      %p81 = por %p79, %p80
      %p82 = scmp.ne.s32.totalorder %s73, %s74
      %p83 = scmp.eq.s32.totalorder %s21, 0
      %p84 = por %p82, %p83
      %p85 = scmp.ne.s32.totalorder %s73, %s74
      %p86 = scmp.eq.s32.totalorder %s22, 1
      %p87 = por %p85, %p86
      %p89 = scmp.ne.s32.totalorder %s74, %s88
      %p90 = scmp.eq.s32.totalorder %s22, 0
      %p91 = por %p89, %p90
      %s93 = sadd.s32 %s92, 1
      %p96 = scmp.eq.s32.totalorder %s16, 1
      %p97 = scmp.ne.s32.totalorder %s92, %s94
      %p98 = scmp.eq.s32.totalorder %s16, 0
      %p99 = por %p97, %p98
      %p100 = scmp.ne.s32.totalorder %s92, %s94
      %p101 = scmp.eq.s32.totalorder %s21, 1
      %p102 = por %p100, %p101
      %p103 = scmp.ne.s32.totalorder %s94, %s95
      %p104 = scmp.eq.s32.totalorder %s21, 0
      %p105 = por %p103, %p104
      %p106 = scmp.ne.s32.totalorder %s94, %s95
      %p107 = scmp.eq.s32.totalorder %s22, 1
      %p108 = por %p106, %p107
      %p110 = scmp.ne.s32.totalorder %s95, %s109
      %p111 = scmp.eq.s32.totalorder %s22, 0
      %p112 = por %p110, %p111
      %s114 = sadd.s32 %s113, 1
      %p117 = scmp.eq.s32.totalorder %s16, 1
      %p118 = scmp.ne.s32.totalorder %s113, %s115
      %p119 = scmp.eq.s32.totalorder %s16, 0
      %p120 = por %p118, %p119
      %p121 = scmp.ne.s32.totalorder %s113, %s115
      %p122 = scmp.eq.s32.totalorder %s21, 1
      %p123 = por %p121, %p122
      %p124 = scmp.ne.s32.totalorder %s115, %s116
      %p125 = scmp.eq.s32.totalorder %s21, 0
      %p126 = por %p124, %p125
      %p127 = scmp.ne.s32.totalorder %s115, %s116
      %p128 = scmp.eq.s32.totalorder %s22, 1
      %p129 = por %p127, %p128
      %p131 = scmp.ne.s32.totalorder %s116, %s130
      %p132 = scmp.eq.s32.totalorder %s22, 0
      %p133 = por %p131, %p132
      %s135 = sadd.s32 %s134, 1
      %p138 = scmp.eq.s32.totalorder %s16, 1
      %p139 = scmp.ne.s32.totalorder %s134, %s136
      %p140 = scmp.eq.s32.totalorder %s16, 0
      %p141 = por %p139, %p140
      %p142 = scmp.ne.s32.totalorder %s134, %s136
      %p143 = scmp.eq.s32.totalorder %s21, 1
      %p144 = por %p142, %p143
      %p145 = scmp.ne.s32.totalorder %s136, %s137
      %p146 = scmp.eq.s32.totalorder %s21, 0
      %p147 = por %p145, %p146
      %p148 = scmp.ne.s32.totalorder %s136, %s137
      %p149 = scmp.eq.s32.totalorder %s22, 1
      %p150 = por %p148, %p149
      %p152 = scmp.ne.s32.totalorder %s137, %s151
      %p153 = scmp.eq.s32.totalorder %s22, 0
      %p154 = por %p152, %p153
      %s156 = sadd.s32 %s155, 1
      %p159 = scmp.eq.s32.totalorder %s16, 1
      %p160 = scmp.ne.s32.totalorder %s155, %s157
      %p161 = scmp.eq.s32.totalorder %s16, 0
      %p162 = por %p160, %p161
      %p163 = scmp.ne.s32.totalorder %s155, %s157
      %p164 = scmp.eq.s32.totalorder %s21, 1
      %p165 = por %p163, %p164
      %p166 = scmp.ne.s32.totalorder %s157, %s158
      %p167 = scmp.eq.s32.totalorder %s21, 0
      %p168 = por %p166, %p167
      %p169 = scmp.ne.s32.totalorder %s157, %s158
      %p170 = scmp.eq.s32.totalorder %s22, 1
      %p171 = por %p169, %p170
      %p173 = scmp.ne.s32.totalorder %s158, %s172
      %p174 = scmp.eq.s32.totalorder %s22, 0
      %p175 = por %p173, %p174
      %s176 = ssub.s32 %s16, %s23
      %p177 = scmp.eq.s32.totalorder %s176, 0
      %s179 = sadd.s32 %s178, 1
      %s180 = scalar_select %p177, %s178, %s179
      %p183 = pneg %p177
      %p184 = scmp.eq.s32.totalorder %s16, 1
      %p185 = por %p183, %p184
      %p186 = scmp.ne.s32.totalorder %s178, %s181
      %p187 = scmp.eq.s32.totalorder %s16, 0
      %p188 = por %p186, %p187
      %p189 = scmp.ne.s32.totalorder %s178, %s181
      %p190 = scmp.eq.s32.totalorder %s21, 1
      %p191 = por %p189, %p190
      %p192 = scmp.ne.s32.totalorder %s181, %s182
      %p193 = scmp.eq.s32.totalorder %s21, 0
      %p194 = por %p192, %p193
      %p195 = scmp.ne.s32.totalorder %s181, %s182
      %p196 = scmp.eq.s32.totalorder %s22, 1
      %p197 = por %p195, %p196
      %p199 = scmp.ne.s32.totalorder %s182, %s198
      %p200 = scmp.eq.s32.totalorder %s22, 0
      %p201 = por %p199, %p200
      %p202 = scmp.le.s32.totalorder 1, %s16
      %p203 = scmp.lt.s32.totalorder %s16, 3
      %p204 = pnand %p202, %p203
      %p205 = pneg %p204
      // Predicated region
      $region9: #{tpu_custom_call.1} parent=5 // pred_check
        _
      $region10: #{tpu_custom_call.1} parent=5 // pred_check_branch
        %207 = sbr.rel (%p204) target = $region12
      $region11: #{tpu_custom_call.1} parent=5 // pred_region
        %s208 = ssub.s32 %s16, 1
        // Predicated region
        $region13: #{tpu_custom_call.1} parent=11 // pred_check
          %p209 = pneg %p63
        $region14: #{tpu_custom_call.1} parent=11 // pred_check_branch
          %211 = sbr.rel (%p209) target = $region16
        $region15: #{tpu_custom_call.1} parent=11 // pred_region
          _
        $region16: #{tpu_custom_call.1} parent=11 // pred_fallthru
          _
        // Predicated region
        $region17: #{tpu_custom_call.1} parent=11 // pred_check
          %p212 = pneg %p84
        $region18: #{tpu_custom_call.1} parent=11 // pred_check_branch
          %214 = sbr.rel (%p212) target = $region20
        $region19: #{tpu_custom_call.1} parent=11 // pred_region
          _
        $region20: #{tpu_custom_call.1} parent=11 // pred_fallthru
          _
        // Predicated region
        $region21: #{tpu_custom_call.1} parent=11 // pred_check
          %p215 = pneg %p105
        $region22: #{tpu_custom_call.1} parent=11 // pred_check_branch
          %217 = sbr.rel (%p215) target = $region24
        $region23: #{tpu_custom_call.1} parent=11 // pred_region
          _
        $region24: #{tpu_custom_call.1} parent=11 // pred_fallthru
          _
        // Predicated region
        $region25: #{tpu_custom_call.1} parent=11 // pred_check
          %p218 = pneg %p126
        $region26: #{tpu_custom_call.1} parent=11 // pred_check_branch
          %220 = sbr.rel (%p218) target = $region28
        $region27: #{tpu_custom_call.1} parent=11 // pred_region
          _
        $region28: #{tpu_custom_call.1} parent=11 // pred_fallthru
          _
        // Predicated region
        $region29: #{tpu_custom_call.1} parent=11 // pred_check
          %p221 = pneg %p147
        $region30: #{tpu_custom_call.1} parent=11 // pred_check_branch
          %223 = sbr.rel (%p221) target = $region32
        $region31: #{tpu_custom_call.1} parent=11 // pred_region
          _
        $region32: #{tpu_custom_call.1} parent=11 // pred_fallthru
          _
        // Predicated region
        $region33: #{tpu_custom_call.1} parent=11 // pred_check
          %p224 = pneg %p168
        $region34: #{tpu_custom_call.1} parent=11 // pred_check_branch
          %226 = sbr.rel (%p224) target = $region36
        $region35: #{tpu_custom_call.1} parent=11 // pred_region
          _
        $region36: #{tpu_custom_call.1} parent=11 // pred_fallthru
          _
      $region12: #{tpu_custom_call.1} parent=5 // pred_fallthru
        _
      %p227 = scmp.lt.s32.totalorder %s16, 2
      // Predicated region
      $region37: #{tpu_custom_call.1} parent=5 // pred_check
        %p228 = pneg %p227
      $region38: #{tpu_custom_call.1} parent=5 // pred_check_branch
        %230 = sbr.rel (%p228) target = $region40
      $region39: #{tpu_custom_call.1} parent=5 // pred_region
        // Predicated region
        $region41: #{tpu_custom_call.1} parent=39 // pred_check
          %p231 = pneg %p36
        $region42: #{tpu_custom_call.1} parent=39 // pred_check_branch
          %233 = sbr.rel (%p231) target = $region44
        $region43: #{tpu_custom_call.1} parent=39 // pred_region
          %p234 = scmp.lt.s32.totalorder %s16, 1
          %s235 = scalar_select %p234, %s16, 1
          %s236 = smul.addr %s235, 32
          %s237 = smul.addr %s236, 8
          %s238 = scalar_lea.vmem %s0, %s237
        $region44: #{tpu_custom_call.1} parent=39 // pred_fallthru
          _
      $region40: #{tpu_custom_call.1} parent=5 // pred_fallthru
        _
      %p239 = scmp.le.s32.totalorder 1, %s16
      %p240 = scmp.lt.s32.totalorder %s16, 3
      %p241 = pnand %p239, %p240
      %p242 = pneg %p241
      // Predicated region
      $region45: #{tpu_custom_call.1} parent=5 // pred_check
        _
      $region46: #{tpu_custom_call.1} parent=5 // pred_check_branch
        %244 = sbr.rel (%p241) target = $region48
      $region47: #{tpu_custom_call.1} parent=5 // pred_region
        %s245 = ssub.s32 %s16, 1
        %p246 = scmp.lt.s32.totalorder %s21, 1
        %s247 = scalar_select %p246, %s21, 1
        %s248 = smul.addr %s247, 32
        %s249 = smul.addr %s248, 8
        %s250 = scalar_lea.vmem %s0, %s249
        %p251 = pneg %p42
        %p252 = pneg %p39
        %p253 = pneg %p63
        %p254 = pneg %p60
        %p255 = pneg %p84
        %p256 = pneg %p81
        %p257 = pneg %p105
        %p258 = pneg %p102
        %p259 = pneg %p126
        %p260 = pneg %p123
        %p261 = pneg %p147
        %p262 = pneg %p144
        %p263 = pneg %p168
        %p264 = pneg %p165
        %p265 = pneg %p194
        %p266 = pneg %p191
        %s267 = sand.u32 %s181, 1
        %s268 = scalar_lea.sflag [#allocation4], %s267
        %s269 = sand.u32 %s181, 1
        %s270 = smul.addr %s269, 256
        %s271 = scalar_lea.vmem [#allocation3], %s270
        %p272 = scmp.lt.s32.totalorder %s21, 1
        %s273 = scalar_select %p272, %s21, 1
        %s274 = smul.addr %s273, 32
        %s275 = smul.addr %s274, 8
        %s276 = scalar_lea.vmem %s0, %s275
        %v277 = vld [vmem:[%s276] sm:$0xff]
        %v278 = vld [vmem:[%s276 + $0x8] sm:$0xff]
        %v279 = vld [vmem:[%s276 + $0x10] sm:$0xff]
        %v280 = vld [vmem:[%s276 + $0x18] sm:$0xff]
        %v281 = vld [vmem:[%s276 + $0x20] sm:$0xff]
        %v282 = vld [vmem:[%s276 + $0x28] sm:$0xff]
        %v283 = vld [vmem:[%s276 + $0x30] sm:$0xff]
        %v284 = vld [vmem:[%s276 + $0x38] sm:$0xff]
        %v285 = vld [vmem:[%s276 + $0x40] sm:$0xff]
        %v286 = vld [vmem:[%s276 + $0x48] sm:$0xff]
        %v287 = vld [vmem:[%s276 + $0x50] sm:$0xff]
        %v288 = vld [vmem:[%s276 + $0x58] sm:$0xff]
        %v289 = vld [vmem:[%s276 + $0x60] sm:$0xff]
        %v290 = vld [vmem:[%s276 + $0x68] sm:$0xff]
        %v291 = vld [vmem:[%s276 + $0x70] sm:$0xff]
        %v292 = vld [vmem:[%s276 + $0x78] sm:$0xff]
        %v293 = vld [vmem:[%s276 + $0x80] sm:$0xff]
        %v294 = vld [vmem:[%s276 + $0x88] sm:$0xff]
        %v295 = vld [vmem:[%s276 + $0x90] sm:$0xff]
        %v296 = vld [vmem:[%s276 + $0x98] sm:$0xff]
        %v297 = vld [vmem:[%s276 + $0xa0] sm:$0xff]
        %v298 = vld [vmem:[%s276 + $0xa8] sm:$0xff]
        %v299 = vld [vmem:[%s276 + $0xb0] sm:$0xff]
        %v300 = vld [vmem:[%s276 + $0xb8] sm:$0xff]
        %v301 = vld [vmem:[%s276 + $0xc0] sm:$0xff]
        %v302 = vld [vmem:[%s276 + $0xc8] sm:$0xff]
        %v303 = vld [vmem:[%s276 + $0xd0] sm:$0xff]
        %v304 = vld [vmem:[%s276 + $0xd8] sm:$0xff]
        %v305 = vld [vmem:[%s276 + $0xe0] sm:$0xff]
        %v306 = vld [vmem:[%s276 + $0xe8] sm:$0xff]
        %v307 = vld [vmem:[%s276 + $0xf0] sm:$0xff]
        %v308 = vld [vmem:[%s276 + $0xf8] sm:$0xff]
        %vm309 = vcmask 523264
        %310 = vst.msk [vmem:[#allocation2] sm:$0xff] %vm309, 0.0
        %311 = vst.msk [vmem:[#allocation2 + $0x8] sm:$0xff] %vm309, 0.0
        %vm312 = vcmask 519168
        %313 = vst.msk [vmem:[#allocation2 + $0x10] sm:$0xf] %vm312, 0.0
        %314 = vst.msk [vmem:[#allocation2 + $0x18] sm:$0xff] %vm309, 0.0
        %315 = vst.msk [vmem:[#allocation2 + $0x20] sm:$0xff] %vm309, 0.0
        %316 = vst.msk [vmem:[#allocation2 + $0x28] sm:$0xf] %vm312, 0.0
        %317 = vst.msk [vmem:[#allocation2 + $0x30] sm:$0xff] %vm309, 0.0
        %318 = vst.msk [vmem:[#allocation2 + $0x38] sm:$0xff] %vm309, 0.0
        %319 = vst.msk [vmem:[#allocation2 + $0x40] sm:$0xf] %vm312, 0.0
        %320 = vst.msk [vmem:[#allocation2 + $0x48] sm:$0xff] %vm309, 0.0
        %321 = vst.msk [vmem:[#allocation2 + $0x50] sm:$0xff] %vm309, 0.0
        %322 = vst.msk [vmem:[#allocation2 + $0x58] sm:$0xf] %vm312, 0.0
        %323 = vst.msk [vmem:[#allocation2 + $0x60] sm:$0xff] %vm309, 0.0
        %324 = vst.msk [vmem:[#allocation2 + $0x68] sm:$0xff] %vm309, 0.0
        %325 = vst.msk [vmem:[#allocation2 + $0x70] sm:$0xf] %vm312, 0.0
        %326 = vst.msk [vmem:[#allocation2 + $0x78] sm:$0xff] %vm309, 0.0
        %327 = vst.msk [vmem:[#allocation2 + $0x80] sm:$0xff] %vm309, 0.0
        %328 = vst.msk [vmem:[#allocation2 + $0x88] sm:$0xf] %vm312, 0.0
        %329 = vst.msk [vmem:[#allocation2 + $0x90] sm:$0xff] %vm309, 0.0
        %330 = vst.msk [vmem:[#allocation2 + $0x98] sm:$0xff] %vm309, 0.0
        %331 = vst.msk [vmem:[#allocation2 + $0xa0] sm:$0xf] %vm312, 0.0
        %332 = vst.msk [vmem:[#allocation2 + $0xa8] sm:$0xff] %vm309, 0.0
        %333 = vst.msk [vmem:[#allocation2 + $0xb0] sm:$0xff] %vm309, 0.0
        %334 = vst.msk [vmem:[#allocation2 + $0xb8] sm:$0xf] %vm312, 0.0
        %335 = vst.msk [vmem:[#allocation2 + $0xc0] sm:$0xff] %vm309, 0.0
        %336 = vst.msk [vmem:[#allocation2 + $0xc8] sm:$0xff] %vm309, 0.0
        %337 = vst.msk [vmem:[#allocation2 + $0xd0] sm:$0xf] %vm312, 0.0
        %338 = vst.msk [vmem:[#allocation2 + $0xd8] sm:$0xff] %vm309, 0.0
        %339 = vst.msk [vmem:[#allocation2 + $0xe0] sm:$0xff] %vm309, 0.0
        %340 = vst.msk [vmem:[#allocation2 + $0xe8] sm:$0xf] %vm312, 0.0
        %341 = vst.msk [vmem:[#allocation2 + $0xf0] sm:$0xff] %vm309, 0.0
        %342 = vst.msk [vmem:[#allocation2 + $0xf8] sm:$0xff] %vm309, 0.0
        %343 = vst.msk [vmem:[#allocation2 + $0x100] sm:$0xf] %vm312, 0.0
        %344 = vst.msk [vmem:[#allocation2 + $0x108] sm:$0xff] %vm309, 0.0
        %345 = vst.msk [vmem:[#allocation2 + $0x110] sm:$0xff] %vm309, 0.0
        %346 = vst.msk [vmem:[#allocation2 + $0x118] sm:$0xf] %vm312, 0.0
        %347 = vst.msk [vmem:[#allocation2 + $0x120] sm:$0xff] %vm309, 0.0
        %348 = vst.msk [vmem:[#allocation2 + $0x128] sm:$0xff] %vm309, 0.0
        %349 = vst.msk [vmem:[#allocation2 + $0x130] sm:$0xf] %vm312, 0.0
        %350 = vst.msk [vmem:[#allocation2 + $0x138] sm:$0xff] %vm309, 0.0
        %351 = vst.msk [vmem:[#allocation2 + $0x140] sm:$0xff] %vm309, 0.0
        %352 = vst.msk [vmem:[#allocation2 + $0x148] sm:$0xf] %vm312, 0.0
        %353 = vst.msk [vmem:[#allocation2 + $0x150] sm:$0xff] %vm309, 0.0
        %354 = vst.msk [vmem:[#allocation2 + $0x158] sm:$0xff] %vm309, 0.0
        %355 = vst.msk [vmem:[#allocation2 + $0x160] sm:$0xf] %vm312, 0.0
        %356 = vst.msk [vmem:[#allocation2 + $0x168] sm:$0xff] %vm309, 0.0
        %357 = vst.msk [vmem:[#allocation2 + $0x170] sm:$0xff] %vm309, 0.0
        %358 = vst.msk [vmem:[#allocation2 + $0x178] sm:$0xf] %vm312, 0.0
        %359 = vst.msk [vmem:[#allocation2 + $0x180] sm:$0xff] %vm309, 0.0
        %360 = vst.msk [vmem:[#allocation2 + $0x188] sm:$0xff] %vm309, 0.0
        %361 = vst.msk [vmem:[#allocation2 + $0x190] sm:$0xf] %vm312, 0.0
        %362 = vst.msk [vmem:[#allocation2 + $0x198] sm:$0xff] %vm309, 0.0
        %363 = vst.msk [vmem:[#allocation2 + $0x1a0] sm:$0xff] %vm309, 0.0
        %364 = vst.msk [vmem:[#allocation2 + $0x1a8] sm:$0xf] %vm312, 0.0
        %365 = vst.msk [vmem:[#allocation2 + $0x1b0] sm:$0xff] %vm309, 0.0
        %366 = vst.msk [vmem:[#allocation2 + $0x1b8] sm:$0xff] %vm309, 0.0
        %367 = vst.msk [vmem:[#allocation2 + $0x1c0] sm:$0xf] %vm312, 0.0
        %368 = vst.msk [vmem:[#allocation2 + $0x1c8] sm:$0xff] %vm309, 0.0
        %369 = vst.msk [vmem:[#allocation2 + $0x1d0] sm:$0xff] %vm309, 0.0
        %370 = vst.msk [vmem:[#allocation2 + $0x1d8] sm:$0xf] %vm312, 0.0
        %s371 = scalar_lea.vmem [#allocation2], 48
        %372 = vst.msk [vmem:[%s371 + $0x2] sm:$0xff] %vm309, %v277
        %373 = vst.msk [vmem:[%s371 + $0xa] sm:$0xff] %vm309, %v278
        %374 = vst.msk [vmem:[%s371 + $0x1a] sm:$0xff] %vm309, %v279
        %375 = vst.msk [vmem:[%s371 + $0x22] sm:$0xff] %vm309, %v280
        %376 = vst.msk [vmem:[%s371 + $0x32] sm:$0xff] %vm309, %v281
        %377 = vst.msk [vmem:[%s371 + $0x3a] sm:$0xff] %vm309, %v282
        %378 = vst.msk [vmem:[%s371 + $0x4a] sm:$0xff] %vm309, %v283
        %379 = vst.msk [vmem:[%s371 + $0x52] sm:$0xff] %vm309, %v284
        %380 = vst.msk [vmem:[%s371 + $0x62] sm:$0xff] %vm309, %v285
        %381 = vst.msk [vmem:[%s371 + $0x6a] sm:$0xff] %vm309, %v286
        %382 = vst.msk [vmem:[%s371 + $0x7a] sm:$0xff] %vm309, %v287
        %383 = vst.msk [vmem:[%s371 + $0x82] sm:$0xff] %vm309, %v288
        %384 = vst.msk [vmem:[%s371 + $0x92] sm:$0xff] %vm309, %v289
        %385 = vst.msk [vmem:[%s371 + $0x9a] sm:$0xff] %vm309, %v290
        %386 = vst.msk [vmem:[%s371 + $0xaa] sm:$0xff] %vm309, %v291
        %387 = vst.msk [vmem:[%s371 + $0xb2] sm:$0xff] %vm309, %v292
        %388 = vst.msk [vmem:[%s371 + $0xc2] sm:$0xff] %vm309, %v293
        %389 = vst.msk [vmem:[%s371 + $0xca] sm:$0xff] %vm309, %v294
        %390 = vst.msk [vmem:[%s371 + $0xda] sm:$0xff] %vm309, %v295
        %391 = vst.msk [vmem:[%s371 + $0xe2] sm:$0xff] %vm309, %v296
        %392 = vst.msk [vmem:[%s371 + $0xf2] sm:$0xff] %vm309, %v297
        %393 = vst.msk [vmem:[%s371 + $0xfa] sm:$0xff] %vm309, %v298
        %394 = vst.msk [vmem:[%s371 + $0x10a] sm:$0xff] %vm309, %v299
        %395 = vst.msk [vmem:[%s371 + $0x112] sm:$0xff] %vm309, %v300
        %396 = vst.msk [vmem:[%s371 + $0x122] sm:$0xff] %vm309, %v301
        %397 = vst.msk [vmem:[%s371 + $0x12a] sm:$0xff] %vm309, %v302
        %398 = vst.msk [vmem:[%s371 + $0x13a] sm:$0xff] %vm309, %v303
        %399 = vst.msk [vmem:[%s371 + $0x142] sm:$0xff] %vm309, %v304
        %400 = vst.msk [vmem:[%s371 + $0x152] sm:$0xff] %vm309, %v305
        %401 = vst.msk [vmem:[%s371 + $0x15a] sm:$0xff] %vm309, %v306
        %402 = vst.msk [vmem:[%s371 + $0x16a] sm:$0xff] %vm309, %v307
        %403 = vst.msk [vmem:[%s371 + $0x172] sm:$0xff] %vm309, %v308
        %v404 = vld [vmem:[#allocation2] sm:$0xff]
        %v405 = vld [vmem:[#allocation2 + $0x8] sm:$0xff]
        %v406 = vld [vmem:[#allocation2 + $0x18] sm:$0xff]
        %v407 = vld [vmem:[#allocation2 + $0x20] sm:$0xff]
        %v408 = vld [vmem:[#allocation2 + $0x30] sm:$0xff]
        %v409 = vld [vmem:[#allocation2 + $0x38] sm:$0xff]
        %v410 = vld [vmem:[#allocation2 + $0x48] sm:$0xff]
        %v411 = vld [vmem:[#allocation2 + $0x50] sm:$0xff]
        %v412 = vld [vmem:[#allocation2 + $0x60] sm:$0xff]
        %v413 = vld [vmem:[#allocation2 + $0x68] sm:$0xff]
        %v414 = vld [vmem:[#allocation2 + $0x78] sm:$0xff]
        %v415 = vld [vmem:[#allocation2 + $0x80] sm:$0xff]
        %v416 = vld [vmem:[#allocation2 + $0x90] sm:$0xff]
        %v417 = vld [vmem:[#allocation2 + $0x98] sm:$0xff]
        %v418 = vld [vmem:[#allocation2 + $0xa8] sm:$0xff]
        %v419 = vld [vmem:[#allocation2 + $0xb0] sm:$0xff]
        %v420 = vld [vmem:[#allocation2 + $0xc0] sm:$0xff]
        %v421 = vld [vmem:[#allocation2 + $0xc8] sm:$0xff]
        %v422 = vld [vmem:[#allocation2 + $0xd8] sm:$0xff]
        %v423 = vld [vmem:[#allocation2 + $0xe0] sm:$0xff]
        %v424 = vld [vmem:[#allocation2 + $0xf0] sm:$0xff]
        %v425 = vld [vmem:[#allocation2 + $0xf8] sm:$0xff]
        %v426 = vld [vmem:[#allocation2 + $0x108] sm:$0xff]
        %v427 = vld [vmem:[#allocation2 + $0x110] sm:$0xff]
        %v428 = vld [vmem:[#allocation2 + $0x120] sm:$0xff]
        %v429 = vld [vmem:[#allocation2 + $0x128] sm:$0xff]
        %v430 = vld [vmem:[#allocation2 + $0x138] sm:$0xff]
        %v431 = vld [vmem:[#allocation2 + $0x140] sm:$0xff]
        %v432 = vld [vmem:[#allocation2 + $0x150] sm:$0xff]
        %v433 = vld [vmem:[#allocation2 + $0x158] sm:$0xff]
        %v434 = vld [vmem:[#allocation2 + $0x168] sm:$0xff]
        %v435 = vld [vmem:[#allocation2 + $0x170] sm:$0xff]
        %v436 = vld [vmem:[#allocation2 + $0x180] sm:$0xff]
        %v437 = vld [vmem:[#allocation2 + $0x188] sm:$0xff]
        %v438 = vld [vmem:[#allocation2 + $0x198] sm:$0xff]
        %v439 = vld [vmem:[#allocation2 + $0x1a0] sm:$0xff]
        %v440 = vld [vmem:[#allocation2 + $0x1b0] sm:$0xff]
        %v441 = vld [vmem:[#allocation2 + $0x1b8] sm:$0xff]
        %v442 = vld [vmem:[#allocation2 + $0x1c8] sm:$0xff]
        %v443 = vld [vmem:[#allocation2 + $0x1d0] sm:$0xff]
        %v444 = vld [vmem:[#allocation2 + $0x1] sm:$0xff]
        %v445 = vld [vmem:[#allocation2 + $0x9] sm:$0xff]
        %v446 = vld [vmem:[#allocation2 + $0x19] sm:$0xff]
        %v447 = vld [vmem:[#allocation2 + $0x21] sm:$0xff]
        %v448 = vld [vmem:[#allocation2 + $0x31] sm:$0xff]
        %v449 = vld [vmem:[#allocation2 + $0x39] sm:$0xff]
        %v450 = vld [vmem:[#allocation2 + $0x49] sm:$0xff]
        %v451 = vld [vmem:[#allocation2 + $0x51] sm:$0xff]
        %v452 = vld [vmem:[#allocation2 + $0x61] sm:$0xff]
        %v453 = vld [vmem:[#allocation2 + $0x69] sm:$0xff]
        %v454 = vld [vmem:[#allocation2 + $0x79] sm:$0xff]
        %v455 = vld [vmem:[#allocation2 + $0x81] sm:$0xff]
        %v456 = vld [vmem:[#allocation2 + $0x91] sm:$0xff]
        %v457 = vld [vmem:[#allocation2 + $0x99] sm:$0xff]
        %v458 = vld [vmem:[#allocation2 + $0xa9] sm:$0xff]
        %v459 = vld [vmem:[#allocation2 + $0xb1] sm:$0xff]
        %v460 = vld [vmem:[#allocation2 + $0xc1] sm:$0xff]
        %v461 = vld [vmem:[#allocation2 + $0xc9] sm:$0xff]
        %v462 = vld [vmem:[#allocation2 + $0xd9] sm:$0xff]
        %v463 = vld [vmem:[#allocation2 + $0xe1] sm:$0xff]
        %v464 = vld [vmem:[#allocation2 + $0xf1] sm:$0xff]
        %v465 = vld [vmem:[#allocation2 + $0xf9] sm:$0xff]
        %v466 = vld [vmem:[#allocation2 + $0x109] sm:$0xff]
        %v467 = vld [vmem:[#allocation2 + $0x111] sm:$0xff]
        %v468 = vld [vmem:[#allocation2 + $0x121] sm:$0xff]
        %v469 = vld [vmem:[#allocation2 + $0x129] sm:$0xff]
        %v470 = vld [vmem:[#allocation2 + $0x139] sm:$0xff]
        %v471 = vld [vmem:[#allocation2 + $0x141] sm:$0xff]
        %v472 = vld [vmem:[#allocation2 + $0x151] sm:$0xff]
        %v473 = vld [vmem:[#allocation2 + $0x159] sm:$0xff]
        %v474 = vld [vmem:[#allocation2 + $0x169] sm:$0xff]
        %v475 = vld [vmem:[#allocation2 + $0x171] sm:$0xff]
        %v476 = vld [vmem:[#allocation2 + $0x181] sm:$0xff]
        %v477 = vld [vmem:[#allocation2 + $0x189] sm:$0xff]
        %v478 = vld [vmem:[#allocation2 + $0x199] sm:$0xff]
        %v479 = vld [vmem:[#allocation2 + $0x1a1] sm:$0xff]
        %v480 = vld [vmem:[#allocation2 + $0x1b1] sm:$0xff]
        %v481 = vld [vmem:[#allocation2 + $0x1b9] sm:$0xff]
        %v482 = vld [vmem:[#allocation2 + $0x1c9] sm:$0xff]
        %v483 = vld [vmem:[#allocation2 + $0x1d1] sm:$0xff]
        %v484 = vld [vmem:[#allocation2 + $0x2] sm:$0xff]
        %v485 = vld [vmem:[#allocation2 + $0xa] sm:$0xff]
        %v486 = vld [vmem:[#allocation2 + $0x1a] sm:$0xff]
        %v487 = vld [vmem:[#allocation2 + $0x22] sm:$0xff]
        %v488 = vld [vmem:[#allocation2 + $0x32] sm:$0xff]
        %v489 = vld [vmem:[#allocation2 + $0x3a] sm:$0xff]
        %v490 = vld [vmem:[#allocation2 + $0x4a] sm:$0xff]
        %v491 = vld [vmem:[#allocation2 + $0x52] sm:$0xff]
        %v492 = vld [vmem:[#allocation2 + $0x62] sm:$0xff]
        %v493 = vld [vmem:[#allocation2 + $0x6a] sm:$0xff]
        %v494 = vld [vmem:[#allocation2 + $0x7a] sm:$0xff]
        %v495 = vld [vmem:[#allocation2 + $0x82] sm:$0xff]
        %v496 = vld [vmem:[#allocation2 + $0x92] sm:$0xff]
        %v497 = vld [vmem:[#allocation2 + $0x9a] sm:$0xff]
        %v498 = vld [vmem:[#allocation2 + $0xaa] sm:$0xff]
        %v499 = vld [vmem:[#allocation2 + $0xb2] sm:$0xff]
        %v500 = vld [vmem:[#allocation2 + $0xc2] sm:$0xff]
        %v501 = vld [vmem:[#allocation2 + $0xca] sm:$0xff]
        %v502 = vld [vmem:[#allocation2 + $0xda] sm:$0xff]
        %v503 = vld [vmem:[#allocation2 + $0xe2] sm:$0xff]
        %v504 = vld [vmem:[#allocation2 + $0xf2] sm:$0xff]
        %v505 = vld [vmem:[#allocation2 + $0xfa] sm:$0xff]
        %v506 = vld [vmem:[#allocation2 + $0x10a] sm:$0xff]
        %v507 = vld [vmem:[#allocation2 + $0x112] sm:$0xff]
        %v508 = vld [vmem:[#allocation2 + $0x122] sm:$0xff]
        %v509 = vld [vmem:[#allocation2 + $0x12a] sm:$0xff]
        %v510 = vld [vmem:[#allocation2 + $0x13a] sm:$0xff]
        %v511 = vld [vmem:[#allocation2 + $0x142] sm:$0xff]
        %v512 = vld [vmem:[#allocation2 + $0x152] sm:$0xff]
        %v513 = vld [vmem:[#allocation2 + $0x15a] sm:$0xff]
        %v514 = vld [vmem:[#allocation2 + $0x16a] sm:$0xff]
        %v515 = vld [vmem:[#allocation2 + $0x172] sm:$0xff]
        %v516 = vld [vmem:[#allocation2 + $0x182] sm:$0xff]
        %v517 = vld [vmem:[#allocation2 + $0x18a] sm:$0xff]
        %v518 = vld [vmem:[#allocation2 + $0x19a] sm:$0xff]
        %v519 = vld [vmem:[#allocation2 + $0x1a2] sm:$0xff]
        %v520 = vld [vmem:[#allocation2 + $0x1b2] sm:$0xff]
        %v521 = vld [vmem:[#allocation2 + $0x1ba] sm:$0xff]
        %v522 = vld [vmem:[#allocation2 + $0x1ca] sm:$0xff]
        %v523 = vld [vmem:[#allocation2 + $0x1d2] sm:$0xff]
        %v524 = vld [vmem:[#allocation2 + $0x3] sm:$0xff]
        %v525 = vld [vmem:[#allocation2 + $0xb] sm:$0xff]
        %v526 = vld [vmem:[#allocation2 + $0x1b] sm:$0xff]
        %v527 = vld [vmem:[#allocation2 + $0x23] sm:$0xff]
        %v528 = vld [vmem:[#allocation2 + $0x33] sm:$0xff]
        %v529 = vld [vmem:[#allocation2 + $0x3b] sm:$0xff]
        %v530 = vld [vmem:[#allocation2 + $0x4b] sm:$0xff]
        %v531 = vld [vmem:[#allocation2 + $0x53] sm:$0xff]
        %v532 = vld [vmem:[#allocation2 + $0x63] sm:$0xff]
        %v533 = vld [vmem:[#allocation2 + $0x6b] sm:$0xff]
        %v534 = vld [vmem:[#allocation2 + $0x7b] sm:$0xff]
        %v535 = vld [vmem:[#allocation2 + $0x83] sm:$0xff]
        %v536 = vld [vmem:[#allocation2 + $0x93] sm:$0xff]
        %v537 = vld [vmem:[#allocation2 + $0x9b] sm:$0xff]
        %v538 = vld [vmem:[#allocation2 + $0xab] sm:$0xff]
        %v539 = vld [vmem:[#allocation2 + $0xb3] sm:$0xff]
        %v540 = vld [vmem:[#allocation2 + $0xc3] sm:$0xff]
        %v541 = vld [vmem:[#allocation2 + $0xcb] sm:$0xff]
        %v542 = vld [vmem:[#allocation2 + $0xdb] sm:$0xff]
        %v543 = vld [vmem:[#allocation2 + $0xe3] sm:$0xff]
        %v544 = vld [vmem:[#allocation2 + $0xf3] sm:$0xff]
        %v545 = vld [vmem:[#allocation2 + $0xfb] sm:$0xff]
        %v546 = vld [vmem:[#allocation2 + $0x10b] sm:$0xff]
        %v547 = vld [vmem:[#allocation2 + $0x113] sm:$0xff]
        %v548 = vld [vmem:[#allocation2 + $0x123] sm:$0xff]
        %v549 = vld [vmem:[#allocation2 + $0x12b] sm:$0xff]
        %v550 = vld [vmem:[#allocation2 + $0x13b] sm:$0xff]
        %v551 = vld [vmem:[#allocation2 + $0x143] sm:$0xff]
        %v552 = vld [vmem:[#allocation2 + $0x153] sm:$0xff]
        %v553 = vld [vmem:[#allocation2 + $0x15b] sm:$0xff]
        %v554 = vld [vmem:[#allocation2 + $0x16b] sm:$0xff]
        %v555 = vld [vmem:[#allocation2 + $0x173] sm:$0xff]
        %v556 = vld [vmem:[#allocation2 + $0x183] sm:$0xff]
        %v557 = vld [vmem:[#allocation2 + $0x18b] sm:$0xff]
        %v558 = vld [vmem:[#allocation2 + $0x19b] sm:$0xff]
        %v559 = vld [vmem:[#allocation2 + $0x1a3] sm:$0xff]
        %v560 = vld [vmem:[#allocation2 + $0x1b3] sm:$0xff]
        %v561 = vld [vmem:[#allocation2 + $0x1bb] sm:$0xff]
        %v562 = vld [vmem:[#allocation2 + $0x1cb] sm:$0xff]
        %v563 = vld [vmem:[#allocation2 + $0x1d3] sm:$0xff]
        %v564 = vld [vmem:[#allocation2 + $0x4] sm:$0xff]
        %v565 = vld [vmem:[#allocation2 + $0xc] sm:$0xff]
        %v566 = vld [vmem:[#allocation2 + $0x1c] sm:$0xff]
        %v567 = vld [vmem:[#allocation2 + $0x24] sm:$0xff]
        %v568 = vld [vmem:[#allocation2 + $0x34] sm:$0xff]
        %v569 = vld [vmem:[#allocation2 + $0x3c] sm:$0xff]
        %v570 = vld [vmem:[#allocation2 + $0x4c] sm:$0xff]
        %v571 = vld [vmem:[#allocation2 + $0x54] sm:$0xff]
        %v572 = vld [vmem:[#allocation2 + $0x64] sm:$0xff]
        %v573 = vld [vmem:[#allocation2 + $0x6c] sm:$0xff]
        %v574 = vld [vmem:[#allocation2 + $0x7c] sm:$0xff]
        %v575 = vld [vmem:[#allocation2 + $0x84] sm:$0xff]
        %v576 = vld [vmem:[#allocation2 + $0x94] sm:$0xff]
        %v577 = vld [vmem:[#allocation2 + $0x9c] sm:$0xff]
        %v578 = vld [vmem:[#allocation2 + $0xac] sm:$0xff]
        %v579 = vld [vmem:[#allocation2 + $0xb4] sm:$0xff]
        %v580 = vld [vmem:[#allocation2 + $0xc4] sm:$0xff]
        %v581 = vld [vmem:[#allocation2 + $0xcc] sm:$0xff]
        %v582 = vld [vmem:[#allocation2 + $0xdc] sm:$0xff]
        %v583 = vld [vmem:[#allocation2 + $0xe4] sm:$0xff]
        %v584 = vld [vmem:[#allocation2 + $0xf4] sm:$0xff]
        %v585 = vld [vmem:[#allocation2 + $0xfc] sm:$0xff]
        %v586 = vld [vmem:[#allocation2 + $0x10c] sm:$0xff]
        %v587 = vld [vmem:[#allocation2 + $0x114] sm:$0xff]
        %v588 = vld [vmem:[#allocation2 + $0x124] sm:$0xff]
        %v589 = vld [vmem:[#allocation2 + $0x12c] sm:$0xff]
        %v590 = vld [vmem:[#allocation2 + $0x13c] sm:$0xff]
        %v591 = vld [vmem:[#allocation2 + $0x144] sm:$0xff]
        %v592 = vld [vmem:[#allocation2 + $0x154] sm:$0xff]
        %v593 = vld [vmem:[#allocation2 + $0x15c] sm:$0xff]
        %v594 = vld [vmem:[#allocation2 + $0x16c] sm:$0xff]
        %v595 = vld [vmem:[#allocation2 + $0x174] sm:$0xff]
        %v596 = vld [vmem:[#allocation2 + $0x184] sm:$0xff]
        %v597 = vld [vmem:[#allocation2 + $0x18c] sm:$0xff]
        %v598 = vld [vmem:[#allocation2 + $0x19c] sm:$0xff]
        %v599 = vld [vmem:[#allocation2 + $0x1a4] sm:$0xff]
        %v600 = vld [vmem:[#allocation2 + $0x1b4] sm:$0xff]
        %v601 = vld [vmem:[#allocation2 + $0x1bc] sm:$0xff]
        %v602 = vld [vmem:[#allocation2 + $0x1cc] sm:$0xff]
        %v603 = vld [vmem:[#allocation2 + $0x1d4] sm:$0xff]
        %636 = vrot.lane.b32.xlu0 %v448, 64
        %v637 = vpop.permute.xlu0 %636
        %638 = vrot.lane.b32.xlu0 %v449, 64
        %v639 = vpop.permute.xlu0 %638
        %640 = vrot.lane.b32.xlu0 %v450, 64
        %v641 = vpop.permute.xlu0 %640
        %642 = vrot.lane.b32.xlu0 %v451, 64
        %v643 = vpop.permute.xlu0 %642
        %644 = vrot.lane.b32.xlu0 %v452, 64
        %v645 = vpop.permute.xlu0 %644
        %646 = vrot.lane.b32.xlu0 %v453, 64
        %v647 = vpop.permute.xlu0 %646
        %648 = vrot.lane.b32.xlu0 %v454, 64
        %v649 = vpop.permute.xlu0 %648
        %650 = vrot.lane.b32.xlu0 %v455, 64
        %v651 = vpop.permute.xlu0 %650
        %652 = vrot.lane.b32.xlu0 %v456, 64
        %v653 = vpop.permute.xlu0 %652
        %654 = vrot.lane.b32.xlu0 %v457, 64
        %v655 = vpop.permute.xlu0 %654
        %656 = vrot.lane.b32.xlu0 %v458, 64
        %v657 = vpop.permute.xlu0 %656
        %658 = vrot.lane.b32.xlu0 %v459, 64
        %v659 = vpop.permute.xlu0 %658
        %660 = vrot.lane.b32.xlu0 %v460, 64
        %v661 = vpop.permute.xlu0 %660
        %662 = vrot.lane.b32.xlu0 %v461, 64
        %v663 = vpop.permute.xlu0 %662
        %664 = vrot.lane.b32.xlu0 %v462, 64
        %v665 = vpop.permute.xlu0 %664
        %666 = vrot.lane.b32.xlu0 %v463, 64
        %v667 = vpop.permute.xlu0 %666
        %668 = vrot.lane.b32.xlu0 %v464, 64
        %v669 = vpop.permute.xlu0 %668
        %670 = vrot.lane.b32.xlu0 %v465, 64
        %v671 = vpop.permute.xlu0 %670
        %672 = vrot.lane.b32.xlu0 %v466, 64
        %v673 = vpop.permute.xlu0 %672
        %674 = vrot.lane.b32.xlu0 %v467, 64
        %v675 = vpop.permute.xlu0 %674
        %676 = vrot.lane.b32.xlu0 %v468, 64
        %v677 = vpop.permute.xlu0 %676
        %678 = vrot.lane.b32.xlu0 %v469, 64
        %v679 = vpop.permute.xlu0 %678
        %680 = vrot.lane.b32.xlu0 %v470, 64
        %v681 = vpop.permute.xlu0 %680
        %682 = vrot.lane.b32.xlu0 %v471, 64
        %v683 = vpop.permute.xlu0 %682
        %684 = vrot.lane.b32.xlu0 %v472, 64
        %v685 = vpop.permute.xlu0 %684
        %686 = vrot.lane.b32.xlu0 %v473, 64
        %v687 = vpop.permute.xlu0 %686
        %688 = vrot.lane.b32.xlu0 %v474, 64
        %v689 = vpop.permute.xlu0 %688
        %690 = vrot.lane.b32.xlu0 %v475, 64
        %v691 = vpop.permute.xlu0 %690
        %692 = vrot.lane.b32.xlu0 %v476, 64
        %v693 = vpop.permute.xlu0 %692
        %694 = vrot.lane.b32.xlu0 %v477, 64
        %v695 = vpop.permute.xlu0 %694
        %696 = vrot.lane.b32.xlu0 %v478, 64
        %v697 = vpop.permute.xlu0 %696
        %698 = vrot.lane.b32.xlu0 %v479, 64
        %v699 = vpop.permute.xlu0 %698
        %v732 = vsel %vm309, %v446, %v637
        %v733 = vsel %vm309, %v447, %v639
        %v734 = vsel %vm309, %v448, %v641
        %v735 = vsel %vm309, %v449, %v643
        %v736 = vsel %vm309, %v450, %v645
        %v737 = vsel %vm309, %v451, %v647
        %v738 = vsel %vm309, %v452, %v649
        %v739 = vsel %vm309, %v453, %v651
        %v740 = vsel %vm309, %v454, %v653
        %v741 = vsel %vm309, %v455, %v655
        %v742 = vsel %vm309, %v456, %v657
        %v743 = vsel %vm309, %v457, %v659
        %v744 = vsel %vm309, %v458, %v661
        %v745 = vsel %vm309, %v459, %v663
        %v746 = vsel %vm309, %v460, %v665
        %v747 = vsel %vm309, %v461, %v667
        %v748 = vsel %vm309, %v462, %v669
        %v749 = vsel %vm309, %v463, %v671
        %v750 = vsel %vm309, %v464, %v673
        %v751 = vsel %vm309, %v465, %v675
        %v752 = vsel %vm309, %v466, %v677
        %v753 = vsel %vm309, %v467, %v679
        %v754 = vsel %vm309, %v468, %v681
        %v755 = vsel %vm309, %v469, %v683
        %v756 = vsel %vm309, %v470, %v685
        %v757 = vsel %vm309, %v471, %v687
        %v758 = vsel %vm309, %v472, %v689
        %v759 = vsel %vm309, %v473, %v691
        %v760 = vsel %vm309, %v474, %v693
        %v761 = vsel %vm309, %v475, %v695
        %v762 = vsel %vm309, %v476, %v697
        %v763 = vsel %vm309, %v477, %v699
        %v764 = vld [vmem:[%s1] sm:$0xff]
        %v765 = vld [vmem:[%s1 + $0x8] sm:$0xff]
        %v766 = vld [vmem:[%s1 + $0x10] sm:$0xff]
        %v767 = vld [vmem:[%s1 + $0x18] sm:$0xff]
        %v768 = vld [vmem:[%s1 + $0x20] sm:$0xff]
        %v769 = vld [vmem:[%s1 + $0x28] sm:$0xff]
        %v770 = vld [vmem:[%s1 + $0x30] sm:$0xff]
        %v771 = vld [vmem:[%s1 + $0x38] sm:$0xff]
        %v772 = vld [vmem:[%s1 + $0x40] sm:$0xff]
        %v773 = vld [vmem:[%s1 + $0x48] sm:$0xff]
        %v774 = vld [vmem:[%s1 + $0x50] sm:$0xff]
        %v775 = vld [vmem:[%s1 + $0x58] sm:$0xff]
        %v776 = vld [vmem:[%s1 + $0x60] sm:$0xff]
        %v777 = vld [vmem:[%s1 + $0x68] sm:$0xff]
        %v778 = vld [vmem:[%s1 + $0x70] sm:$0xff]
        %v779 = vld [vmem:[%s1 + $0x78] sm:$0xff]
        %v780 = vld [vmem:[%s1 + $0x80] sm:$0xff]
        %v781 = vld [vmem:[%s1 + $0x88] sm:$0xff]
        %v782 = vld [vmem:[%s1 + $0x90] sm:$0xff]
        %v783 = vld [vmem:[%s1 + $0x98] sm:$0xff]
        %v784 = vld [vmem:[%s1 + $0xa0] sm:$0xff]
        %v785 = vld [vmem:[%s1 + $0xa8] sm:$0xff]
        %v786 = vld [vmem:[%s1 + $0xb0] sm:$0xff]
        %v787 = vld [vmem:[%s1 + $0xb8] sm:$0xff]
        %820 = vrot.lane.b32.xlu0 %v488, 64
        %v821 = vpop.permute.xlu0 %820
        %822 = vrot.lane.b32.xlu0 %v489, 64
        %v823 = vpop.permute.xlu0 %822
        %824 = vrot.lane.b32.xlu0 %v490, 64
        %v825 = vpop.permute.xlu0 %824
        %826 = vrot.lane.b32.xlu0 %v491, 64
        %v827 = vpop.permute.xlu0 %826
        %828 = vrot.lane.b32.xlu0 %v492, 64
        %v829 = vpop.permute.xlu0 %828
        %830 = vrot.lane.b32.xlu0 %v493, 64
        %v831 = vpop.permute.xlu0 %830
        %832 = vrot.lane.b32.xlu0 %v494, 64
        %v833 = vpop.permute.xlu0 %832
        %834 = vrot.lane.b32.xlu0 %v495, 64
        %v835 = vpop.permute.xlu0 %834
        %836 = vrot.lane.b32.xlu0 %v496, 64
        %v837 = vpop.permute.xlu0 %836
        %838 = vrot.lane.b32.xlu0 %v497, 64
        %v839 = vpop.permute.xlu0 %838
        %840 = vrot.lane.b32.xlu0 %v498, 64
        %v841 = vpop.permute.xlu0 %840
        %842 = vrot.lane.b32.xlu0 %v499, 64
        %v843 = vpop.permute.xlu0 %842
        %844 = vrot.lane.b32.xlu0 %v500, 64
        %v845 = vpop.permute.xlu0 %844
        %846 = vrot.lane.b32.xlu0 %v501, 64
        %v847 = vpop.permute.xlu0 %846
        %848 = vrot.lane.b32.xlu0 %v502, 64
        %v849 = vpop.permute.xlu0 %848
        %850 = vrot.lane.b32.xlu0 %v503, 64
        %v851 = vpop.permute.xlu0 %850
        %852 = vrot.lane.b32.xlu0 %v504, 64
        %v853 = vpop.permute.xlu0 %852
        %854 = vrot.lane.b32.xlu0 %v505, 64
        %v855 = vpop.permute.xlu0 %854
        %856 = vrot.lane.b32.xlu0 %v506, 64
        %v857 = vpop.permute.xlu0 %856
        %858 = vrot.lane.b32.xlu0 %v507, 64
        %v859 = vpop.permute.xlu0 %858
        %860 = vrot.lane.b32.xlu0 %v508, 64
        %v861 = vpop.permute.xlu0 %860
        %862 = vrot.lane.b32.xlu0 %v509, 64
        %v863 = vpop.permute.xlu0 %862
        %864 = vrot.lane.b32.xlu0 %v510, 64
        %v865 = vpop.permute.xlu0 %864
        %866 = vrot.lane.b32.xlu0 %v511, 64
        %v867 = vpop.permute.xlu0 %866
        %868 = vrot.lane.b32.xlu0 %v512, 64
        %v869 = vpop.permute.xlu0 %868
        %870 = vrot.lane.b32.xlu0 %v513, 64
        %v871 = vpop.permute.xlu0 %870
        %872 = vrot.lane.b32.xlu0 %v514, 64
        %v873 = vpop.permute.xlu0 %872
        %874 = vrot.lane.b32.xlu0 %v515, 64
        %v875 = vpop.permute.xlu0 %874
        %876 = vrot.lane.b32.xlu0 %v516, 64
        %v877 = vpop.permute.xlu0 %876
        %878 = vrot.lane.b32.xlu0 %v517, 64
        %v879 = vpop.permute.xlu0 %878
        %880 = vrot.lane.b32.xlu0 %v518, 64
        %v881 = vpop.permute.xlu0 %880
        %882 = vrot.lane.b32.xlu0 %v519, 64
        %v883 = vpop.permute.xlu0 %882
        %v916 = vsel %vm309, %v486, %v821
        %v917 = vsel %vm309, %v487, %v823
        %v918 = vsel %vm309, %v488, %v825
        %v919 = vsel %vm309, %v489, %v827
        %v920 = vsel %vm309, %v490, %v829
        %v921 = vsel %vm309, %v491, %v831
        %v922 = vsel %vm309, %v492, %v833
        %v923 = vsel %vm309, %v493, %v835
        %v924 = vsel %vm309, %v494, %v837
        %v925 = vsel %vm309, %v495, %v839
        %v926 = vsel %vm309, %v496, %v841
        %v927 = vsel %vm309, %v497, %v843
        %v928 = vsel %vm309, %v498, %v845
        %v929 = vsel %vm309, %v499, %v847
        %v930 = vsel %vm309, %v500, %v849
        %v931 = vsel %vm309, %v501, %v851
        %v932 = vsel %vm309, %v502, %v853
        %v933 = vsel %vm309, %v503, %v855
        %v934 = vsel %vm309, %v504, %v857
        %v935 = vsel %vm309, %v505, %v859
        %v936 = vsel %vm309, %v506, %v861
        %v937 = vsel %vm309, %v507, %v863
        %v938 = vsel %vm309, %v508, %v865
        %v939 = vsel %vm309, %v509, %v867
        %v940 = vsel %vm309, %v510, %v869
        %v941 = vsel %vm309, %v511, %v871
        %v942 = vsel %vm309, %v512, %v873
        %v943 = vsel %vm309, %v513, %v875
        %v944 = vsel %vm309, %v514, %v877
        %v945 = vsel %vm309, %v515, %v879
        %v946 = vsel %vm309, %v516, %v881
        %v947 = vsel %vm309, %v517, %v883
        %s948 = scalar_lea.vmem %s1, 192
        %v949 = vld [vmem:[%s948] sm:$0xff]
        %v950 = vld [vmem:[%s948 + $0x8] sm:$0xff]
        %v951 = vld [vmem:[%s948 + $0x10] sm:$0xff]
        %v952 = vld [vmem:[%s948 + $0x18] sm:$0xff]
        %v953 = vld [vmem:[%s948 + $0x20] sm:$0xff]
        %v954 = vld [vmem:[%s948 + $0x28] sm:$0xff]
        %v955 = vld [vmem:[%s948 + $0x30] sm:$0xff]
        %v956 = vld [vmem:[%s948 + $0x38] sm:$0xff]
        %v957 = vld [vmem:[%s948 + $0x40] sm:$0xff]
        %v958 = vld [vmem:[%s948 + $0x48] sm:$0xff]
        %v959 = vld [vmem:[%s948 + $0x50] sm:$0xff]
        %v960 = vld [vmem:[%s948 + $0x58] sm:$0xff]
        %v961 = vld [vmem:[%s948 + $0x60] sm:$0xff]
        %v962 = vld [vmem:[%s948 + $0x68] sm:$0xff]
        %v963 = vld [vmem:[%s948 + $0x70] sm:$0xff]
        %v964 = vld [vmem:[%s948 + $0x78] sm:$0xff]
        %v965 = vld [vmem:[%s948 + $0x80] sm:$0xff]
        %v966 = vld [vmem:[%s948 + $0x88] sm:$0xff]
        %v967 = vld [vmem:[%s948 + $0x90] sm:$0xff]
        %v968 = vld [vmem:[%s948 + $0x98] sm:$0xff]
        %v969 = vld [vmem:[%s948 + $0xa0] sm:$0xff]
        %v970 = vld [vmem:[%s948 + $0xa8] sm:$0xff]
        %v971 = vld [vmem:[%s948 + $0xb0] sm:$0xff]
        %v972 = vld [vmem:[%s948 + $0xb8] sm:$0xff]
        %v973 = vsel %vm309, %v490, 0
        %v975 = vsel %vm309, %v491, 0
        %v977 = vsel %vm309, %v492, 0
        %v979 = vsel %vm309, %v493, 0
        %v981 = vsel %vm309, %v494, 0
        %v983 = vsel %vm309, %v495, 0
        %v985 = vsel %vm309, %v496, 0
        %v987 = vsel %vm309, %v497, 0
        %v989 = vsel %vm309, %v498, 0
        %v991 = vsel %vm309, %v499, 0
        %v993 = vsel %vm309, %v500, 0
        %v995 = vsel %vm309, %v501, 0
        %v997 = vsel %vm309, %v502, 0
        %v999 = vsel %vm309, %v503, 0
        %v1001 = vsel %vm309, %v504, 0
        %v1003 = vsel %vm309, %v505, 0
        %v1005 = vsel %vm309, %v506, 0
        %v1007 = vsel %vm309, %v507, 0
        %v1009 = vsel %vm309, %v508, 0
        %v1011 = vsel %vm309, %v509, 0
        %v1013 = vsel %vm309, %v510, 0
        %v1015 = vsel %vm309, %v511, 0
        %v1017 = vsel %vm309, %v512, 0
        %v1019 = vsel %vm309, %v513, 0
        %v1021 = vsel %vm309, %v514, 0
        %v1023 = vsel %vm309, %v515, 0
        %v1025 = vsel %vm309, %v516, 0
        %v1027 = vsel %vm309, %v517, 0
        %v1029 = vsel %vm309, %v518, 0
        %v1031 = vsel %vm309, %v519, 0
        %v1034 = vsel %vm309, %v520, 0
        %v1037 = vsel %vm309, %v521, 0
        %1039 = vmatprep.subr.mxu0 0.0
        %1040 = vmatpush1.msra.mxu0 %v949
        %1041 = vmatprep.subr.mxu0 0.0
        %1042 = vmatpush1.msra.mxu0 %v950
        %1043 = vmatprep.subr.mxu0 0.0
        %1044 = vmatpush1.msra.mxu0 %v951
        %1045 = vmatprep.subr.mxu0 0.0
        %1046 = vmatpush1.msra.mxu0 %v952
        %1047 = vmatprep.subr.mxu0 0.0
        %1048 = vmatpush1.msra.mxu0 %v953
        %1049 = vmatprep.subr.mxu0 0.0
        %1050 = vmatpush1.msra.mxu0 %v954
        %1051 = vmatprep.subr.mxu0 0.0
        %1052 = vmatpush1.msra.mxu0 %v955
        %1053 = vmatprep.subr.mxu0 0.0
        %1054 = vmatpush1.msra.mxu0 %v956
        %1055 = vmatprep.subr.mxu0 0.0
        %1056 = vmatpush1.msra.mxu0 %v957
        %1057 = vmatprep.subr.mxu0 0.0
        %1058 = vmatpush1.msra.mxu0 %v958
        %1059 = vmatprep.subr.mxu0 0.0
        %1060 = vmatpush1.msra.mxu0 %v959
        %1061 = vmatprep.subr.mxu0 0.0
        %1062 = vmatpush1.msra.mxu0 %v960
        %1063 = vmatprep.subr.mxu0 0.0
        %1064 = vmatpush1.msra.mxu0 %v961
        %1065 = vmatprep.subr.mxu0 0.0
        %1066 = vmatpush1.msra.mxu0 %v962
        %1067 = vmatprep.subr.mxu0 0.0
        %1068 = vmatpush1.msra.mxu0 %v963
        %1069 = vmatprep.subr.mxu0 0.0
        %1070 = vmatpush1.msra.mxu0 %v964
        %1071 = vmatprep.subr.mxu0 0.0
        %1072 = vmatpush1.msra.mxu0 %v965
        %1073 = vmatprep.subr.mxu0 0.0
        %1074 = vmatpush1.msra.mxu0 %v966
        %1075 = vmatprep.subr.mxu0 0.0
        %1076 = vmatpush1.msra.mxu0 %v967
        %1077 = vmatprep.subr.mxu0 0.0
        %1078 = vmatpush1.msra.mxu0 %v968
        %1079 = vmatprep.subr.mxu0 0.0
        %1080 = vmatpush1.msra.mxu0 %v969
        %1081 = vmatprep.subr.mxu0 0.0
        %1082 = vmatpush1.msra.mxu0 %v970
        %1083 = vmatprep.subr.mxu0 0.0
        %1084 = vmatpush1.msra.mxu0 %v971
        %1085 = vmatprep.subr.mxu0 0.0
        %1086 = vmatpush1.msra.mxu0 %v972
        %1087 = vmatprep.subr.mxu0 0.0
        %1088 = vmatpush1.msra.mxu0 0.0
        %1089 = vmatprep.subr.mxu0 0.0
        %1090 = vmatpush1.msra.mxu0 0.0
        %1091 = vmatprep.subr.mxu0 0.0
        %1092 = vmatpush1.msra.mxu0 0.0
        %1093 = vmatprep.subr.mxu0 0.0
        %1094 = vmatpush1.msra.mxu0 0.0
        %1095 = vmatprep.subr.mxu0 0.0
        %1096 = vmatpush1.msra.mxu0 0.0
        %1097 = vmatprep.subr.mxu0 0.0
        %1098 = vmatpush1.msra.mxu0 0.0
        %1099 = vmatprep.subr.mxu0 0.0
        %1100 = vmatpush1.msra.mxu0 0.0
        %1101 = vmatprep.subr.mxu0 0.0
        %1102 = vmatpush1.msra.mxu0 0.0
        %1103 = vmatprep.mubr.f32.mxu0 %v973
        %1104 = vmatmul.mubr.f32.gmra.mrb[0].mxu0 %v916
        %v1105 = vpop.f32.mrb[0].mxu0
        %v1106 = vadd.f32 0.0, %v1105
        %v1107 = vpop.f32.mrb[0].mxu0
        %1108 = vmatprep.mubr.f32.mxu0 %v975
        %1109 = vmatmul.mubr.f32.gmra.mrb[0].mxu0 %v917
        %v1110 = vpop.f32.mrb[0].mxu0
        %v1111 = vadd.f32 0.0, %v1110
        %v1112 = vpop.f32.mrb[0].mxu0
        %1113 = vmatprep.mubr.f32.mxu0 %v977
        %1114 = vmatmul.mubr.f32.gmra.mrb[0].mxu0 %v918
        %v1115 = vpop.f32.mrb[0].mxu0
        %v1116 = vadd.f32 0.0, %v1115
        %v1117 = vpop.f32.mrb[0].mxu0
        %1118 = vmatprep.mubr.f32.mxu0 %v979
        %1119 = vmatmul.mubr.f32.gmra.mrb[0].mxu0 %v919
        %v1120 = vpop.f32.mrb[0].mxu0
        %v1121 = vadd.f32 0.0, %v1120
        %v1122 = vpop.f32.mrb[0].mxu0
        %1123 = vmatprep.mubr.f32.mxu0 %v981
        %1124 = vmatmul.mubr.f32.gmra.mrb[0].mxu0 %v920
        %v1125 = vpop.f32.mrb[0].mxu0
        %v1126 = vadd.f32 0.0, %v1125
        %v1127 = vpop.f32.mrb[0].mxu0
        %1128 = vmatprep.mubr.f32.mxu0 %v983
        %1129 = vmatmul.mubr.f32.gmra.mrb[0].mxu0 %v921
        %v1130 = vpop.f32.mrb[0].mxu0
        %v1131 = vadd.f32 0.0, %v1130
        %v1132 = vpop.f32.mrb[0].mxu0
        %1133 = vmatprep.mubr.f32.mxu0 %v985
        %1134 = vmatmul.mubr.f32.gmra.mrb[0].mxu0 %v922
        %v1135 = vpop.f32.mrb[0].mxu0
        %v1136 = vadd.f32 0.0, %v1135
        %v1137 = vpop.f32.mrb[0].mxu0
        %1138 = vmatprep.mubr.f32.mxu0 %v987
        %1139 = vmatmul.mubr.f32.gmra.mrb[0].mxu0 %v923
        %v1140 = vpop.f32.mrb[0].mxu0
        %v1141 = vadd.f32 0.0, %v1140
        %v1142 = vpop.f32.mrb[0].mxu0
        %1143 = vmatprep.mubr.f32.mxu0 %v989
        %1144 = vmatmul.mubr.f32.gmra.mrb[0].mxu0 %v924
        %v1145 = vpop.f32.mrb[0].mxu0
        %v1146 = vadd.f32 0.0, %v1145
        %v1147 = vpop.f32.mrb[0].mxu0
        %1148 = vmatprep.mubr.f32.mxu0 %v991
        %1149 = vmatmul.mubr.f32.gmra.mrb[0].mxu0 %v925
        %v1150 = vpop.f32.mrb[0].mxu0
        %v1151 = vadd.f32 0.0, %v1150
        %v1152 = vpop.f32.mrb[0].mxu0
        %1153 = vmatprep.mubr.f32.mxu0 %v993
        %1154 = vmatmul.mubr.f32.gmra.mrb[0].mxu0 %v926
        %v1155 = vpop.f32.mrb[0].mxu0
        %v1156 = vadd.f32 0.0, %v1155
        %v1157 = vpop.f32.mrb[0].mxu0
        %1158 = vmatprep.mubr.f32.mxu0 %v995
        %1159 = vmatmul.mubr.f32.gmra.mrb[0].mxu0 %v927
        %v1160 = vpop.f32.mrb[0].mxu0
        %v1161 = vadd.f32 0.0, %v1160
        %v1162 = vpop.f32.mrb[0].mxu0
        %1163 = vmatprep.mubr.f32.mxu0 %v997
        %1164 = vmatmul.mubr.f32.gmra.mrb[0].mxu0 %v928
        %v1165 = vpop.f32.mrb[0].mxu0
        %v1166 = vadd.f32 0.0, %v1165
        %v1167 = vpop.f32.mrb[0].mxu0
        %1168 = vmatprep.mubr.f32.mxu0 %v999
        %1169 = vmatmul.mubr.f32.gmra.mrb[0].mxu0 %v929
        %v1170 = vpop.f32.mrb[0].mxu0
        %v1171 = vadd.f32 0.0, %v1170
        %v1172 = vpop.f32.mrb[0].mxu0
        %1173 = vmatprep.mubr.f32.mxu0 %v1001
        %1174 = vmatmul.mubr.f32.gmra.mrb[0].mxu0 %v930
        %v1175 = vpop.f32.mrb[0].mxu0
        %v1176 = vadd.f32 0.0, %v1175
        %v1177 = vpop.f32.mrb[0].mxu0
        %1178 = vmatprep.mubr.f32.mxu0 %v1003
        %1179 = vmatmul.mubr.f32.gmra.mrb[0].mxu0 %v931
        %v1180 = vpop.f32.mrb[0].mxu0
        %v1181 = vadd.f32 0.0, %v1180
        %v1182 = vpop.f32.mrb[0].mxu0
        %1183 = vmatprep.mubr.f32.mxu0 %v1005
        %1184 = vmatmul.mubr.f32.gmra.mrb[0].mxu0 %v932
        %v1185 = vpop.f32.mrb[0].mxu0
        %v1186 = vadd.f32 0.0, %v1185
        %v1187 = vpop.f32.mrb[0].mxu0
        %1188 = vmatprep.mubr.f32.mxu0 %v1007
        %1189 = vmatmul.mubr.f32.gmra.mrb[0].mxu0 %v933
        %v1190 = vpop.f32.mrb[0].mxu0
        %v1191 = vadd.f32 0.0, %v1190
        %v1192 = vpop.f32.mrb[0].mxu0
        %1193 = vmatprep.mubr.f32.mxu0 %v1009
        %1194 = vmatmul.mubr.f32.gmra.mrb[0].mxu0 %v934
        %v1195 = vpop.f32.mrb[0].mxu0
        %v1196 = vadd.f32 0.0, %v1195
        %v1197 = vpop.f32.mrb[0].mxu0
        %1198 = vmatprep.mubr.f32.mxu0 %v1011
        %1199 = vmatmul.mubr.f32.gmra.mrb[0].mxu0 %v935
        %v1200 = vpop.f32.mrb[0].mxu0
        %v1201 = vadd.f32 0.0, %v1200
        %v1202 = vpop.f32.mrb[0].mxu0
        %1203 = vmatprep.mubr.f32.mxu0 %v1013
        %1204 = vmatmul.mubr.f32.gmra.mrb[0].mxu0 %v936
        %v1205 = vpop.f32.mrb[0].mxu0
        %v1206 = vadd.f32 0.0, %v1205
        %v1207 = vpop.f32.mrb[0].mxu0
        %1208 = vmatprep.mubr.f32.mxu0 %v1015
        %1209 = vmatmul.mubr.f32.gmra.mrb[0].mxu0 %v937
        %v1210 = vpop.f32.mrb[0].mxu0
        %v1211 = vadd.f32 0.0, %v1210
        %v1212 = vpop.f32.mrb[0].mxu0
        %1213 = vmatprep.mubr.f32.mxu0 %v1017
        %1214 = vmatmul.mubr.f32.gmra.mrb[0].mxu0 %v938
        %v1215 = vpop.f32.mrb[0].mxu0
        %v1216 = vadd.f32 0.0, %v1215
        %v1217 = vpop.f32.mrb[0].mxu0
        %1218 = vmatprep.mubr.f32.mxu0 %v1019
        %1219 = vmatmul.mubr.f32.gmra.mrb[0].mxu0 %v939
        %v1220 = vpop.f32.mrb[0].mxu0
        %v1221 = vadd.f32 0.0, %v1220
        %v1222 = vpop.f32.mrb[0].mxu0
        %1223 = vmatprep.mubr.f32.mxu0 %v1021
        %1224 = vmatmul.mubr.f32.gmra.mrb[0].mxu0 %v940
        %v1225 = vpop.f32.mrb[0].mxu0
        %v1226 = vadd.f32 0.0, %v1225
        %v1227 = vpop.f32.mrb[0].mxu0
        %1228 = vmatprep.mubr.f32.mxu0 %v1023
        %1229 = vmatmul.mubr.f32.gmra.mrb[0].mxu0 %v941
        %v1230 = vpop.f32.mrb[0].mxu0
        %v1231 = vadd.f32 0.0, %v1230
        %v1232 = vpop.f32.mrb[0].mxu0
        %1233 = vmatprep.mubr.f32.mxu0 %v1025
        %1234 = vmatmul.mubr.f32.gmra.mrb[0].mxu0 %v942
        %v1235 = vpop.f32.mrb[0].mxu0
        %v1236 = vadd.f32 0.0, %v1235
        %v1237 = vpop.f32.mrb[0].mxu0
        %1238 = vmatprep.mubr.f32.mxu0 %v1027
        %1239 = vmatmul.mubr.f32.gmra.mrb[0].mxu0 %v943
        %v1240 = vpop.f32.mrb[0].mxu0
        %v1241 = vadd.f32 0.0, %v1240
        %v1242 = vpop.f32.mrb[0].mxu0
        %1243 = vmatprep.mubr.f32.mxu0 %v1029
        %1244 = vmatmul.mubr.f32.gmra.mrb[0].mxu0 %v944
        %v1245 = vpop.f32.mrb[0].mxu0
        %v1246 = vadd.f32 0.0, %v1245
        %v1247 = vpop.f32.mrb[0].mxu0
        %1248 = vmatprep.mubr.f32.mxu0 %v1031
        %1249 = vmatmul.mubr.f32.gmra.mrb[0].mxu0 %v945
        %v1250 = vpop.f32.mrb[0].mxu0
        %v1251 = vadd.f32 0.0, %v1250
        %v1252 = vpop.f32.mrb[0].mxu0
        %1253 = vmatprep.mubr.f32.mxu0 %v1034
        %1254 = vmatmul.mubr.f32.gmra.mrb[0].mxu0 %v946
        %v1255 = vpop.f32.mrb[0].mxu0
        %v1256 = vadd.f32 0.0, %v1255
        %v1257 = vpop.f32.mrb[0].mxu0
        %1258 = vmatprep.mubr.f32.mxu0 %v1037
        %1259 = vmatmul.mubr.f32.gmra.mrb[0].mxu0 %v947
        %v1260 = vpop.f32.mrb[0].mxu0
        %v1261 = vadd.f32 0.0, %v1260
        %v1262 = vpop.f32.mrb[0].mxu0
        %1263 = vdwg.mxu0
        %v1264 = vsel %vm309, %v450, 0
        %v1266 = vsel %vm309, %v451, 0
        %v1268 = vsel %vm309, %v452, 0
        %v1270 = vsel %vm309, %v453, 0
        %v1272 = vsel %vm309, %v454, 0
        %v1274 = vsel %vm309, %v455, 0
        %v1276 = vsel %vm309, %v456, 0
        %v1278 = vsel %vm309, %v457, 0
        %v1280 = vsel %vm309, %v458, 0
        %v1282 = vsel %vm309, %v459, 0
        %v1284 = vsel %vm309, %v460, 0
        %v1286 = vsel %vm309, %v461, 0
        %v1288 = vsel %vm309, %v462, 0
        %v1290 = vsel %vm309, %v463, 0
        %v1292 = vsel %vm309, %v464, 0
        %v1294 = vsel %vm309, %v465, 0
        %v1296 = vsel %vm309, %v466, 0
        %v1298 = vsel %vm309, %v467, 0
        %v1300 = vsel %vm309, %v468, 0
        %v1302 = vsel %vm309, %v469, 0
        %v1304 = vsel %vm309, %v470, 0
        %v1306 = vsel %vm309, %v471, 0
        %v1308 = vsel %vm309, %v472, 0
        %v1310 = vsel %vm309, %v473, 0
        %v1312 = vsel %vm309, %v474, 0
        %v1314 = vsel %vm309, %v475, 0
        %v1316 = vsel %vm309, %v476, 0
        %v1318 = vsel %vm309, %v477, 0
        %v1320 = vsel %vm309, %v478, 0
        %v1322 = vsel %vm309, %v479, 0
        %v1325 = vsel %vm309, %v480, 0
        %v1328 = vsel %vm309, %v481, 0
        %1330 = vmatprep.subr.mxu0 0.0
        %1331 = vmatpush1.msra.mxu0 %v764
        %1332 = vmatprep.subr.mxu0 0.0
        %1333 = vmatpush1.msra.mxu0 %v765
        %1334 = vmatprep.subr.mxu0 0.0
        %1335 = vmatpush1.msra.mxu0 %v766
        %1336 = vmatprep.subr.mxu0 0.0
        %1337 = vmatpush1.msra.mxu0 %v767
        %1338 = vmatprep.subr.mxu0 0.0
        %1339 = vmatpush1.msra.mxu0 %v768
        %1340 = vmatprep.subr.mxu0 0.0
        %1341 = vmatpush1.msra.mxu0 %v769
        %1342 = vmatprep.subr.mxu0 0.0
        %1343 = vmatpush1.msra.mxu0 %v770
        %1344 = vmatprep.subr.mxu0 0.0
        %1345 = vmatpush1.msra.mxu0 %v771
        %1346 = vmatprep.subr.mxu0 0.0
        %1347 = vmatpush1.msra.mxu0 %v772
        %1348 = vmatprep.subr.mxu0 0.0
        %1349 = vmatpush1.msra.mxu0 %v773
        %1350 = vmatprep.subr.mxu0 0.0
        %1351 = vmatpush1.msra.mxu0 %v774
        %1352 = vmatprep.subr.mxu0 0.0
        %1353 = vmatpush1.msra.mxu0 %v775
        %1354 = vmatprep.subr.mxu0 0.0
        %1355 = vmatpush1.msra.mxu0 %v776
        %1356 = vmatprep.subr.mxu0 0.0
        %1357 = vmatpush1.msra.mxu0 %v777
        %1358 = vmatprep.subr.mxu0 0.0
        %1359 = vmatpush1.msra.mxu0 %v778
        %1360 = vmatprep.subr.mxu0 0.0
        %1361 = vmatpush1.msra.mxu0 %v779
        %1362 = vmatprep.subr.mxu0 0.0
        %1363 = vmatpush1.msra.mxu0 %v780
        %1364 = vmatprep.subr.mxu0 0.0
        %1365 = vmatpush1.msra.mxu0 %v781
        %1366 = vmatprep.subr.mxu0 0.0
        %1367 = vmatpush1.msra.mxu0 %v782
        %1368 = vmatprep.subr.mxu0 0.0
        %1369 = vmatpush1.msra.mxu0 %v783
        %1370 = vmatprep.subr.mxu0 0.0
        %1371 = vmatpush1.msra.mxu0 %v784
        %1372 = vmatprep.subr.mxu0 0.0
        %1373 = vmatpush1.msra.mxu0 %v785
        %1374 = vmatprep.subr.mxu0 0.0
        %1375 = vmatpush1.msra.mxu0 %v786
        %1376 = vmatprep.subr.mxu0 0.0
        %1377 = vmatpush1.msra.mxu0 %v787
        %1378 = vmatprep.subr.mxu0 0.0
        %1379 = vmatpush1.msra.mxu0 0.0
        %1380 = vmatprep.subr.mxu0 0.0
        %1381 = vmatpush1.msra.mxu0 0.0
        %1382 = vmatprep.subr.mxu0 0.0
        %1383 = vmatpush1.msra.mxu0 0.0
        %1384 = vmatprep.subr.mxu0 0.0
        %1385 = vmatpush1.msra.mxu0 0.0
        %1386 = vmatprep.subr.mxu0 0.0
        %1387 = vmatpush1.msra.mxu0 0.0
        %1388 = vmatprep.subr.mxu0 0.0
        %1389 = vmatpush1.msra.mxu0 0.0
        %1390 = vmatprep.subr.mxu0 0.0
        %1391 = vmatpush1.msra.mxu0 0.0
        %1392 = vmatprep.subr.mxu0 0.0
        %1393 = vmatpush1.msra.mxu0 0.0
        %1394 = vmatprep.mubr.f32.mxu0 %v1264
        %1395 = vmatmul.mubr.f32.gmra.mrb[0].mxu0 %v732
        %v1396 = vpop.f32.mrb[0].mxu0
        %v1397 = vadd.f32 %v1106, %v1396
        %v1398 = vpop.f32.mrb[0].mxu0
        %1399 = vmatprep.mubr.f32.mxu0 %v1266
        %1400 = vmatmul.mubr.f32.gmra.mrb[0].mxu0 %v733
        %v1401 = vpop.f32.mrb[0].mxu0
        %v1402 = vadd.f32 %v1111, %v1401
        %v1403 = vpop.f32.mrb[0].mxu0
        %1404 = vmatprep.mubr.f32.mxu0 %v1268
        %1405 = vmatmul.mubr.f32.gmra.mrb[0].mxu0 %v734
        %v1406 = vpop.f32.mrb[0].mxu0
        %v1407 = vadd.f32 %v1116, %v1406
        %v1408 = vpop.f32.mrb[0].mxu0
        %1409 = vmatprep.mubr.f32.mxu0 %v1270
        %1410 = vmatmul.mubr.f32.gmra.mrb[0].mxu0 %v735
        %v1411 = vpop.f32.mrb[0].mxu0
        %v1412 = vadd.f32 %v1121, %v1411
        %v1413 = vpop.f32.mrb[0].mxu0
        %1414 = vmatprep.mubr.f32.mxu0 %v1272
        %1415 = vmatmul.mubr.f32.gmra.mrb[0].mxu0 %v736
        %v1416 = vpop.f32.mrb[0].mxu0
        %v1417 = vadd.f32 %v1126, %v1416
        %v1418 = vpop.f32.mrb[0].mxu0
        %1419 = vmatprep.mubr.f32.mxu0 %v1274
        %1420 = vmatmul.mubr.f32.gmra.mrb[0].mxu0 %v737
        %v1421 = vpop.f32.mrb[0].mxu0
        %v1422 = vadd.f32 %v1131, %v1421
        %v1423 = vpop.f32.mrb[0].mxu0
        %1424 = vmatprep.mubr.f32.mxu0 %v1276
        %1425 = vmatmul.mubr.f32.gmra.mrb[0].mxu0 %v738
        %v1426 = vpop.f32.mrb[0].mxu0
        %v1427 = vadd.f32 %v1136, %v1426
        %v1428 = vpop.f32.mrb[0].mxu0
        %1429 = vmatprep.mubr.f32.mxu0 %v1278
        %1430 = vmatmul.mubr.f32.gmra.mrb[0].mxu0 %v739
        %v1431 = vpop.f32.mrb[0].mxu0
        %v1432 = vadd.f32 %v1141, %v1431
        %v1433 = vpop.f32.mrb[0].mxu0
        %1434 = vmatprep.mubr.f32.mxu0 %v1280
        %1435 = vmatmul.mubr.f32.gmra.mrb[0].mxu0 %v740
        %v1436 = vpop.f32.mrb[0].mxu0
        %v1437 = vadd.f32 %v1146, %v1436
        %v1438 = vpop.f32.mrb[0].mxu0
        %1439 = vmatprep.mubr.f32.mxu0 %v1282
        %1440 = vmatmul.mubr.f32.gmra.mrb[0].mxu0 %v741
        %v1441 = vpop.f32.mrb[0].mxu0
        %v1442 = vadd.f32 %v1151, %v1441
        %v1443 = vpop.f32.mrb[0].mxu0
        %1444 = vmatprep.mubr.f32.mxu0 %v1284
        %1445 = vmatmul.mubr.f32.gmra.mrb[0].mxu0 %v742
        %v1446 = vpop.f32.mrb[0].mxu0
        %v1447 = vadd.f32 %v1156, %v1446
        %v1448 = vpop.f32.mrb[0].mxu0
        %1449 = vmatprep.mubr.f32.mxu0 %v1286
        %1450 = vmatmul.mubr.f32.gmra.mrb[0].mxu0 %v743
        %v1451 = vpop.f32.mrb[0].mxu0
        %v1452 = vadd.f32 %v1161, %v1451
        %v1453 = vpop.f32.mrb[0].mxu0
        %1454 = vmatprep.mubr.f32.mxu0 %v1288
        %1455 = vmatmul.mubr.f32.gmra.mrb[0].mxu0 %v744
        %v1456 = vpop.f32.mrb[0].mxu0
        %v1457 = vadd.f32 %v1166, %v1456
        %v1458 = vpop.f32.mrb[0].mxu0
        %1459 = vmatprep.mubr.f32.mxu0 %v1290
        %1460 = vmatmul.mubr.f32.gmra.mrb[0].mxu0 %v745
        %v1461 = vpop.f32.mrb[0].mxu0
        %v1462 = vadd.f32 %v1171, %v1461
        %v1463 = vpop.f32.mrb[0].mxu0
        %1464 = vmatprep.mubr.f32.mxu0 %v1292
        %1465 = vmatmul.mubr.f32.gmra.mrb[0].mxu0 %v746
        %v1466 = vpop.f32.mrb[0].mxu0
        %v1467 = vadd.f32 %v1176, %v1466
        %v1468 = vpop.f32.mrb[0].mxu0
        %1469 = vmatprep.mubr.f32.mxu0 %v1294
        %1470 = vmatmul.mubr.f32.gmra.mrb[0].mxu0 %v747
        %v1471 = vpop.f32.mrb[0].mxu0
        %v1472 = vadd.f32 %v1181, %v1471
        %v1473 = vpop.f32.mrb[0].mxu0
        %1474 = vmatprep.mubr.f32.mxu0 %v1296
        %1475 = vmatmul.mubr.f32.gmra.mrb[0].mxu0 %v748
        %v1476 = vpop.f32.mrb[0].mxu0
        %v1477 = vadd.f32 %v1186, %v1476
        %v1478 = vpop.f32.mrb[0].mxu0
        %1479 = vmatprep.mubr.f32.mxu0 %v1298
        %1480 = vmatmul.mubr.f32.gmra.mrb[0].mxu0 %v749
        %v1481 = vpop.f32.mrb[0].mxu0
        %v1482 = vadd.f32 %v1191, %v1481
        %v1483 = vpop.f32.mrb[0].mxu0
        %1484 = vmatprep.mubr.f32.mxu0 %v1300
        %1485 = vmatmul.mubr.f32.gmra.mrb[0].mxu0 %v750
        %v1486 = vpop.f32.mrb[0].mxu0
        %v1487 = vadd.f32 %v1196, %v1486
        %v1488 = vpop.f32.mrb[0].mxu0
        %1489 = vmatprep.mubr.f32.mxu0 %v1302
        %1490 = vmatmul.mubr.f32.gmra.mrb[0].mxu0 %v751
        %v1491 = vpop.f32.mrb[0].mxu0
        %v1492 = vadd.f32 %v1201, %v1491
        %v1493 = vpop.f32.mrb[0].mxu0
        %1494 = vmatprep.mubr.f32.mxu0 %v1304
        %1495 = vmatmul.mubr.f32.gmra.mrb[0].mxu0 %v752
        %v1496 = vpop.f32.mrb[0].mxu0
        %v1497 = vadd.f32 %v1206, %v1496
        %v1498 = vpop.f32.mrb[0].mxu0
        %1499 = vmatprep.mubr.f32.mxu0 %v1306
        %1500 = vmatmul.mubr.f32.gmra.mrb[0].mxu0 %v753
        %v1501 = vpop.f32.mrb[0].mxu0
        %v1502 = vadd.f32 %v1211, %v1501
        %v1503 = vpop.f32.mrb[0].mxu0
        %1504 = vmatprep.mubr.f32.mxu0 %v1308
        %1505 = vmatmul.mubr.f32.gmra.mrb[0].mxu0 %v754
        %v1506 = vpop.f32.mrb[0].mxu0
        %v1507 = vadd.f32 %v1216, %v1506
        %v1508 = vpop.f32.mrb[0].mxu0
        %1509 = vmatprep.mubr.f32.mxu0 %v1310
        %1510 = vmatmul.mubr.f32.gmra.mrb[0].mxu0 %v755
        %v1511 = vpop.f32.mrb[0].mxu0
        %v1512 = vadd.f32 %v1221, %v1511
        %v1513 = vpop.f32.mrb[0].mxu0
        %1514 = vmatprep.mubr.f32.mxu0 %v1312
        %1515 = vmatmul.mubr.f32.gmra.mrb[0].mxu0 %v756
        %v1516 = vpop.f32.mrb[0].mxu0
        %v1517 = vadd.f32 %v1226, %v1516
        %v1518 = vpop.f32.mrb[0].mxu0
        %1519 = vmatprep.mubr.f32.mxu0 %v1314
        %1520 = vmatmul.mubr.f32.gmra.mrb[0].mxu0 %v757
        %v1521 = vpop.f32.mrb[0].mxu0
        %v1522 = vadd.f32 %v1231, %v1521
        %v1523 = vpop.f32.mrb[0].mxu0
        %1524 = vmatprep.mubr.f32.mxu0 %v1316
        %1525 = vmatmul.mubr.f32.gmra.mrb[0].mxu0 %v758
        %v1526 = vpop.f32.mrb[0].mxu0
        %v1527 = vadd.f32 %v1236, %v1526
        %v1528 = vpop.f32.mrb[0].mxu0
        %1529 = vmatprep.mubr.f32.mxu0 %v1318
        %1530 = vmatmul.mubr.f32.gmra.mrb[0].mxu0 %v759
        %v1531 = vpop.f32.mrb[0].mxu0
        %v1532 = vadd.f32 %v1241, %v1531
        %v1533 = vpop.f32.mrb[0].mxu0
        %1534 = vmatprep.mubr.f32.mxu0 %v1320
        %1535 = vmatmul.mubr.f32.gmra.mrb[0].mxu0 %v760
        %v1536 = vpop.f32.mrb[0].mxu0
        %v1537 = vadd.f32 %v1246, %v1536
        %v1538 = vpop.f32.mrb[0].mxu0
        %1539 = vmatprep.mubr.f32.mxu0 %v1322
        %1540 = vmatmul.mubr.f32.gmra.mrb[0].mxu0 %v761
        %v1541 = vpop.f32.mrb[0].mxu0
        %v1542 = vadd.f32 %v1251, %v1541
        %v1543 = vpop.f32.mrb[0].mxu0
        %1544 = vmatprep.mubr.f32.mxu0 %v1325
        %1545 = vmatmul.mubr.f32.gmra.mrb[0].mxu0 %v762
        %v1546 = vpop.f32.mrb[0].mxu0
        %v1547 = vadd.f32 %v1256, %v1546
        %v1548 = vpop.f32.mrb[0].mxu0
        %1549 = vmatprep.mubr.f32.mxu0 %v1328
        %1550 = vmatmul.mubr.f32.gmra.mrb[0].mxu0 %v763
        %v1551 = vpop.f32.mrb[0].mxu0
        %v1552 = vadd.f32 %v1261, %v1551
        %v1553 = vpop.f32.mrb[0].mxu0
        %1554 = vdwg.mxu0
        %1587 = vrot.lane.b32.xlu0 %v528, 64
        %v1588 = vpop.permute.xlu0 %1587
        %1589 = vrot.lane.b32.xlu0 %v529, 64
        %v1590 = vpop.permute.xlu0 %1589
        %1591 = vrot.lane.b32.xlu0 %v530, 64
        %v1592 = vpop.permute.xlu0 %1591
        %1593 = vrot.lane.b32.xlu0 %v531, 64
        %v1594 = vpop.permute.xlu0 %1593
        %1595 = vrot.lane.b32.xlu0 %v532, 64
        %v1596 = vpop.permute.xlu0 %1595
        %1597 = vrot.lane.b32.xlu0 %v533, 64
        %v1598 = vpop.permute.xlu0 %1597
        %1599 = vrot.lane.b32.xlu0 %v534, 64
        %v1600 = vpop.permute.xlu0 %1599
        %1601 = vrot.lane.b32.xlu0 %v535, 64
        %v1602 = vpop.permute.xlu0 %1601
        %1603 = vrot.lane.b32.xlu0 %v536, 64
        %v1604 = vpop.permute.xlu0 %1603
        %1605 = vrot.lane.b32.xlu0 %v537, 64
        %v1606 = vpop.permute.xlu0 %1605
        %1607 = vrot.lane.b32.xlu0 %v538, 64
        %v1608 = vpop.permute.xlu0 %1607
        %1609 = vrot.lane.b32.xlu0 %v539, 64
        %v1610 = vpop.permute.xlu0 %1609
        %1611 = vrot.lane.b32.xlu0 %v540, 64
        %v1612 = vpop.permute.xlu0 %1611
        %1613 = vrot.lane.b32.xlu0 %v541, 64
        %v1614 = vpop.permute.xlu0 %1613
        %1615 = vrot.lane.b32.xlu0 %v542, 64
        %v1616 = vpop.permute.xlu0 %1615
        %1617 = vrot.lane.b32.xlu0 %v543, 64
        %v1618 = vpop.permute.xlu0 %1617
        %1619 = vrot.lane.b32.xlu0 %v544, 64
        %v1620 = vpop.permute.xlu0 %1619
        %1621 = vrot.lane.b32.xlu0 %v545, 64
        %v1622 = vpop.permute.xlu0 %1621
        %1623 = vrot.lane.b32.xlu0 %v546, 64
        %v1624 = vpop.permute.xlu0 %1623
        %1625 = vrot.lane.b32.xlu0 %v547, 64
        %v1626 = vpop.permute.xlu0 %1625
        %1627 = vrot.lane.b32.xlu0 %v548, 64
        %v1628 = vpop.permute.xlu0 %1627
        %1629 = vrot.lane.b32.xlu0 %v549, 64
        %v1630 = vpop.permute.xlu0 %1629
        %1631 = vrot.lane.b32.xlu0 %v550, 64
        %v1632 = vpop.permute.xlu0 %1631
        %1633 = vrot.lane.b32.xlu0 %v551, 64
        %v1634 = vpop.permute.xlu0 %1633
        %1635 = vrot.lane.b32.xlu0 %v552, 64
        %v1636 = vpop.permute.xlu0 %1635
        %1637 = vrot.lane.b32.xlu0 %v553, 64
        %v1638 = vpop.permute.xlu0 %1637
        %1639 = vrot.lane.b32.xlu0 %v554, 64
        %v1640 = vpop.permute.xlu0 %1639
        %1641 = vrot.lane.b32.xlu0 %v555, 64
        %v1642 = vpop.permute.xlu0 %1641
        %1643 = vrot.lane.b32.xlu0 %v556, 64
        %v1644 = vpop.permute.xlu0 %1643
        %1645 = vrot.lane.b32.xlu0 %v557, 64
        %v1646 = vpop.permute.xlu0 %1645
        %1647 = vrot.lane.b32.xlu0 %v558, 64
        %v1648 = vpop.permute.xlu0 %1647
        %1649 = vrot.lane.b32.xlu0 %v559, 64
        %v1650 = vpop.permute.xlu0 %1649
        %v1683 = vsel %vm309, %v526, %v1588
        %v1684 = vsel %vm309, %v527, %v1590
        %v1685 = vsel %vm309, %v528, %v1592
        %v1686 = vsel %vm309, %v529, %v1594
        %v1687 = vsel %vm309, %v530, %v1596
        %v1688 = vsel %vm309, %v531, %v1598
        %v1689 = vsel %vm309, %v532, %v1600
        %v1690 = vsel %vm309, %v533, %v1602
        %v1691 = vsel %vm309, %v534, %v1604
        %v1692 = vsel %vm309, %v535, %v1606
        %v1693 = vsel %vm309, %v536, %v1608
        %v1694 = vsel %vm309, %v537, %v1610
        %v1695 = vsel %vm309, %v538, %v1612
        %v1696 = vsel %vm309, %v539, %v1614
        %v1697 = vsel %vm309, %v540, %v1616
        %v1698 = vsel %vm309, %v541, %v1618
        %v1699 = vsel %vm309, %v542, %v1620
        %v1700 = vsel %vm309, %v543, %v1622
        %v1701 = vsel %vm309, %v544, %v1624
        %v1702 = vsel %vm309, %v545, %v1626
        %v1703 = vsel %vm309, %v546, %v1628
        %v1704 = vsel %vm309, %v547, %v1630
        %v1705 = vsel %vm309, %v548, %v1632
        %v1706 = vsel %vm309, %v549, %v1634
        %v1707 = vsel %vm309, %v550, %v1636
        %v1708 = vsel %vm309, %v551, %v1638
        %v1709 = vsel %vm309, %v552, %v1640
        %v1710 = vsel %vm309, %v553, %v1642
        %v1711 = vsel %vm309, %v554, %v1644
        %v1712 = vsel %vm309, %v555, %v1646
        %v1713 = vsel %vm309, %v556, %v1648
        %v1714 = vsel %vm309, %v557, %v1650
        %s1715 = scalar_lea.vmem %s1, 384
        %v1716 = vld [vmem:[%s1715] sm:$0xff]
        %v1717 = vld [vmem:[%s1715 + $0x8] sm:$0xff]
        %v1718 = vld [vmem:[%s1715 + $0x10] sm:$0xff]
        %v1719 = vld [vmem:[%s1715 + $0x18] sm:$0xff]
        %v1720 = vld [vmem:[%s1715 + $0x20] sm:$0xff]
        %v1721 = vld [vmem:[%s1715 + $0x28] sm:$0xff]
        %v1722 = vld [vmem:[%s1715 + $0x30] sm:$0xff]
        %v1723 = vld [vmem:[%s1715 + $0x38] sm:$0xff]
        %v1724 = vld [vmem:[%s1715 + $0x40] sm:$0xff]
        %v1725 = vld [vmem:[%s1715 + $0x48] sm:$0xff]
        %v1726 = vld [vmem:[%s1715 + $0x50] sm:$0xff]
        %v1727 = vld [vmem:[%s1715 + $0x58] sm:$0xff]
        %v1728 = vld [vmem:[%s1715 + $0x60] sm:$0xff]
        %v1729 = vld [vmem:[%s1715 + $0x68] sm:$0xff]
        %v1730 = vld [vmem:[%s1715 + $0x70] sm:$0xff]
        %v1731 = vld [vmem:[%s1715 + $0x78] sm:$0xff]
        %v1732 = vld [vmem:[%s1715 + $0x80] sm:$0xff]
        %v1733 = vld [vmem:[%s1715 + $0x88] sm:$0xff]
        %v1734 = vld [vmem:[%s1715 + $0x90] sm:$0xff]
        %v1735 = vld [vmem:[%s1715 + $0x98] sm:$0xff]
        %v1736 = vld [vmem:[%s1715 + $0xa0] sm:$0xff]
        %v1737 = vld [vmem:[%s1715 + $0xa8] sm:$0xff]
        %v1738 = vld [vmem:[%s1715 + $0xb0] sm:$0xff]
        %v1739 = vld [vmem:[%s1715 + $0xb8] sm:$0xff]
        %v1740 = vsel %vm309, %v530, 0
        %v1742 = vsel %vm309, %v531, 0
        %v1744 = vsel %vm309, %v532, 0
        %v1746 = vsel %vm309, %v533, 0
        %v1748 = vsel %vm309, %v534, 0
        %v1750 = vsel %vm309, %v535, 0
        %v1752 = vsel %vm309, %v536, 0
        %v1754 = vsel %vm309, %v537, 0
        %v1756 = vsel %vm309, %v538, 0
        %v1758 = vsel %vm309, %v539, 0
        %v1760 = vsel %vm309, %v540, 0
        %v1762 = vsel %vm309, %v541, 0
        %v1764 = vsel %vm309, %v542, 0
        %v1766 = vsel %vm309, %v543, 0
        %v1768 = vsel %vm309, %v544, 0
        %v1770 = vsel %vm309, %v545, 0
        %v1772 = vsel %vm309, %v546, 0
        %v1774 = vsel %vm309, %v547, 0
        %v1776 = vsel %vm309, %v548, 0
        %v1778 = vsel %vm309, %v549, 0
        %v1780 = vsel %vm309, %v550, 0
        %v1782 = vsel %vm309, %v551, 0
        %v1784 = vsel %vm309, %v552, 0
        %v1786 = vsel %vm309, %v553, 0
        %v1788 = vsel %vm309, %v554, 0
        %v1790 = vsel %vm309, %v555, 0
        %v1792 = vsel %vm309, %v556, 0
        %v1794 = vsel %vm309, %v557, 0
        %v1796 = vsel %vm309, %v558, 0
        %v1798 = vsel %vm309, %v559, 0
        %v1801 = vsel %vm309, %v560, 0
        %v1804 = vsel %vm309, %v561, 0
        %1806 = vmatprep.subr.mxu0 0.0
        %1807 = vmatpush1.msra.mxu0 %v1716
        %1808 = vmatprep.subr.mxu0 0.0
        %1809 = vmatpush1.msra.mxu0 %v1717
        %1810 = vmatprep.subr.mxu0 0.0
        %1811 = vmatpush1.msra.mxu0 %v1718
        %1812 = vmatprep.subr.mxu0 0.0
        %1813 = vmatpush1.msra.mxu0 %v1719
        %1814 = vmatprep.subr.mxu0 0.0
        %1815 = vmatpush1.msra.mxu0 %v1720
        %1816 = vmatprep.subr.mxu0 0.0
        %1817 = vmatpush1.msra.mxu0 %v1721
        %1818 = vmatprep.subr.mxu0 0.0
        %1819 = vmatpush1.msra.mxu0 %v1722
        %1820 = vmatprep.subr.mxu0 0.0
        %1821 = vmatpush1.msra.mxu0 %v1723
        %1822 = vmatprep.subr.mxu0 0.0
        %1823 = vmatpush1.msra.mxu0 %v1724
        %1824 = vmatprep.subr.mxu0 0.0
        %1825 = vmatpush1.msra.mxu0 %v1725
        %1826 = vmatprep.subr.mxu0 0.0
        %1827 = vmatpush1.msra.mxu0 %v1726
        %1828 = vmatprep.subr.mxu0 0.0
        %1829 = vmatpush1.msra.mxu0 %v1727
        %1830 = vmatprep.subr.mxu0 0.0
        %1831 = vmatpush1.msra.mxu0 %v1728
        %1832 = vmatprep.subr.mxu0 0.0
        %1833 = vmatpush1.msra.mxu0 %v1729
        %1834 = vmatprep.subr.mxu0 0.0
        %1835 = vmatpush1.msra.mxu0 %v1730
        %1836 = vmatprep.subr.mxu0 0.0
        %1837 = vmatpush1.msra.mxu0 %v1731
        %1838 = vmatprep.subr.mxu0 0.0
        %1839 = vmatpush1.msra.mxu0 %v1732
        %1840 = vmatprep.subr.mxu0 0.0
        %1841 = vmatpush1.msra.mxu0 %v1733
        %1842 = vmatprep.subr.mxu0 0.0
        %1843 = vmatpush1.msra.mxu0 %v1734
        %1844 = vmatprep.subr.mxu0 0.0
        %1845 = vmatpush1.msra.mxu0 %v1735
        %1846 = vmatprep.subr.mxu0 0.0
        %1847 = vmatpush1.msra.mxu0 %v1736
        %1848 = vmatprep.subr.mxu0 0.0
        %1849 = vmatpush1.msra.mxu0 %v1737
        %1850 = vmatprep.subr.mxu0 0.0
        %1851 = vmatpush1.msra.mxu0 %v1738
        %1852 = vmatprep.subr.mxu0 0.0
        %1853 = vmatpush1.msra.mxu0 %v1739
        %1854 = vmatprep.subr.mxu0 0.0
        %1855 = vmatpush1.msra.mxu0 0.0
        %1856 = vmatprep.subr.mxu0 0.0
        %1857 = vmatpush1.msra.mxu0 0.0
        %1858 = vmatprep.subr.mxu0 0.0
        %1859 = vmatpush1.msra.mxu0 0.0
        %1860 = vmatprep.subr.mxu0 0.0
        %1861 = vmatpush1.msra.mxu0 0.0
        %1862 = vmatprep.subr.mxu0 0.0
        %1863 = vmatpush1.msra.mxu0 0.0
        %1864 = vmatprep.subr.mxu0 0.0
        %1865 = vmatpush1.msra.mxu0 0.0
        %1866 = vmatprep.subr.mxu0 0.0
        %1867 = vmatpush1.msra.mxu0 0.0
        %1868 = vmatprep.subr.mxu0 0.0
        %1869 = vmatpush1.msra.mxu0 0.0
        %1870 = vmatprep.mubr.f32.mxu0 %v1740
        %1871 = vmatmul.mubr.f32.gmra.mrb[0].mxu0 %v1683
        %v1872 = vpop.f32.mrb[0].mxu0
        %v1873 = vadd.f32 0.0, %v1872
        %v1874 = vpop.f32.mrb[0].mxu0
        %1875 = vmatprep.mubr.f32.mxu0 %v1742
        %1876 = vmatmul.mubr.f32.gmra.mrb[0].mxu0 %v1684
        %v1877 = vpop.f32.mrb[0].mxu0
        %v1878 = vadd.f32 0.0, %v1877
        %v1879 = vpop.f32.mrb[0].mxu0
        %1880 = vmatprep.mubr.f32.mxu0 %v1744
        %1881 = vmatmul.mubr.f32.gmra.mrb[0].mxu0 %v1685
        %v1882 = vpop.f32.mrb[0].mxu0
        %v1883 = vadd.f32 0.0, %v1882
        %v1884 = vpop.f32.mrb[0].mxu0
        %1885 = vmatprep.mubr.f32.mxu0 %v1746
        %1886 = vmatmul.mubr.f32.gmra.mrb[0].mxu0 %v1686
        %v1887 = vpop.f32.mrb[0].mxu0
        %v1888 = vadd.f32 0.0, %v1887
        %v1889 = vpop.f32.mrb[0].mxu0
        %1890 = vmatprep.mubr.f32.mxu0 %v1748
        %1891 = vmatmul.mubr.f32.gmra.mrb[0].mxu0 %v1687
        %v1892 = vpop.f32.mrb[0].mxu0
        %v1893 = vadd.f32 0.0, %v1892
        %v1894 = vpop.f32.mrb[0].mxu0
        %1895 = vmatprep.mubr.f32.mxu0 %v1750
        %1896 = vmatmul.mubr.f32.gmra.mrb[0].mxu0 %v1688
        %v1897 = vpop.f32.mrb[0].mxu0
        %v1898 = vadd.f32 0.0, %v1897
        %v1899 = vpop.f32.mrb[0].mxu0
        %1900 = vmatprep.mubr.f32.mxu0 %v1752
        %1901 = vmatmul.mubr.f32.gmra.mrb[0].mxu0 %v1689
        %v1902 = vpop.f32.mrb[0].mxu0
        %v1903 = vadd.f32 0.0, %v1902
        %v1904 = vpop.f32.mrb[0].mxu0
        %1905 = vmatprep.mubr.f32.mxu0 %v1754
        %1906 = vmatmul.mubr.f32.gmra.mrb[0].mxu0 %v1690
        %v1907 = vpop.f32.mrb[0].mxu0
        %v1908 = vadd.f32 0.0, %v1907
        %v1909 = vpop.f32.mrb[0].mxu0
        %1910 = vmatprep.mubr.f32.mxu0 %v1756
        %1911 = vmatmul.mubr.f32.gmra.mrb[0].mxu0 %v1691
        %v1912 = vpop.f32.mrb[0].mxu0
        %v1913 = vadd.f32 0.0, %v1912
        %v1914 = vpop.f32.mrb[0].mxu0
        %1915 = vmatprep.mubr.f32.mxu0 %v1758
        %1916 = vmatmul.mubr.f32.gmra.mrb[0].mxu0 %v1692
        %v1917 = vpop.f32.mrb[0].mxu0
        %v1918 = vadd.f32 0.0, %v1917
        %v1919 = vpop.f32.mrb[0].mxu0
        %1920 = vmatprep.mubr.f32.mxu0 %v1760
        %1921 = vmatmul.mubr.f32.gmra.mrb[0].mxu0 %v1693
        %v1922 = vpop.f32.mrb[0].mxu0
        %v1923 = vadd.f32 0.0, %v1922
        %v1924 = vpop.f32.mrb[0].mxu0
        %1925 = vmatprep.mubr.f32.mxu0 %v1762
        %1926 = vmatmul.mubr.f32.gmra.mrb[0].mxu0 %v1694
        %v1927 = vpop.f32.mrb[0].mxu0
        %v1928 = vadd.f32 0.0, %v1927
        %v1929 = vpop.f32.mrb[0].mxu0
        %1930 = vmatprep.mubr.f32.mxu0 %v1764
        %1931 = vmatmul.mubr.f32.gmra.mrb[0].mxu0 %v1695
        %v1932 = vpop.f32.mrb[0].mxu0
        %v1933 = vadd.f32 0.0, %v1932
        %v1934 = vpop.f32.mrb[0].mxu0
        %1935 = vmatprep.mubr.f32.mxu0 %v1766
        %1936 = vmatmul.mubr.f32.gmra.mrb[0].mxu0 %v1696
        %v1937 = vpop.f32.mrb[0].mxu0
        %v1938 = vadd.f32 0.0, %v1937
        %v1939 = vpop.f32.mrb[0].mxu0
        %1940 = vmatprep.mubr.f32.mxu0 %v1768
        %1941 = vmatmul.mubr.f32.gmra.mrb[0].mxu0 %v1697
        %v1942 = vpop.f32.mrb[0].mxu0
        %v1943 = vadd.f32 0.0, %v1942
        %v1944 = vpop.f32.mrb[0].mxu0
        %1945 = vmatprep.mubr.f32.mxu0 %v1770
        %1946 = vmatmul.mubr.f32.gmra.mrb[0].mxu0 %v1698
        %v1947 = vpop.f32.mrb[0].mxu0
        %v1948 = vadd.f32 0.0, %v1947
        %v1949 = vpop.f32.mrb[0].mxu0
        %1950 = vmatprep.mubr.f32.mxu0 %v1772
        %1951 = vmatmul.mubr.f32.gmra.mrb[0].mxu0 %v1699
        %v1952 = vpop.f32.mrb[0].mxu0
        %v1953 = vadd.f32 0.0, %v1952
        %v1954 = vpop.f32.mrb[0].mxu0
        %1955 = vmatprep.mubr.f32.mxu0 %v1774
        %1956 = vmatmul.mubr.f32.gmra.mrb[0].mxu0 %v1700
        %v1957 = vpop.f32.mrb[0].mxu0
        %v1958 = vadd.f32 0.0, %v1957
        %v1959 = vpop.f32.mrb[0].mxu0
        %1960 = vmatprep.mubr.f32.mxu0 %v1776
        %1961 = vmatmul.mubr.f32.gmra.mrb[0].mxu0 %v1701
        %v1962 = vpop.f32.mrb[0].mxu0
        %v1963 = vadd.f32 0.0, %v1962
        %v1964 = vpop.f32.mrb[0].mxu0
        %1965 = vmatprep.mubr.f32.mxu0 %v1778
        %1966 = vmatmul.mubr.f32.gmra.mrb[0].mxu0 %v1702
        %v1967 = vpop.f32.mrb[0].mxu0
        %v1968 = vadd.f32 0.0, %v1967
        %v1969 = vpop.f32.mrb[0].mxu0
        %1970 = vmatprep.mubr.f32.mxu0 %v1780
        %1971 = vmatmul.mubr.f32.gmra.mrb[0].mxu0 %v1703
        %v1972 = vpop.f32.mrb[0].mxu0
        %v1973 = vadd.f32 0.0, %v1972
        %v1974 = vpop.f32.mrb[0].mxu0
        %1975 = vmatprep.mubr.f32.mxu0 %v1782
        %1976 = vmatmul.mubr.f32.gmra.mrb[0].mxu0 %v1704
        %v1977 = vpop.f32.mrb[0].mxu0
        %v1978 = vadd.f32 0.0, %v1977
        %v1979 = vpop.f32.mrb[0].mxu0
        %1980 = vmatprep.mubr.f32.mxu0 %v1784
        %1981 = vmatmul.mubr.f32.gmra.mrb[0].mxu0 %v1705
        %v1982 = vpop.f32.mrb[0].mxu0
        %v1983 = vadd.f32 0.0, %v1982
        %v1984 = vpop.f32.mrb[0].mxu0
        %1985 = vmatprep.mubr.f32.mxu0 %v1786
        %1986 = vmatmul.mubr.f32.gmra.mrb[0].mxu0 %v1706
        %v1987 = vpop.f32.mrb[0].mxu0
        %v1988 = vadd.f32 0.0, %v1987
        %v1989 = vpop.f32.mrb[0].mxu0
        %1990 = vmatprep.mubr.f32.mxu0 %v1788
        %1991 = vmatmul.mubr.f32.gmra.mrb[0].mxu0 %v1707
        %v1992 = vpop.f32.mrb[0].mxu0
        %v1993 = vadd.f32 0.0, %v1992
        %v1994 = vpop.f32.mrb[0].mxu0
        %1995 = vmatprep.mubr.f32.mxu0 %v1790
        %1996 = vmatmul.mubr.f32.gmra.mrb[0].mxu0 %v1708
        %v1997 = vpop.f32.mrb[0].mxu0
        %v1998 = vadd.f32 0.0, %v1997
        %v1999 = vpop.f32.mrb[0].mxu0
        %2000 = vmatprep.mubr.f32.mxu0 %v1792
        %2001 = vmatmul.mubr.f32.gmra.mrb[0].mxu0 %v1709
        %v2002 = vpop.f32.mrb[0].mxu0
        %v2003 = vadd.f32 0.0, %v2002
        %v2004 = vpop.f32.mrb[0].mxu0
        %2005 = vmatprep.mubr.f32.mxu0 %v1794
        %2006 = vmatmul.mubr.f32.gmra.mrb[0].mxu0 %v1710
        %v2007 = vpop.f32.mrb[0].mxu0
        %v2008 = vadd.f32 0.0, %v2007
        %v2009 = vpop.f32.mrb[0].mxu0
        %2010 = vmatprep.mubr.f32.mxu0 %v1796
        %2011 = vmatmul.mubr.f32.gmra.mrb[0].mxu0 %v1711
        %v2012 = vpop.f32.mrb[0].mxu0
        %v2013 = vadd.f32 0.0, %v2012
        %v2014 = vpop.f32.mrb[0].mxu0
        %2015 = vmatprep.mubr.f32.mxu0 %v1798
        %2016 = vmatmul.mubr.f32.gmra.mrb[0].mxu0 %v1712
        %v2017 = vpop.f32.mrb[0].mxu0
        %v2018 = vadd.f32 0.0, %v2017
        %v2019 = vpop.f32.mrb[0].mxu0
        %2020 = vmatprep.mubr.f32.mxu0 %v1801
        %2021 = vmatmul.mubr.f32.gmra.mrb[0].mxu0 %v1713
        %v2022 = vpop.f32.mrb[0].mxu0
        %v2023 = vadd.f32 0.0, %v2022
        %v2024 = vpop.f32.mrb[0].mxu0
        %2025 = vmatprep.mubr.f32.mxu0 %v1804
        %2026 = vmatmul.mubr.f32.gmra.mrb[0].mxu0 %v1714
        %v2027 = vpop.f32.mrb[0].mxu0
        %v2028 = vadd.f32 0.0, %v2027
        %v2029 = vpop.f32.mrb[0].mxu0
        %2030 = vdwg.mxu0
        %v2031 = vadd.f32 %v1397, %v1873
        %v2032 = vadd.f32 %v1402, %v1878
        %v2033 = vadd.f32 %v1407, %v1883
        %v2034 = vadd.f32 %v1412, %v1888
        %v2035 = vadd.f32 %v1417, %v1893
        %v2036 = vadd.f32 %v1422, %v1898
        %v2037 = vadd.f32 %v1427, %v1903
        %v2038 = vadd.f32 %v1432, %v1908
        %v2039 = vadd.f32 %v1437, %v1913
        %v2040 = vadd.f32 %v1442, %v1918
        %v2041 = vadd.f32 %v1447, %v1923
        %v2042 = vadd.f32 %v1452, %v1928
        %v2043 = vadd.f32 %v1457, %v1933
        %v2044 = vadd.f32 %v1462, %v1938
        %v2045 = vadd.f32 %v1467, %v1943
        %v2046 = vadd.f32 %v1472, %v1948
        %v2047 = vadd.f32 %v1477, %v1953
        %v2048 = vadd.f32 %v1482, %v1958
        %v2049 = vadd.f32 %v1487, %v1963
        %v2050 = vadd.f32 %v1492, %v1968
        %v2051 = vadd.f32 %v1497, %v1973
        %v2052 = vadd.f32 %v1502, %v1978
        %v2053 = vadd.f32 %v1507, %v1983
        %v2054 = vadd.f32 %v1512, %v1988
        %v2055 = vadd.f32 %v1517, %v1993
        %v2056 = vadd.f32 %v1522, %v1998
        %v2057 = vadd.f32 %v1527, %v2003
        %v2058 = vadd.f32 %v1532, %v2008
        %v2059 = vadd.f32 %v1537, %v2013
        %v2060 = vadd.f32 %v1542, %v2018
        %v2061 = vadd.f32 %v1547, %v2023
        %v2062 = vadd.f32 %v1552, %v2028
        %v2063 = vld [vmem:[%s2] sm:$0x1]
        %v2065 = vlaneseq
        %v2066 = vshrl.u32 %v2065, 7
        %v2067 = vsub.s32 0, %v2066
        %v2068 = vrot.slane %v2063, %v2067
        %v2070 = vadd.f32 %v2031, %v2068
        %v2071 = vadd.f32 %v2032, %v2068
        %v2072 = vadd.f32 %v2033, %v2068
        %v2073 = vadd.f32 %v2034, %v2068
        %v2074 = vadd.f32 %v2035, %v2068
        %v2075 = vadd.f32 %v2036, %v2068
        %v2076 = vadd.f32 %v2037, %v2068
        %v2077 = vadd.f32 %v2038, %v2068
        %v2078 = vadd.f32 %v2039, %v2068
        %v2079 = vadd.f32 %v2040, %v2068
        %v2080 = vadd.f32 %v2041, %v2068
        %v2081 = vadd.f32 %v2042, %v2068
        %v2082 = vadd.f32 %v2043, %v2068
        %v2083 = vadd.f32 %v2044, %v2068
        %v2084 = vadd.f32 %v2045, %v2068
        %v2085 = vadd.f32 %v2046, %v2068
        %v2086 = vadd.f32 %v2047, %v2068
        %v2087 = vadd.f32 %v2048, %v2068
        %v2088 = vadd.f32 %v2049, %v2068
        %v2089 = vadd.f32 %v2050, %v2068
        %v2090 = vadd.f32 %v2051, %v2068
        %v2091 = vadd.f32 %v2052, %v2068
        %v2092 = vadd.f32 %v2053, %v2068
        %v2093 = vadd.f32 %v2054, %v2068
        %v2094 = vadd.f32 %v2055, %v2068
        %v2095 = vadd.f32 %v2056, %v2068
        %v2096 = vadd.f32 %v2057, %v2068
        %v2097 = vadd.f32 %v2058, %v2068
        %v2098 = vadd.f32 %v2059, %v2068
        %v2099 = vadd.f32 %v2060, %v2068
        %v2100 = vadd.f32 %v2061, %v2068
        %v2101 = vadd.f32 %v2062, %v2068
        %v2102 = vmul.f32 %v2070, 0.05
        %v2103 = vmul.f32 %v2071, 0.05
        %v2104 = vmul.f32 %v2072, 0.05
        %v2105 = vmul.f32 %v2073, 0.05
        %v2106 = vmul.f32 %v2074, 0.05
        %v2107 = vmul.f32 %v2075, 0.05
        %v2108 = vmul.f32 %v2076, 0.05
        %v2109 = vmul.f32 %v2077, 0.05
        %v2110 = vmul.f32 %v2078, 0.05
        %v2111 = vmul.f32 %v2079, 0.05
        %v2112 = vmul.f32 %v2080, 0.05
        %v2113 = vmul.f32 %v2081, 0.05
        %v2114 = vmul.f32 %v2082, 0.05
        %v2115 = vmul.f32 %v2083, 0.05
        %v2116 = vmul.f32 %v2084, 0.05
        %v2117 = vmul.f32 %v2085, 0.05
        %v2118 = vmul.f32 %v2086, 0.05
        %v2119 = vmul.f32 %v2087, 0.05
        %v2120 = vmul.f32 %v2088, 0.05
        %v2121 = vmul.f32 %v2089, 0.05
        %v2122 = vmul.f32 %v2090, 0.05
        %v2123 = vmul.f32 %v2091, 0.05
        %v2124 = vmul.f32 %v2092, 0.05
        %v2125 = vmul.f32 %v2093, 0.05
        %v2126 = vmul.f32 %v2094, 0.05
        %v2127 = vmul.f32 %v2095, 0.05
        %v2128 = vmul.f32 %v2096, 0.05
        %v2129 = vmul.f32 %v2097, 0.05
        %v2130 = vmul.f32 %v2098, 0.05
        %v2131 = vmul.f32 %v2099, 0.05
        %v2132 = vmul.f32 %v2100, 0.05
        %v2133 = vmul.f32 %v2101, 0.05
        %v2134 = vmax.f32 %v2070, %v2102
        %v2135 = vmax.f32 %v2071, %v2103
        %v2136 = vmax.f32 %v2072, %v2104
        %v2137 = vmax.f32 %v2073, %v2105
        %v2138 = vmax.f32 %v2074, %v2106
        %v2139 = vmax.f32 %v2075, %v2107
        %v2140 = vmax.f32 %v2076, %v2108
        %v2141 = vmax.f32 %v2077, %v2109
        %v2142 = vmax.f32 %v2078, %v2110
        %v2143 = vmax.f32 %v2079, %v2111
        %v2144 = vmax.f32 %v2080, %v2112
        %v2145 = vmax.f32 %v2081, %v2113
        %v2146 = vmax.f32 %v2082, %v2114
        %v2147 = vmax.f32 %v2083, %v2115
        %v2148 = vmax.f32 %v2084, %v2116
        %v2149 = vmax.f32 %v2085, %v2117
        %v2150 = vmax.f32 %v2086, %v2118
        %v2151 = vmax.f32 %v2087, %v2119
        %v2152 = vmax.f32 %v2088, %v2120
        %v2153 = vmax.f32 %v2089, %v2121
        %v2154 = vmax.f32 %v2090, %v2122
        %v2155 = vmax.f32 %v2091, %v2123
        %v2156 = vmax.f32 %v2092, %v2124
        %v2157 = vmax.f32 %v2093, %v2125
        %v2158 = vmax.f32 %v2094, %v2126
        %v2159 = vmax.f32 %v2095, %v2127
        %v2160 = vmax.f32 %v2096, %v2128
        %v2161 = vmax.f32 %v2097, %v2129
        %v2162 = vmax.f32 %v2098, %v2130
        %v2163 = vmax.f32 %v2099, %v2131
        %v2164 = vmax.f32 %v2100, %v2132
        %v2165 = vmax.f32 %v2101, %v2133
        %2198 = vrot.lane.b32.xlu0 %v406, 64
        %v2199 = vpop.permute.xlu0 %2198
        %2200 = vrot.lane.b32.xlu0 %v407, 64
        %v2201 = vpop.permute.xlu0 %2200
        %2202 = vrot.lane.b32.xlu0 %v408, 64
        %v2203 = vpop.permute.xlu0 %2202
        %2204 = vrot.lane.b32.xlu0 %v409, 64
        %v2205 = vpop.permute.xlu0 %2204
        %2206 = vrot.lane.b32.xlu0 %v410, 64
        %v2207 = vpop.permute.xlu0 %2206
        %2208 = vrot.lane.b32.xlu0 %v411, 64
        %v2209 = vpop.permute.xlu0 %2208
        %2210 = vrot.lane.b32.xlu0 %v412, 64
        %v2211 = vpop.permute.xlu0 %2210
        %2212 = vrot.lane.b32.xlu0 %v413, 64
        %v2213 = vpop.permute.xlu0 %2212
        %2214 = vrot.lane.b32.xlu0 %v414, 64
        %v2215 = vpop.permute.xlu0 %2214
        %2216 = vrot.lane.b32.xlu0 %v415, 64
        %v2217 = vpop.permute.xlu0 %2216
        %2218 = vrot.lane.b32.xlu0 %v416, 64
        %v2219 = vpop.permute.xlu0 %2218
        %2220 = vrot.lane.b32.xlu0 %v417, 64
        %v2221 = vpop.permute.xlu0 %2220
        %2222 = vrot.lane.b32.xlu0 %v418, 64
        %v2223 = vpop.permute.xlu0 %2222
        %2224 = vrot.lane.b32.xlu0 %v419, 64
        %v2225 = vpop.permute.xlu0 %2224
        %2226 = vrot.lane.b32.xlu0 %v420, 64
        %v2227 = vpop.permute.xlu0 %2226
        %2228 = vrot.lane.b32.xlu0 %v421, 64
        %v2229 = vpop.permute.xlu0 %2228
        %2230 = vrot.lane.b32.xlu0 %v422, 64
        %v2231 = vpop.permute.xlu0 %2230
        %2232 = vrot.lane.b32.xlu0 %v423, 64
        %v2233 = vpop.permute.xlu0 %2232
        %2234 = vrot.lane.b32.xlu0 %v424, 64
        %v2235 = vpop.permute.xlu0 %2234
        %2236 = vrot.lane.b32.xlu0 %v425, 64
        %v2237 = vpop.permute.xlu0 %2236
        %2238 = vrot.lane.b32.xlu0 %v426, 64
        %v2239 = vpop.permute.xlu0 %2238
        %2240 = vrot.lane.b32.xlu0 %v427, 64
        %v2241 = vpop.permute.xlu0 %2240
        %2242 = vrot.lane.b32.xlu0 %v428, 64
        %v2243 = vpop.permute.xlu0 %2242
        %2244 = vrot.lane.b32.xlu0 %v429, 64
        %v2245 = vpop.permute.xlu0 %2244
        %2246 = vrot.lane.b32.xlu0 %v430, 64
        %v2247 = vpop.permute.xlu0 %2246
        %2248 = vrot.lane.b32.xlu0 %v431, 64
        %v2249 = vpop.permute.xlu0 %2248
        %2250 = vrot.lane.b32.xlu0 %v432, 64
        %v2251 = vpop.permute.xlu0 %2250
        %2252 = vrot.lane.b32.xlu0 %v433, 64
        %v2253 = vpop.permute.xlu0 %2252
        %2254 = vrot.lane.b32.xlu0 %v434, 64
        %v2255 = vpop.permute.xlu0 %2254
        %2256 = vrot.lane.b32.xlu0 %v435, 64
        %v2257 = vpop.permute.xlu0 %2256
        %2258 = vrot.lane.b32.xlu0 %v436, 64
        %v2259 = vpop.permute.xlu0 %2258
        %2260 = vrot.lane.b32.xlu0 %v437, 64
        %v2261 = vpop.permute.xlu0 %2260
        %2298 = vrot.lane.b32.xlu0 %v438, 64
        %v2299 = vpop.permute.xlu0 %2298
        %2300 = vrot.lane.b32.xlu0 %v439, 64
        %v2301 = vpop.permute.xlu0 %2300
        %2302 = vrot.lane.b32.xlu0 %v440, 64
        %v2303 = vpop.permute.xlu0 %2302
        %2304 = vrot.lane.b32.xlu0 %v441, 64
        %v2305 = vpop.permute.xlu0 %2304
        %v2310 = vsel %vm309, %v404, %v2199
        %v2311 = vsel %vm309, %v405, %v2201
        %v2312 = vsel %vm309, %v406, %v2203
        %v2313 = vsel %vm309, %v407, %v2205
        %v2314 = vsel %vm309, %v408, %v2207
        %v2315 = vsel %vm309, %v409, %v2209
        %v2316 = vsel %vm309, %v410, %v2211
        %v2317 = vsel %vm309, %v411, %v2213
        %v2318 = vsel %vm309, %v412, %v2215
        %v2319 = vsel %vm309, %v413, %v2217
        %v2320 = vsel %vm309, %v414, %v2219
        %v2321 = vsel %vm309, %v415, %v2221
        %v2322 = vsel %vm309, %v416, %v2223
        %v2323 = vsel %vm309, %v417, %v2225
        %v2324 = vsel %vm309, %v418, %v2227
        %v2325 = vsel %vm309, %v419, %v2229
        %v2326 = vsel %vm309, %v420, %v2231
        %v2327 = vsel %vm309, %v421, %v2233
        %v2328 = vsel %vm309, %v422, %v2235
        %v2329 = vsel %vm309, %v423, %v2237
        %v2330 = vsel %vm309, %v424, %v2239
        %v2331 = vsel %vm309, %v425, %v2241
        %v2332 = vsel %vm309, %v426, %v2243
        %v2333 = vsel %vm309, %v427, %v2245
        %v2334 = vsel %vm309, %v428, %v2247
        %v2335 = vsel %vm309, %v429, %v2249
        %v2336 = vsel %vm309, %v430, %v2251
        %v2337 = vsel %vm309, %v431, %v2253
        %v2338 = vsel %vm309, %v432, %v2255
        %v2339 = vsel %vm309, %v433, %v2257
        %v2340 = vsel %vm309, %v434, %v2259
        %v2341 = vsel %vm309, %v435, %v2261
        %v2342 = vsel %vm309, %v436, %v2299
        %v2343 = vsel %vm309, %v437, %v2301
        %v2344 = vsel %vm309, %v438, %v2303
        %v2345 = vsel %vm309, %v439, %v2305
        %v2346 = vld [vmem:[%s3] sm:$0xff]
        %v2347 = vld [vmem:[%s3 + $0x8] sm:$0xff]
        %v2348 = vld [vmem:[%s3 + $0x10] sm:$0xff]
        %v2349 = vld [vmem:[%s3 + $0x18] sm:$0xff]
        %v2350 = vld [vmem:[%s3 + $0x20] sm:$0xff]
        %v2351 = vld [vmem:[%s3 + $0x28] sm:$0xff]
        %v2352 = vld [vmem:[%s3 + $0x30] sm:$0xff]
        %v2353 = vld [vmem:[%s3 + $0x38] sm:$0xff]
        %v2354 = vld [vmem:[%s3 + $0x40] sm:$0xff]
        %v2355 = vld [vmem:[%s3 + $0x48] sm:$0xff]
        %v2356 = vld [vmem:[%s3 + $0x50] sm:$0xff]
        %v2357 = vld [vmem:[%s3 + $0x58] sm:$0xff]
        %v2358 = vld [vmem:[%s3 + $0x60] sm:$0xff]
        %v2359 = vld [vmem:[%s3 + $0x68] sm:$0xff]
        %v2360 = vld [vmem:[%s3 + $0x70] sm:$0xff]
        %v2361 = vld [vmem:[%s3 + $0x78] sm:$0xff]
        %v2362 = vld [vmem:[%s3 + $0x80] sm:$0xff]
        %v2363 = vld [vmem:[%s3 + $0x88] sm:$0xff]
        %v2364 = vld [vmem:[%s3 + $0x90] sm:$0xff]
        %v2365 = vld [vmem:[%s3 + $0x98] sm:$0xff]
        %v2366 = vld [vmem:[%s3 + $0xa0] sm:$0xff]
        %v2367 = vld [vmem:[%s3 + $0xa8] sm:$0xff]
        %v2368 = vld [vmem:[%s3 + $0xb0] sm:$0xff]
        %v2369 = vld [vmem:[%s3 + $0xb8] sm:$0xff]
        %v2370 = vld [vmem:[%s3 + $0xc0] sm:$0xff]
        %v2371 = vld [vmem:[%s3 + $0xc8] sm:$0xff]
        %v2372 = vld [vmem:[%s3 + $0xd0] sm:$0xff]
        %v2373 = vld [vmem:[%s3 + $0xd8] sm:$0xff]
        %v2374 = vld [vmem:[%s3 + $0xe0] sm:$0xff]
        %v2375 = vld [vmem:[%s3 + $0xe8] sm:$0xff]
        %v2376 = vld [vmem:[%s3 + $0xf0] sm:$0xff]
        %v2377 = vld [vmem:[%s3 + $0xf8] sm:$0xff]
        %v2378 = vld [vmem:[%s3 + $0x100] sm:$0xff]
        %v2379 = vld [vmem:[%s3 + $0x108] sm:$0xff]
        %v2380 = vld [vmem:[%s3 + $0x110] sm:$0xff]
        %v2381 = vld [vmem:[%s3 + $0x118] sm:$0xff]
        %v2382 = vld [vmem:[%s3 + $0x120] sm:$0xff]
        %v2383 = vld [vmem:[%s3 + $0x128] sm:$0xff]
        %v2384 = vld [vmem:[%s3 + $0x130] sm:$0xff]
        %v2385 = vld [vmem:[%s3 + $0x138] sm:$0xff]
        %2388 = vrot.lane.b32.xlu0 %v446, 64
        %v2389 = vpop.permute.xlu0 %2388
        %2390 = vrot.lane.b32.xlu0 %v447, 64
        %v2391 = vpop.permute.xlu0 %2390
        %2394 = vrot.lane.b32.xlu0 %v480, 64
        %v2395 = vpop.permute.xlu0 %2394
        %2396 = vrot.lane.b32.xlu0 %v481, 64
        %v2397 = vpop.permute.xlu0 %2396
        %v2400 = vsel %vm309, %v444, %v2389
        %v2401 = vsel %vm309, %v445, %v2391
        %v2402 = vsel %vm309, %v478, %v2395
        %v2403 = vsel %vm309, %v479, %v2397
        %s2404 = scalar_lea.vmem %s3, 320
        %v2405 = vld [vmem:[%s2404] sm:$0xff]
        %v2406 = vld [vmem:[%s2404 + $0x8] sm:$0xff]
        %v2407 = vld [vmem:[%s2404 + $0x10] sm:$0xff]
        %v2408 = vld [vmem:[%s2404 + $0x18] sm:$0xff]
        %v2409 = vld [vmem:[%s2404 + $0x20] sm:$0xff]
        %v2410 = vld [vmem:[%s2404 + $0x28] sm:$0xff]
        %v2411 = vld [vmem:[%s2404 + $0x30] sm:$0xff]
        %v2412 = vld [vmem:[%s2404 + $0x38] sm:$0xff]
        %v2413 = vld [vmem:[%s2404 + $0x40] sm:$0xff]
        %v2414 = vld [vmem:[%s2404 + $0x48] sm:$0xff]
        %v2415 = vld [vmem:[%s2404 + $0x50] sm:$0xff]
        %v2416 = vld [vmem:[%s2404 + $0x58] sm:$0xff]
        %v2417 = vld [vmem:[%s2404 + $0x60] sm:$0xff]
        %v2418 = vld [vmem:[%s2404 + $0x68] sm:$0xff]
        %v2419 = vld [vmem:[%s2404 + $0x70] sm:$0xff]
        %v2420 = vld [vmem:[%s2404 + $0x78] sm:$0xff]
        %v2421 = vld [vmem:[%s2404 + $0x80] sm:$0xff]
        %v2422 = vld [vmem:[%s2404 + $0x88] sm:$0xff]
        %v2423 = vld [vmem:[%s2404 + $0x90] sm:$0xff]
        %v2424 = vld [vmem:[%s2404 + $0x98] sm:$0xff]
        %v2425 = vld [vmem:[%s2404 + $0xa0] sm:$0xff]
        %v2426 = vld [vmem:[%s2404 + $0xa8] sm:$0xff]
        %v2427 = vld [vmem:[%s2404 + $0xb0] sm:$0xff]
        %v2428 = vld [vmem:[%s2404 + $0xb8] sm:$0xff]
        %v2429 = vld [vmem:[%s2404 + $0xc0] sm:$0xff]
        %v2430 = vld [vmem:[%s2404 + $0xc8] sm:$0xff]
        %v2431 = vld [vmem:[%s2404 + $0xd0] sm:$0xff]
        %v2432 = vld [vmem:[%s2404 + $0xd8] sm:$0xff]
        %v2433 = vld [vmem:[%s2404 + $0xe0] sm:$0xff]
        %v2434 = vld [vmem:[%s2404 + $0xe8] sm:$0xff]
        %v2435 = vld [vmem:[%s2404 + $0xf0] sm:$0xff]
        %v2436 = vld [vmem:[%s2404 + $0xf8] sm:$0xff]
        %v2437 = vld [vmem:[%s2404 + $0x100] sm:$0xff]
        %v2438 = vld [vmem:[%s2404 + $0x108] sm:$0xff]
        %v2439 = vld [vmem:[%s2404 + $0x110] sm:$0xff]
        %v2440 = vld [vmem:[%s2404 + $0x118] sm:$0xff]
        %v2441 = vld [vmem:[%s2404 + $0x120] sm:$0xff]
        %v2442 = vld [vmem:[%s2404 + $0x128] sm:$0xff]
        %v2443 = vld [vmem:[%s2404 + $0x130] sm:$0xff]
        %v2444 = vld [vmem:[%s2404 + $0x138] sm:$0xff]
        %v2446 = vsel %vm309, %v482, 0
        %v2449 = vsel %vm309, %v483, 0
        %2451 = vmatprep.subr.mxu0 0.0
        %2452 = vmatpush1.msra.mxu0 %v2405
        %2453 = vmatprep.subr.mxu0 0.0
        %2454 = vmatpush1.msra.mxu0 %v2406
        %2455 = vmatprep.subr.mxu0 0.0
        %2456 = vmatpush1.msra.mxu0 %v2407
        %2457 = vmatprep.subr.mxu0 0.0
        %2458 = vmatpush1.msra.mxu0 %v2408
        %2459 = vmatprep.subr.mxu0 0.0
        %2460 = vmatpush1.msra.mxu0 %v2409
        %2461 = vmatprep.subr.mxu0 0.0
        %2462 = vmatpush1.msra.mxu0 %v2410
        %2463 = vmatprep.subr.mxu0 0.0
        %2464 = vmatpush1.msra.mxu0 %v2411
        %2465 = vmatprep.subr.mxu0 0.0
        %2466 = vmatpush1.msra.mxu0 %v2412
        %2467 = vmatprep.subr.mxu0 0.0
        %2468 = vmatpush1.msra.mxu0 %v2413
        %2469 = vmatprep.subr.mxu0 0.0
        %2470 = vmatpush1.msra.mxu0 %v2414
        %2471 = vmatprep.subr.mxu0 0.0
        %2472 = vmatpush1.msra.mxu0 %v2415
        %2473 = vmatprep.subr.mxu0 0.0
        %2474 = vmatpush1.msra.mxu0 %v2416
        %2475 = vmatprep.subr.mxu0 0.0
        %2476 = vmatpush1.msra.mxu0 %v2417
        %2477 = vmatprep.subr.mxu0 0.0
        %2478 = vmatpush1.msra.mxu0 %v2418
        %2479 = vmatprep.subr.mxu0 0.0
        %2480 = vmatpush1.msra.mxu0 %v2419
        %2481 = vmatprep.subr.mxu0 0.0
        %2482 = vmatpush1.msra.mxu0 %v2420
        %2483 = vmatprep.subr.mxu0 0.0
        %2484 = vmatpush1.msra.mxu0 %v2421
        %2485 = vmatprep.subr.mxu0 0.0
        %2486 = vmatpush1.msra.mxu0 %v2422
        %2487 = vmatprep.subr.mxu0 0.0
        %2488 = vmatpush1.msra.mxu0 %v2423
        %2489 = vmatprep.subr.mxu0 0.0
        %2490 = vmatpush1.msra.mxu0 %v2424
        %2491 = vmatprep.subr.mxu0 0.0
        %2492 = vmatpush1.msra.mxu0 %v2425
        %2493 = vmatprep.subr.mxu0 0.0
        %2494 = vmatpush1.msra.mxu0 %v2426
        %2495 = vmatprep.subr.mxu0 0.0
        %2496 = vmatpush1.msra.mxu0 %v2427
        %2497 = vmatprep.subr.mxu0 0.0
        %2498 = vmatpush1.msra.mxu0 %v2428
        %2499 = vmatprep.subr.mxu0 0.0
        %2500 = vmatpush1.msra.mxu0 %v2429
        %2501 = vmatprep.subr.mxu0 0.0
        %2502 = vmatpush1.msra.mxu0 %v2430
        %2503 = vmatprep.subr.mxu0 0.0
        %2504 = vmatpush1.msra.mxu0 %v2431
        %2505 = vmatprep.subr.mxu0 0.0
        %2506 = vmatpush1.msra.mxu0 %v2432
        %2507 = vmatprep.subr.mxu0 0.0
        %2508 = vmatpush1.msra.mxu0 %v2433
        %2509 = vmatprep.subr.mxu0 0.0
        %2510 = vmatpush1.msra.mxu0 %v2434
        %2511 = vmatprep.subr.mxu0 0.0
        %2512 = vmatpush1.msra.mxu0 %v2435
        %2513 = vmatprep.subr.mxu0 0.0
        %2514 = vmatpush1.msra.mxu0 %v2436
        %2515 = vmatprep.mubr.f32.mxu0 %v734
        %2516 = vmatmul.mubr.f32.gmra.mrb[0].mxu0 %v2400
        %v2517 = vpop.f32.mrb[0].mxu0
        %v2518 = vadd.f32 0.0, %v2517
        %v2519 = vpop.f32.mrb[0].mxu0
        %2520 = vmatprep.mubr.f32.mxu0 %v735
        %2521 = vmatmul.mubr.f32.gmra.mrb[0].mxu0 %v2401
        %v2522 = vpop.f32.mrb[0].mxu0
        %v2523 = vadd.f32 0.0, %v2522
        %v2524 = vpop.f32.mrb[0].mxu0
        %2525 = vmatprep.mubr.f32.mxu0 %v736
        %2526 = vmatmul.mubr.f32.gmra.mrb[0].mxu0 %v732
        %v2527 = vpop.f32.mrb[0].mxu0
        %v2528 = vadd.f32 0.0, %v2527
        %v2529 = vpop.f32.mrb[0].mxu0
        %2530 = vmatprep.mubr.f32.mxu0 %v737
        %2531 = vmatmul.mubr.f32.gmra.mrb[0].mxu0 %v733
        %v2532 = vpop.f32.mrb[0].mxu0
        %v2533 = vadd.f32 0.0, %v2532
        %v2534 = vpop.f32.mrb[0].mxu0
        %2535 = vmatprep.mubr.f32.mxu0 %v738
        %2536 = vmatmul.mubr.f32.gmra.mrb[0].mxu0 %v734
        %v2537 = vpop.f32.mrb[0].mxu0
        %v2538 = vadd.f32 0.0, %v2537
        %v2539 = vpop.f32.mrb[0].mxu0
        %2540 = vmatprep.mubr.f32.mxu0 %v739
        %2541 = vmatmul.mubr.f32.gmra.mrb[0].mxu0 %v735
        %v2542 = vpop.f32.mrb[0].mxu0
        %v2543 = vadd.f32 0.0, %v2542
        %v2544 = vpop.f32.mrb[0].mxu0
        %2545 = vmatprep.mubr.f32.mxu0 %v740
        %2546 = vmatmul.mubr.f32.gmra.mrb[0].mxu0 %v736
        %v2547 = vpop.f32.mrb[0].mxu0
        %v2548 = vadd.f32 0.0, %v2547
        %v2549 = vpop.f32.mrb[0].mxu0
        %2550 = vmatprep.mubr.f32.mxu0 %v741
        %2551 = vmatmul.mubr.f32.gmra.mrb[0].mxu0 %v737
        %v2552 = vpop.f32.mrb[0].mxu0
        %v2553 = vadd.f32 0.0, %v2552
        %v2554 = vpop.f32.mrb[0].mxu0
        %2555 = vmatprep.mubr.f32.mxu0 %v742
        %2556 = vmatmul.mubr.f32.gmra.mrb[0].mxu0 %v738
        %v2557 = vpop.f32.mrb[0].mxu0
        %v2558 = vadd.f32 0.0, %v2557
        %v2559 = vpop.f32.mrb[0].mxu0
        %2560 = vmatprep.mubr.f32.mxu0 %v743
        %2561 = vmatmul.mubr.f32.gmra.mrb[0].mxu0 %v739
        %v2562 = vpop.f32.mrb[0].mxu0
        %v2563 = vadd.f32 0.0, %v2562
        %v2564 = vpop.f32.mrb[0].mxu0
        %2565 = vmatprep.mubr.f32.mxu0 %v744
        %2566 = vmatmul.mubr.f32.gmra.mrb[0].mxu0 %v740
        %v2567 = vpop.f32.mrb[0].mxu0
        %v2568 = vadd.f32 0.0, %v2567
        %v2569 = vpop.f32.mrb[0].mxu0
        %2570 = vmatprep.mubr.f32.mxu0 %v745
        %2571 = vmatmul.mubr.f32.gmra.mrb[0].mxu0 %v741
        %v2572 = vpop.f32.mrb[0].mxu0
        %v2573 = vadd.f32 0.0, %v2572
        %v2574 = vpop.f32.mrb[0].mxu0
        %2575 = vmatprep.mubr.f32.mxu0 %v746
        %2576 = vmatmul.mubr.f32.gmra.mrb[0].mxu0 %v742
        %v2577 = vpop.f32.mrb[0].mxu0
        %v2578 = vadd.f32 0.0, %v2577
        %v2579 = vpop.f32.mrb[0].mxu0
        %2580 = vmatprep.mubr.f32.mxu0 %v747
        %2581 = vmatmul.mubr.f32.gmra.mrb[0].mxu0 %v743
        %v2582 = vpop.f32.mrb[0].mxu0
        %v2583 = vadd.f32 0.0, %v2582
        %v2584 = vpop.f32.mrb[0].mxu0
        %2585 = vmatprep.mubr.f32.mxu0 %v748
        %2586 = vmatmul.mubr.f32.gmra.mrb[0].mxu0 %v744
        %v2587 = vpop.f32.mrb[0].mxu0
        %v2588 = vadd.f32 0.0, %v2587
        %v2589 = vpop.f32.mrb[0].mxu0
        %2590 = vmatprep.mubr.f32.mxu0 %v749
        %2591 = vmatmul.mubr.f32.gmra.mrb[0].mxu0 %v745
        %v2592 = vpop.f32.mrb[0].mxu0
        %v2593 = vadd.f32 0.0, %v2592
        %v2594 = vpop.f32.mrb[0].mxu0
        %2595 = vmatprep.mubr.f32.mxu0 %v750
        %2596 = vmatmul.mubr.f32.gmra.mrb[0].mxu0 %v746
        %v2597 = vpop.f32.mrb[0].mxu0
        %v2598 = vadd.f32 0.0, %v2597
        %v2599 = vpop.f32.mrb[0].mxu0
        %2600 = vmatprep.mubr.f32.mxu0 %v751
        %2601 = vmatmul.mubr.f32.gmra.mrb[0].mxu0 %v747
        %v2602 = vpop.f32.mrb[0].mxu0
        %v2603 = vadd.f32 0.0, %v2602
        %v2604 = vpop.f32.mrb[0].mxu0
        %2605 = vmatprep.mubr.f32.mxu0 %v752
        %2606 = vmatmul.mubr.f32.gmra.mrb[0].mxu0 %v748
        %v2607 = vpop.f32.mrb[0].mxu0
        %v2608 = vadd.f32 0.0, %v2607
        %v2609 = vpop.f32.mrb[0].mxu0
        %2610 = vmatprep.mubr.f32.mxu0 %v753
        %2611 = vmatmul.mubr.f32.gmra.mrb[0].mxu0 %v749
        %v2612 = vpop.f32.mrb[0].mxu0
        %v2613 = vadd.f32 0.0, %v2612
        %v2614 = vpop.f32.mrb[0].mxu0
        %2615 = vmatprep.mubr.f32.mxu0 %v754
        %2616 = vmatmul.mubr.f32.gmra.mrb[0].mxu0 %v750
        %v2617 = vpop.f32.mrb[0].mxu0
        %v2618 = vadd.f32 0.0, %v2617
        %v2619 = vpop.f32.mrb[0].mxu0
        %2620 = vmatprep.mubr.f32.mxu0 %v755
        %2621 = vmatmul.mubr.f32.gmra.mrb[0].mxu0 %v751
        %v2622 = vpop.f32.mrb[0].mxu0
        %v2623 = vadd.f32 0.0, %v2622
        %v2624 = vpop.f32.mrb[0].mxu0
        %2625 = vmatprep.mubr.f32.mxu0 %v756
        %2626 = vmatmul.mubr.f32.gmra.mrb[0].mxu0 %v752
        %v2627 = vpop.f32.mrb[0].mxu0
        %v2628 = vadd.f32 0.0, %v2627
        %v2629 = vpop.f32.mrb[0].mxu0
        %2630 = vmatprep.mubr.f32.mxu0 %v757
        %2631 = vmatmul.mubr.f32.gmra.mrb[0].mxu0 %v753
        %v2632 = vpop.f32.mrb[0].mxu0
        %v2633 = vadd.f32 0.0, %v2632
        %v2634 = vpop.f32.mrb[0].mxu0
        %2635 = vmatprep.mubr.f32.mxu0 %v758
        %2636 = vmatmul.mubr.f32.gmra.mrb[0].mxu0 %v754
        %v2637 = vpop.f32.mrb[0].mxu0
        %v2638 = vadd.f32 0.0, %v2637
        %v2639 = vpop.f32.mrb[0].mxu0
        %2640 = vmatprep.mubr.f32.mxu0 %v759
        %2641 = vmatmul.mubr.f32.gmra.mrb[0].mxu0 %v755
        %v2642 = vpop.f32.mrb[0].mxu0
        %v2643 = vadd.f32 0.0, %v2642
        %v2644 = vpop.f32.mrb[0].mxu0
        %2645 = vmatprep.mubr.f32.mxu0 %v760
        %2646 = vmatmul.mubr.f32.gmra.mrb[0].mxu0 %v756
        %v2647 = vpop.f32.mrb[0].mxu0
        %v2648 = vadd.f32 0.0, %v2647
        %v2649 = vpop.f32.mrb[0].mxu0
        %2650 = vmatprep.mubr.f32.mxu0 %v761
        %2651 = vmatmul.mubr.f32.gmra.mrb[0].mxu0 %v757
        %v2652 = vpop.f32.mrb[0].mxu0
        %v2653 = vadd.f32 0.0, %v2652
        %v2654 = vpop.f32.mrb[0].mxu0
        %2655 = vmatprep.mubr.f32.mxu0 %v762
        %2656 = vmatmul.mubr.f32.gmra.mrb[0].mxu0 %v758
        %v2657 = vpop.f32.mrb[0].mxu0
        %v2658 = vadd.f32 0.0, %v2657
        %v2659 = vpop.f32.mrb[0].mxu0
        %2660 = vmatprep.mubr.f32.mxu0 %v763
        %2661 = vmatmul.mubr.f32.gmra.mrb[0].mxu0 %v759
        %v2662 = vpop.f32.mrb[0].mxu0
        %v2663 = vadd.f32 0.0, %v2662
        %v2664 = vpop.f32.mrb[0].mxu0
        %2665 = vmatprep.mubr.f32.mxu0 %v2402
        %2666 = vmatmul.mubr.f32.gmra.mrb[0].mxu0 %v760
        %v2667 = vpop.f32.mrb[0].mxu0
        %v2668 = vadd.f32 0.0, %v2667
        %v2669 = vpop.f32.mrb[0].mxu0
        %2670 = vmatprep.mubr.f32.mxu0 %v2403
        %2671 = vmatmul.mubr.f32.gmra.mrb[0].mxu0 %v761
        %v2672 = vpop.f32.mrb[0].mxu0
        %v2673 = vadd.f32 0.0, %v2672
        %v2674 = vpop.f32.mrb[0].mxu0
        %2675 = vdwg.mxu0
        %2676 = vmatprep.subr.mxu0 0.0
        %2677 = vmatpush1.msra.mxu0 %v2437
        %2678 = vmatprep.subr.mxu0 0.0
        %2679 = vmatpush1.msra.mxu0 %v2438
        %2680 = vmatprep.subr.mxu0 0.0
        %2681 = vmatpush1.msra.mxu0 %v2439
        %2682 = vmatprep.subr.mxu0 0.0
        %2683 = vmatpush1.msra.mxu0 %v2440
        %2684 = vmatprep.subr.mxu0 0.0
        %2685 = vmatpush1.msra.mxu0 %v2441
        %2686 = vmatprep.subr.mxu0 0.0
        %2687 = vmatpush1.msra.mxu0 %v2442
        %2688 = vmatprep.subr.mxu0 0.0
        %2689 = vmatpush1.msra.mxu0 %v2443
        %2690 = vmatprep.subr.mxu0 0.0
        %2691 = vmatpush1.msra.mxu0 %v2444
        %2692 = vmatprep.subr.mxu0 0.0
        %2693 = vmatpush1.msra.mxu0 0.0
        %2694 = vmatprep.subr.mxu0 0.0
        %2695 = vmatpush1.msra.mxu0 0.0
        %2696 = vmatprep.subr.mxu0 0.0
        %2697 = vmatpush1.msra.mxu0 0.0
        %2698 = vmatprep.subr.mxu0 0.0
        %2699 = vmatpush1.msra.mxu0 0.0
        %2700 = vmatprep.subr.mxu0 0.0
        %2701 = vmatpush1.msra.mxu0 0.0
        %2702 = vmatprep.subr.mxu0 0.0
        %2703 = vmatpush1.msra.mxu0 0.0
        %2704 = vmatprep.subr.mxu0 0.0
        %2705 = vmatpush1.msra.mxu0 0.0
        %2706 = vmatprep.subr.mxu0 0.0
        %2707 = vmatpush1.msra.mxu0 0.0
        %2708 = vmatprep.subr.mxu0 0.0
        %2709 = vmatpush1.msra.mxu0 0.0
        %2710 = vmatprep.subr.mxu0 0.0
        %2711 = vmatpush1.msra.mxu0 0.0
        %2712 = vmatprep.subr.mxu0 0.0
        %2713 = vmatpush1.msra.mxu0 0.0
        %2714 = vmatprep.subr.mxu0 0.0
        %2715 = vmatpush1.msra.mxu0 0.0
        %2716 = vmatprep.subr.mxu0 0.0
        %2717 = vmatpush1.msra.mxu0 0.0
        %2718 = vmatprep.subr.mxu0 0.0
        %2719 = vmatpush1.msra.mxu0 0.0
        %2720 = vmatprep.subr.mxu0 0.0
        %2721 = vmatpush1.msra.mxu0 0.0
        %2722 = vmatprep.subr.mxu0 0.0
        %2723 = vmatpush1.msra.mxu0 0.0
        %2724 = vmatprep.subr.mxu0 0.0
        %2725 = vmatpush1.msra.mxu0 0.0
        %2726 = vmatprep.subr.mxu0 0.0
        %2727 = vmatpush1.msra.mxu0 0.0
        %2728 = vmatprep.subr.mxu0 0.0
        %2729 = vmatpush1.msra.mxu0 0.0
        %2730 = vmatprep.subr.mxu0 0.0
        %2731 = vmatpush1.msra.mxu0 0.0
        %2732 = vmatprep.subr.mxu0 0.0
        %2733 = vmatpush1.msra.mxu0 0.0
        %2734 = vmatprep.subr.mxu0 0.0
        %2735 = vmatpush1.msra.mxu0 0.0
        %2736 = vmatprep.subr.mxu0 0.0
        %2737 = vmatpush1.msra.mxu0 0.0
        %2738 = vmatprep.subr.mxu0 0.0
        %2739 = vmatpush1.msra.mxu0 0.0
        %2740 = vmatprep.mubr.f32.mxu0 0.0
        %2741 = vmatmul.mubr.f32.gmra.mrb[0].mxu0 %v1268
        %v2742 = vpop.f32.mrb[0].mxu0
        %v2743 = vadd.f32 %v2518, %v2742
        %v2744 = vpop.f32.mrb[0].mxu0
        %2745 = vmatprep.mubr.f32.mxu0 0.0
        %2746 = vmatmul.mubr.f32.gmra.mrb[0].mxu0 %v1270
        %v2747 = vpop.f32.mrb[0].mxu0
        %v2748 = vadd.f32 %v2523, %v2747
        %v2749 = vpop.f32.mrb[0].mxu0
        %2750 = vmatprep.mubr.f32.mxu0 0.0
        %2751 = vmatmul.mubr.f32.gmra.mrb[0].mxu0 %v1272
        %v2752 = vpop.f32.mrb[0].mxu0
        %v2753 = vadd.f32 %v2528, %v2752
        %v2754 = vpop.f32.mrb[0].mxu0
        %2755 = vmatprep.mubr.f32.mxu0 0.0
        %2756 = vmatmul.mubr.f32.gmra.mrb[0].mxu0 %v1274
        %v2757 = vpop.f32.mrb[0].mxu0
        %v2758 = vadd.f32 %v2533, %v2757
        %v2759 = vpop.f32.mrb[0].mxu0
        %2760 = vmatprep.mubr.f32.mxu0 0.0
        %2761 = vmatmul.mubr.f32.gmra.mrb[0].mxu0 %v1276
        %v2762 = vpop.f32.mrb[0].mxu0
        %v2763 = vadd.f32 %v2538, %v2762
        %v2764 = vpop.f32.mrb[0].mxu0
        %2765 = vmatprep.mubr.f32.mxu0 0.0
        %2766 = vmatmul.mubr.f32.gmra.mrb[0].mxu0 %v1278
        %v2767 = vpop.f32.mrb[0].mxu0
        %v2768 = vadd.f32 %v2543, %v2767
        %v2769 = vpop.f32.mrb[0].mxu0
        %2770 = vmatprep.mubr.f32.mxu0 0.0
        %2771 = vmatmul.mubr.f32.gmra.mrb[0].mxu0 %v1280
        %v2772 = vpop.f32.mrb[0].mxu0
        %v2773 = vadd.f32 %v2548, %v2772
        %v2774 = vpop.f32.mrb[0].mxu0
        %2775 = vmatprep.mubr.f32.mxu0 0.0
        %2776 = vmatmul.mubr.f32.gmra.mrb[0].mxu0 %v1282
        %v2777 = vpop.f32.mrb[0].mxu0
        %v2778 = vadd.f32 %v2553, %v2777
        %v2779 = vpop.f32.mrb[0].mxu0
        %2780 = vmatprep.mubr.f32.mxu0 0.0
        %2781 = vmatmul.mubr.f32.gmra.mrb[0].mxu0 %v1284
        %v2782 = vpop.f32.mrb[0].mxu0
        %v2783 = vadd.f32 %v2558, %v2782
        %v2784 = vpop.f32.mrb[0].mxu0
        %2785 = vmatprep.mubr.f32.mxu0 0.0
        %2786 = vmatmul.mubr.f32.gmra.mrb[0].mxu0 %v1286
        %v2787 = vpop.f32.mrb[0].mxu0
        %v2788 = vadd.f32 %v2563, %v2787
        %v2789 = vpop.f32.mrb[0].mxu0
        %2790 = vmatprep.mubr.f32.mxu0 0.0
        %2791 = vmatmul.mubr.f32.gmra.mrb[0].mxu0 %v1288
        %v2792 = vpop.f32.mrb[0].mxu0
        %v2793 = vadd.f32 %v2568, %v2792
        %v2794 = vpop.f32.mrb[0].mxu0
        %2795 = vmatprep.mubr.f32.mxu0 0.0
        %2796 = vmatmul.mubr.f32.gmra.mrb[0].mxu0 %v1290
        %v2797 = vpop.f32.mrb[0].mxu0
        %v2798 = vadd.f32 %v2573, %v2797
        %v2799 = vpop.f32.mrb[0].mxu0
        %2800 = vmatprep.mubr.f32.mxu0 0.0
        %2801 = vmatmul.mubr.f32.gmra.mrb[0].mxu0 %v1292
        %v2802 = vpop.f32.mrb[0].mxu0
        %v2803 = vadd.f32 %v2578, %v2802
        %v2804 = vpop.f32.mrb[0].mxu0
        %2805 = vmatprep.mubr.f32.mxu0 0.0
        %2806 = vmatmul.mubr.f32.gmra.mrb[0].mxu0 %v1294
        %v2807 = vpop.f32.mrb[0].mxu0
        %v2808 = vadd.f32 %v2583, %v2807
        %v2809 = vpop.f32.mrb[0].mxu0
        %2810 = vmatprep.mubr.f32.mxu0 0.0
        %2811 = vmatmul.mubr.f32.gmra.mrb[0].mxu0 %v1296
        %v2812 = vpop.f32.mrb[0].mxu0
        %v2813 = vadd.f32 %v2588, %v2812
        %v2814 = vpop.f32.mrb[0].mxu0
        %2815 = vmatprep.mubr.f32.mxu0 0.0
        %2816 = vmatmul.mubr.f32.gmra.mrb[0].mxu0 %v1298
        %v2817 = vpop.f32.mrb[0].mxu0
        %v2818 = vadd.f32 %v2593, %v2817
        %v2819 = vpop.f32.mrb[0].mxu0
        %2820 = vmatprep.mubr.f32.mxu0 0.0
        %2821 = vmatmul.mubr.f32.gmra.mrb[0].mxu0 %v1300
        %v2822 = vpop.f32.mrb[0].mxu0
        %v2823 = vadd.f32 %v2598, %v2822
        %v2824 = vpop.f32.mrb[0].mxu0
        %2825 = vmatprep.mubr.f32.mxu0 0.0
        %2826 = vmatmul.mubr.f32.gmra.mrb[0].mxu0 %v1302
        %v2827 = vpop.f32.mrb[0].mxu0
        %v2828 = vadd.f32 %v2603, %v2827
        %v2829 = vpop.f32.mrb[0].mxu0
        %2830 = vmatprep.mubr.f32.mxu0 0.0
        %2831 = vmatmul.mubr.f32.gmra.mrb[0].mxu0 %v1304
        %v2832 = vpop.f32.mrb[0].mxu0
        %v2833 = vadd.f32 %v2608, %v2832
        %v2834 = vpop.f32.mrb[0].mxu0
        %2835 = vmatprep.mubr.f32.mxu0 0.0
        %2836 = vmatmul.mubr.f32.gmra.mrb[0].mxu0 %v1306
        %v2837 = vpop.f32.mrb[0].mxu0
        %v2838 = vadd.f32 %v2613, %v2837
        %v2839 = vpop.f32.mrb[0].mxu0
        %2840 = vmatprep.mubr.f32.mxu0 0.0
        %2841 = vmatmul.mubr.f32.gmra.mrb[0].mxu0 %v1308
        %v2842 = vpop.f32.mrb[0].mxu0
        %v2843 = vadd.f32 %v2618, %v2842
        %v2844 = vpop.f32.mrb[0].mxu0
        %2845 = vmatprep.mubr.f32.mxu0 0.0
        %2846 = vmatmul.mubr.f32.gmra.mrb[0].mxu0 %v1310
        %v2847 = vpop.f32.mrb[0].mxu0
        %v2848 = vadd.f32 %v2623, %v2847
        %v2849 = vpop.f32.mrb[0].mxu0
        %2850 = vmatprep.mubr.f32.mxu0 0.0
        %2851 = vmatmul.mubr.f32.gmra.mrb[0].mxu0 %v1312
        %v2852 = vpop.f32.mrb[0].mxu0
        %v2853 = vadd.f32 %v2628, %v2852
        %v2854 = vpop.f32.mrb[0].mxu0
        %2855 = vmatprep.mubr.f32.mxu0 0.0
        %2856 = vmatmul.mubr.f32.gmra.mrb[0].mxu0 %v1314
        %v2857 = vpop.f32.mrb[0].mxu0
        %v2858 = vadd.f32 %v2633, %v2857
        %v2859 = vpop.f32.mrb[0].mxu0
        %2860 = vmatprep.mubr.f32.mxu0 0.0
        %2861 = vmatmul.mubr.f32.gmra.mrb[0].mxu0 %v1316
        %v2862 = vpop.f32.mrb[0].mxu0
        %v2863 = vadd.f32 %v2638, %v2862
        %v2864 = vpop.f32.mrb[0].mxu0
        %2865 = vmatprep.mubr.f32.mxu0 0.0
        %2866 = vmatmul.mubr.f32.gmra.mrb[0].mxu0 %v1318
        %v2867 = vpop.f32.mrb[0].mxu0
        %v2868 = vadd.f32 %v2643, %v2867
        %v2869 = vpop.f32.mrb[0].mxu0
        %2870 = vmatprep.mubr.f32.mxu0 0.0
        %2871 = vmatmul.mubr.f32.gmra.mrb[0].mxu0 %v1320
        %v2872 = vpop.f32.mrb[0].mxu0
        %v2873 = vadd.f32 %v2648, %v2872
        %v2874 = vpop.f32.mrb[0].mxu0
        %2875 = vmatprep.mubr.f32.mxu0 0.0
        %2876 = vmatmul.mubr.f32.gmra.mrb[0].mxu0 %v1322
        %v2877 = vpop.f32.mrb[0].mxu0
        %v2878 = vadd.f32 %v2653, %v2877
        %v2879 = vpop.f32.mrb[0].mxu0
        %2880 = vmatprep.mubr.f32.mxu0 0.0
        %2881 = vmatmul.mubr.f32.gmra.mrb[0].mxu0 %v1325
        %v2882 = vpop.f32.mrb[0].mxu0
        %v2883 = vadd.f32 %v2658, %v2882
        %v2884 = vpop.f32.mrb[0].mxu0
        %2885 = vmatprep.mubr.f32.mxu0 0.0
        %2886 = vmatmul.mubr.f32.gmra.mrb[0].mxu0 %v1328
        %v2887 = vpop.f32.mrb[0].mxu0
        %v2888 = vadd.f32 %v2663, %v2887
        %v2889 = vpop.f32.mrb[0].mxu0
        %2890 = vmatprep.mubr.f32.mxu0 0.0
        %2891 = vmatmul.mubr.f32.gmra.mrb[0].mxu0 %v2446
        %v2892 = vpop.f32.mrb[0].mxu0
        %v2893 = vadd.f32 %v2668, %v2892
        %v2894 = vpop.f32.mrb[0].mxu0
        %2895 = vmatprep.mubr.f32.mxu0 0.0
        %2896 = vmatmul.mubr.f32.gmra.mrb[0].mxu0 %v2449
        %v2897 = vpop.f32.mrb[0].mxu0
        %v2898 = vadd.f32 %v2673, %v2897
        %v2899 = vpop.f32.mrb[0].mxu0
        %2900 = vdwg.mxu0
        %v2901 = vsel %vm309, %v412, 0
        %v2903 = vsel %vm309, %v413, 0
        %v2905 = vsel %vm309, %v414, 0
        %v2907 = vsel %vm309, %v415, 0
        %v2909 = vsel %vm309, %v416, 0
        %v2911 = vsel %vm309, %v417, 0
        %v2913 = vsel %vm309, %v418, 0
        %v2915 = vsel %vm309, %v419, 0
        %v2917 = vsel %vm309, %v420, 0
        %v2919 = vsel %vm309, %v421, 0
        %v2921 = vsel %vm309, %v422, 0
        %v2923 = vsel %vm309, %v423, 0
        %v2925 = vsel %vm309, %v424, 0
        %v2927 = vsel %vm309, %v425, 0
        %v2929 = vsel %vm309, %v426, 0
        %v2931 = vsel %vm309, %v427, 0
        %v2933 = vsel %vm309, %v428, 0
        %v2935 = vsel %vm309, %v429, 0
        %v2937 = vsel %vm309, %v430, 0
        %v2939 = vsel %vm309, %v431, 0
        %v2941 = vsel %vm309, %v432, 0
        %v2943 = vsel %vm309, %v433, 0
        %v2945 = vsel %vm309, %v434, 0
        %v2947 = vsel %vm309, %v435, 0
        %v2949 = vsel %vm309, %v436, 0
        %v2951 = vsel %vm309, %v437, 0
        %v2953 = vsel %vm309, %v438, 0
        %v2955 = vsel %vm309, %v439, 0
        %v2957 = vsel %vm309, %v440, 0
        %v2959 = vsel %vm309, %v441, 0
        %v2962 = vsel %vm309, %v442, 0
        %v2965 = vsel %vm309, %v443, 0
        %2967 = vmatprep.subr.mxu0 0.0
        %2968 = vmatpush1.msra.mxu0 %v2346
        %2969 = vmatprep.subr.mxu0 0.0
        %2970 = vmatpush1.msra.mxu0 %v2347
        %2971 = vmatprep.subr.mxu0 0.0
        %2972 = vmatpush1.msra.mxu0 %v2348
        %2973 = vmatprep.subr.mxu0 0.0
        %2974 = vmatpush1.msra.mxu0 %v2349
        %2975 = vmatprep.subr.mxu0 0.0
        %2976 = vmatpush1.msra.mxu0 %v2350
        %2977 = vmatprep.subr.mxu0 0.0
        %2978 = vmatpush1.msra.mxu0 %v2351
        %2979 = vmatprep.subr.mxu0 0.0
        %2980 = vmatpush1.msra.mxu0 %v2352
        %2981 = vmatprep.subr.mxu0 0.0
        %2982 = vmatpush1.msra.mxu0 %v2353
        %2983 = vmatprep.subr.mxu0 0.0
        %2984 = vmatpush1.msra.mxu0 %v2354
        %2985 = vmatprep.subr.mxu0 0.0
        %2986 = vmatpush1.msra.mxu0 %v2355
        %2987 = vmatprep.subr.mxu0 0.0
        %2988 = vmatpush1.msra.mxu0 %v2356
        %2989 = vmatprep.subr.mxu0 0.0
        %2990 = vmatpush1.msra.mxu0 %v2357
        %2991 = vmatprep.subr.mxu0 0.0
        %2992 = vmatpush1.msra.mxu0 %v2358
        %2993 = vmatprep.subr.mxu0 0.0
        %2994 = vmatpush1.msra.mxu0 %v2359
        %2995 = vmatprep.subr.mxu0 0.0
        %2996 = vmatpush1.msra.mxu0 %v2360
        %2997 = vmatprep.subr.mxu0 0.0
        %2998 = vmatpush1.msra.mxu0 %v2361
        %2999 = vmatprep.subr.mxu0 0.0
        %3000 = vmatpush1.msra.mxu0 %v2362
        %3001 = vmatprep.subr.mxu0 0.0
        %3002 = vmatpush1.msra.mxu0 %v2363
        %3003 = vmatprep.subr.mxu0 0.0
        %3004 = vmatpush1.msra.mxu0 %v2364
        %3005 = vmatprep.subr.mxu0 0.0
        %3006 = vmatpush1.msra.mxu0 %v2365
        %3007 = vmatprep.subr.mxu0 0.0
        %3008 = vmatpush1.msra.mxu0 %v2366
        %3009 = vmatprep.subr.mxu0 0.0
        %3010 = vmatpush1.msra.mxu0 %v2367
        %3011 = vmatprep.subr.mxu0 0.0
        %3012 = vmatpush1.msra.mxu0 %v2368
        %3013 = vmatprep.subr.mxu0 0.0
        %3014 = vmatpush1.msra.mxu0 %v2369
        %3015 = vmatprep.subr.mxu0 0.0
        %3016 = vmatpush1.msra.mxu0 %v2370
        %3017 = vmatprep.subr.mxu0 0.0
        %3018 = vmatpush1.msra.mxu0 %v2371
        %3019 = vmatprep.subr.mxu0 0.0
        %3020 = vmatpush1.msra.mxu0 %v2372
        %3021 = vmatprep.subr.mxu0 0.0
        %3022 = vmatpush1.msra.mxu0 %v2373
        %3023 = vmatprep.subr.mxu0 0.0
        %3024 = vmatpush1.msra.mxu0 %v2374
        %3025 = vmatprep.subr.mxu0 0.0
        %3026 = vmatpush1.msra.mxu0 %v2375
        %3027 = vmatprep.subr.mxu0 0.0
        %3028 = vmatpush1.msra.mxu0 %v2376
        %3029 = vmatprep.subr.mxu0 0.0
        %3030 = vmatpush1.msra.mxu0 %v2377
        %3031 = vmatprep.mubr.f32.mxu0 %v2314
        %3032 = vmatmul.mubr.f32.gmra.mrb[0].mxu0 %v2310
        %v3033 = vpop.f32.mrb[0].mxu0
        %v3034 = vadd.f32 %v2743, %v3033
        %v3035 = vpop.f32.mrb[0].mxu0
        %3036 = vmatprep.mubr.f32.mxu0 %v2315
        %3037 = vmatmul.mubr.f32.gmra.mrb[0].mxu0 %v2311
        %v3038 = vpop.f32.mrb[0].mxu0
        %v3039 = vadd.f32 %v2748, %v3038
        %v3040 = vpop.f32.mrb[0].mxu0
        %3041 = vmatprep.mubr.f32.mxu0 %v2316
        %3042 = vmatmul.mubr.f32.gmra.mrb[0].mxu0 %v2312
        %v3043 = vpop.f32.mrb[0].mxu0
        %v3044 = vadd.f32 %v2753, %v3043
        %v3045 = vpop.f32.mrb[0].mxu0
        %3046 = vmatprep.mubr.f32.mxu0 %v2317
        %3047 = vmatmul.mubr.f32.gmra.mrb[0].mxu0 %v2313
        %v3048 = vpop.f32.mrb[0].mxu0
        %v3049 = vadd.f32 %v2758, %v3048
        %v3050 = vpop.f32.mrb[0].mxu0
        %3051 = vmatprep.mubr.f32.mxu0 %v2318
        %3052 = vmatmul.mubr.f32.gmra.mrb[0].mxu0 %v2314
        %v3053 = vpop.f32.mrb[0].mxu0
        %v3054 = vadd.f32 %v2763, %v3053
        %v3055 = vpop.f32.mrb[0].mxu0
        %3056 = vmatprep.mubr.f32.mxu0 %v2319
        %3057 = vmatmul.mubr.f32.gmra.mrb[0].mxu0 %v2315
        %v3058 = vpop.f32.mrb[0].mxu0
        %v3059 = vadd.f32 %v2768, %v3058
        %v3060 = vpop.f32.mrb[0].mxu0
        %3061 = vmatprep.mubr.f32.mxu0 %v2320
        %3062 = vmatmul.mubr.f32.gmra.mrb[0].mxu0 %v2316
        %v3063 = vpop.f32.mrb[0].mxu0
        %v3064 = vadd.f32 %v2773, %v3063
        %v3065 = vpop.f32.mrb[0].mxu0
        %3066 = vmatprep.mubr.f32.mxu0 %v2321
        %3067 = vmatmul.mubr.f32.gmra.mrb[0].mxu0 %v2317
        %v3068 = vpop.f32.mrb[0].mxu0
        %v3069 = vadd.f32 %v2778, %v3068
        %v3070 = vpop.f32.mrb[0].mxu0
        %3071 = vmatprep.mubr.f32.mxu0 %v2322
        %3072 = vmatmul.mubr.f32.gmra.mrb[0].mxu0 %v2318
        %v3073 = vpop.f32.mrb[0].mxu0
        %v3074 = vadd.f32 %v2783, %v3073
        %v3075 = vpop.f32.mrb[0].mxu0
        %3076 = vmatprep.mubr.f32.mxu0 %v2323
        %3077 = vmatmul.mubr.f32.gmra.mrb[0].mxu0 %v2319
        %v3078 = vpop.f32.mrb[0].mxu0
        %v3079 = vadd.f32 %v2788, %v3078
        %v3080 = vpop.f32.mrb[0].mxu0
        %3081 = vmatprep.mubr.f32.mxu0 %v2324
        %3082 = vmatmul.mubr.f32.gmra.mrb[0].mxu0 %v2320
        %v3083 = vpop.f32.mrb[0].mxu0
        %v3084 = vadd.f32 %v2793, %v3083
        %v3085 = vpop.f32.mrb[0].mxu0
        %3086 = vmatprep.mubr.f32.mxu0 %v2325
        %3087 = vmatmul.mubr.f32.gmra.mrb[0].mxu0 %v2321
        %v3088 = vpop.f32.mrb[0].mxu0
        %v3089 = vadd.f32 %v2798, %v3088
        %v3090 = vpop.f32.mrb[0].mxu0
        %3091 = vmatprep.mubr.f32.mxu0 %v2326
        %3092 = vmatmul.mubr.f32.gmra.mrb[0].mxu0 %v2322
        %v3093 = vpop.f32.mrb[0].mxu0
        %v3094 = vadd.f32 %v2803, %v3093
        %v3095 = vpop.f32.mrb[0].mxu0
        %3096 = vmatprep.mubr.f32.mxu0 %v2327
        %3097 = vmatmul.mubr.f32.gmra.mrb[0].mxu0 %v2323
        %v3098 = vpop.f32.mrb[0].mxu0
        %v3099 = vadd.f32 %v2808, %v3098
        %v3100 = vpop.f32.mrb[0].mxu0
        %3101 = vmatprep.mubr.f32.mxu0 %v2328
        %3102 = vmatmul.mubr.f32.gmra.mrb[0].mxu0 %v2324
        %v3103 = vpop.f32.mrb[0].mxu0
        %v3104 = vadd.f32 %v2813, %v3103
        %v3105 = vpop.f32.mrb[0].mxu0
        %3106 = vmatprep.mubr.f32.mxu0 %v2329
        %3107 = vmatmul.mubr.f32.gmra.mrb[0].mxu0 %v2325
        %v3108 = vpop.f32.mrb[0].mxu0
        %v3109 = vadd.f32 %v2818, %v3108
        %v3110 = vpop.f32.mrb[0].mxu0
        %3111 = vmatprep.mubr.f32.mxu0 %v2330
        %3112 = vmatmul.mubr.f32.gmra.mrb[0].mxu0 %v2326
        %v3113 = vpop.f32.mrb[0].mxu0
        %v3114 = vadd.f32 %v2823, %v3113
        %v3115 = vpop.f32.mrb[0].mxu0
        %3116 = vmatprep.mubr.f32.mxu0 %v2331
        %3117 = vmatmul.mubr.f32.gmra.mrb[0].mxu0 %v2327
        %v3118 = vpop.f32.mrb[0].mxu0
        %v3119 = vadd.f32 %v2828, %v3118
        %v3120 = vpop.f32.mrb[0].mxu0
        %3121 = vmatprep.mubr.f32.mxu0 %v2332
        %3122 = vmatmul.mubr.f32.gmra.mrb[0].mxu0 %v2328
        %v3123 = vpop.f32.mrb[0].mxu0
        %v3124 = vadd.f32 %v2833, %v3123
        %v3125 = vpop.f32.mrb[0].mxu0
        %3126 = vmatprep.mubr.f32.mxu0 %v2333
        %3127 = vmatmul.mubr.f32.gmra.mrb[0].mxu0 %v2329
        %v3128 = vpop.f32.mrb[0].mxu0
        %v3129 = vadd.f32 %v2838, %v3128
        %v3130 = vpop.f32.mrb[0].mxu0
        %3131 = vmatprep.mubr.f32.mxu0 %v2334
        %3132 = vmatmul.mubr.f32.gmra.mrb[0].mxu0 %v2330
        %v3133 = vpop.f32.mrb[0].mxu0
        %v3134 = vadd.f32 %v2843, %v3133
        %v3135 = vpop.f32.mrb[0].mxu0
        %3136 = vmatprep.mubr.f32.mxu0 %v2335
        %3137 = vmatmul.mubr.f32.gmra.mrb[0].mxu0 %v2331
        %v3138 = vpop.f32.mrb[0].mxu0
        %v3139 = vadd.f32 %v2848, %v3138
        %v3140 = vpop.f32.mrb[0].mxu0
        %3141 = vmatprep.mubr.f32.mxu0 %v2336
        %3142 = vmatmul.mubr.f32.gmra.mrb[0].mxu0 %v2332
        %v3143 = vpop.f32.mrb[0].mxu0
        %v3144 = vadd.f32 %v2853, %v3143
        %v3145 = vpop.f32.mrb[0].mxu0
        %3146 = vmatprep.mubr.f32.mxu0 %v2337
        %3147 = vmatmul.mubr.f32.gmra.mrb[0].mxu0 %v2333
        %v3148 = vpop.f32.mrb[0].mxu0
        %v3149 = vadd.f32 %v2858, %v3148
        %v3150 = vpop.f32.mrb[0].mxu0
        %3151 = vmatprep.mubr.f32.mxu0 %v2338
        %3152 = vmatmul.mubr.f32.gmra.mrb[0].mxu0 %v2334
        %v3153 = vpop.f32.mrb[0].mxu0
        %v3154 = vadd.f32 %v2863, %v3153
        %v3155 = vpop.f32.mrb[0].mxu0
        %3156 = vmatprep.mubr.f32.mxu0 %v2339
        %3157 = vmatmul.mubr.f32.gmra.mrb[0].mxu0 %v2335
        %v3158 = vpop.f32.mrb[0].mxu0
        %v3159 = vadd.f32 %v2868, %v3158
        %v3160 = vpop.f32.mrb[0].mxu0
        %3161 = vmatprep.mubr.f32.mxu0 %v2340
        %3162 = vmatmul.mubr.f32.gmra.mrb[0].mxu0 %v2336
        %v3163 = vpop.f32.mrb[0].mxu0
        %v3164 = vadd.f32 %v2873, %v3163
        %v3165 = vpop.f32.mrb[0].mxu0
        %3166 = vmatprep.mubr.f32.mxu0 %v2341
        %3167 = vmatmul.mubr.f32.gmra.mrb[0].mxu0 %v2337
        %v3168 = vpop.f32.mrb[0].mxu0
        %v3169 = vadd.f32 %v2878, %v3168
        %v3170 = vpop.f32.mrb[0].mxu0
        %3171 = vmatprep.mubr.f32.mxu0 %v2342
        %3172 = vmatmul.mubr.f32.gmra.mrb[0].mxu0 %v2338
        %v3173 = vpop.f32.mrb[0].mxu0
        %v3174 = vadd.f32 %v2883, %v3173
        %v3175 = vpop.f32.mrb[0].mxu0
        %3176 = vmatprep.mubr.f32.mxu0 %v2343
        %3177 = vmatmul.mubr.f32.gmra.mrb[0].mxu0 %v2339
        %v3178 = vpop.f32.mrb[0].mxu0
        %v3179 = vadd.f32 %v2888, %v3178
        %v3180 = vpop.f32.mrb[0].mxu0
        %3181 = vmatprep.mubr.f32.mxu0 %v2344
        %3182 = vmatmul.mubr.f32.gmra.mrb[0].mxu0 %v2340
        %v3183 = vpop.f32.mrb[0].mxu0
        %v3184 = vadd.f32 %v2893, %v3183
        %v3185 = vpop.f32.mrb[0].mxu0
        %3186 = vmatprep.mubr.f32.mxu0 %v2345
        %3187 = vmatmul.mubr.f32.gmra.mrb[0].mxu0 %v2341
        %v3188 = vpop.f32.mrb[0].mxu0
        %v3189 = vadd.f32 %v2898, %v3188
        %v3190 = vpop.f32.mrb[0].mxu0
        %3191 = vdwg.mxu0
        %3192 = vmatprep.subr.mxu0 0.0
        %3193 = vmatpush1.msra.mxu0 %v2378
        %3194 = vmatprep.subr.mxu0 0.0
        %3195 = vmatpush1.msra.mxu0 %v2379
        %3196 = vmatprep.subr.mxu0 0.0
        %3197 = vmatpush1.msra.mxu0 %v2380
        %3198 = vmatprep.subr.mxu0 0.0
        %3199 = vmatpush1.msra.mxu0 %v2381
        %3200 = vmatprep.subr.mxu0 0.0
        %3201 = vmatpush1.msra.mxu0 %v2382
        %3202 = vmatprep.subr.mxu0 0.0
        %3203 = vmatpush1.msra.mxu0 %v2383
        %3204 = vmatprep.subr.mxu0 0.0
        %3205 = vmatpush1.msra.mxu0 %v2384
        %3206 = vmatprep.subr.mxu0 0.0
        %3207 = vmatpush1.msra.mxu0 %v2385
        %3208 = vmatprep.subr.mxu0 0.0
        %3209 = vmatpush1.msra.mxu0 0.0
        %3210 = vmatprep.subr.mxu0 0.0
        %3211 = vmatpush1.msra.mxu0 0.0
        %3212 = vmatprep.subr.mxu0 0.0
        %3213 = vmatpush1.msra.mxu0 0.0
        %3214 = vmatprep.subr.mxu0 0.0
        %3215 = vmatpush1.msra.mxu0 0.0
        %3216 = vmatprep.subr.mxu0 0.0
        %3217 = vmatpush1.msra.mxu0 0.0
        %3218 = vmatprep.subr.mxu0 0.0
        %3219 = vmatpush1.msra.mxu0 0.0
        %3220 = vmatprep.subr.mxu0 0.0
        %3221 = vmatpush1.msra.mxu0 0.0
        %3222 = vmatprep.subr.mxu0 0.0
        %3223 = vmatpush1.msra.mxu0 0.0
        %3224 = vmatprep.subr.mxu0 0.0
        %3225 = vmatpush1.msra.mxu0 0.0
        %3226 = vmatprep.subr.mxu0 0.0
        %3227 = vmatpush1.msra.mxu0 0.0
        %3228 = vmatprep.subr.mxu0 0.0
        %3229 = vmatpush1.msra.mxu0 0.0
        %3230 = vmatprep.subr.mxu0 0.0
        %3231 = vmatpush1.msra.mxu0 0.0
        %3232 = vmatprep.subr.mxu0 0.0
        %3233 = vmatpush1.msra.mxu0 0.0
        %3234 = vmatprep.subr.mxu0 0.0
        %3235 = vmatpush1.msra.mxu0 0.0
        %3236 = vmatprep.subr.mxu0 0.0
        %3237 = vmatpush1.msra.mxu0 0.0
        %3238 = vmatprep.subr.mxu0 0.0
        %3239 = vmatpush1.msra.mxu0 0.0
        %3240 = vmatprep.subr.mxu0 0.0
        %3241 = vmatpush1.msra.mxu0 0.0
        %3242 = vmatprep.subr.mxu0 0.0
        %3243 = vmatpush1.msra.mxu0 0.0
        %3244 = vmatprep.subr.mxu0 0.0
        %3245 = vmatpush1.msra.mxu0 0.0
        %3246 = vmatprep.subr.mxu0 0.0
        %3247 = vmatpush1.msra.mxu0 0.0
        %3248 = vmatprep.subr.mxu0 0.0
        %3249 = vmatpush1.msra.mxu0 0.0
        %3250 = vmatprep.subr.mxu0 0.0
        %3251 = vmatpush1.msra.mxu0 0.0
        %3252 = vmatprep.subr.mxu0 0.0
        %3253 = vmatpush1.msra.mxu0 0.0
        %3254 = vmatprep.subr.mxu0 0.0
        %3255 = vmatpush1.msra.mxu0 0.0
        %3256 = vmatprep.mubr.f32.mxu0 0.0
        %3257 = vmatmul.mubr.f32.gmra.mrb[0].mxu0 %v2901
        %v3258 = vpop.f32.mrb[0].mxu0
        %v3259 = vadd.f32 %v3034, %v3258
        %v3260 = vpop.f32.mrb[0].mxu0
        %3261 = vmatprep.mubr.f32.mxu0 0.0
        %3262 = vmatmul.mubr.f32.gmra.mrb[0].mxu0 %v2903
        %v3263 = vpop.f32.mrb[0].mxu0
        %v3264 = vadd.f32 %v3039, %v3263
        %v3265 = vpop.f32.mrb[0].mxu0
        %3266 = vmatprep.mubr.f32.mxu0 0.0
        %3267 = vmatmul.mubr.f32.gmra.mrb[0].mxu0 %v2905
        %v3268 = vpop.f32.mrb[0].mxu0
        %v3269 = vadd.f32 %v3044, %v3268
        %v3270 = vpop.f32.mrb[0].mxu0
        %3271 = vmatprep.mubr.f32.mxu0 0.0
        %3272 = vmatmul.mubr.f32.gmra.mrb[0].mxu0 %v2907
        %v3273 = vpop.f32.mrb[0].mxu0
        %v3274 = vadd.f32 %v3049, %v3273
        %v3275 = vpop.f32.mrb[0].mxu0
        %3276 = vmatprep.mubr.f32.mxu0 0.0
        %3277 = vmatmul.mubr.f32.gmra.mrb[0].mxu0 %v2909
        %v3278 = vpop.f32.mrb[0].mxu0
        %v3279 = vadd.f32 %v3054, %v3278
        %v3280 = vpop.f32.mrb[0].mxu0
        %3281 = vmatprep.mubr.f32.mxu0 0.0
        %3282 = vmatmul.mubr.f32.gmra.mrb[0].mxu0 %v2911
        %v3283 = vpop.f32.mrb[0].mxu0
        %v3284 = vadd.f32 %v3059, %v3283
        %v3285 = vpop.f32.mrb[0].mxu0
        %3286 = vmatprep.mubr.f32.mxu0 0.0
        %3287 = vmatmul.mubr.f32.gmra.mrb[0].mxu0 %v2913
        %v3288 = vpop.f32.mrb[0].mxu0
        %v3289 = vadd.f32 %v3064, %v3288
        %v3290 = vpop.f32.mrb[0].mxu0
        %3291 = vmatprep.mubr.f32.mxu0 0.0
        %3292 = vmatmul.mubr.f32.gmra.mrb[0].mxu0 %v2915
        %v3293 = vpop.f32.mrb[0].mxu0
        %v3294 = vadd.f32 %v3069, %v3293
        %v3295 = vpop.f32.mrb[0].mxu0
        %3296 = vmatprep.mubr.f32.mxu0 0.0
        %3297 = vmatmul.mubr.f32.gmra.mrb[0].mxu0 %v2917
        %v3298 = vpop.f32.mrb[0].mxu0
        %v3299 = vadd.f32 %v3074, %v3298
        %v3300 = vpop.f32.mrb[0].mxu0
        %3301 = vmatprep.mubr.f32.mxu0 0.0
        %3302 = vmatmul.mubr.f32.gmra.mrb[0].mxu0 %v2919
        %v3303 = vpop.f32.mrb[0].mxu0
        %v3304 = vadd.f32 %v3079, %v3303
        %v3305 = vpop.f32.mrb[0].mxu0
        %3306 = vmatprep.mubr.f32.mxu0 0.0
        %3307 = vmatmul.mubr.f32.gmra.mrb[0].mxu0 %v2921
        %v3308 = vpop.f32.mrb[0].mxu0
        %v3309 = vadd.f32 %v3084, %v3308
        %v3310 = vpop.f32.mrb[0].mxu0
        %3311 = vmatprep.mubr.f32.mxu0 0.0
        %3312 = vmatmul.mubr.f32.gmra.mrb[0].mxu0 %v2923
        %v3313 = vpop.f32.mrb[0].mxu0
        %v3314 = vadd.f32 %v3089, %v3313
        %v3315 = vpop.f32.mrb[0].mxu0
        %3316 = vmatprep.mubr.f32.mxu0 0.0
        %3317 = vmatmul.mubr.f32.gmra.mrb[0].mxu0 %v2925
        %v3318 = vpop.f32.mrb[0].mxu0
        %v3319 = vadd.f32 %v3094, %v3318
        %v3320 = vpop.f32.mrb[0].mxu0
        %3321 = vmatprep.mubr.f32.mxu0 0.0
        %3322 = vmatmul.mubr.f32.gmra.mrb[0].mxu0 %v2927
        %v3323 = vpop.f32.mrb[0].mxu0
        %v3324 = vadd.f32 %v3099, %v3323
        %v3325 = vpop.f32.mrb[0].mxu0
        %3326 = vmatprep.mubr.f32.mxu0 0.0
        %3327 = vmatmul.mubr.f32.gmra.mrb[0].mxu0 %v2929
        %v3328 = vpop.f32.mrb[0].mxu0
        %v3329 = vadd.f32 %v3104, %v3328
        %v3330 = vpop.f32.mrb[0].mxu0
        %3331 = vmatprep.mubr.f32.mxu0 0.0
        %3332 = vmatmul.mubr.f32.gmra.mrb[0].mxu0 %v2931
        %v3333 = vpop.f32.mrb[0].mxu0
        %v3334 = vadd.f32 %v3109, %v3333
        %v3335 = vpop.f32.mrb[0].mxu0
        %3336 = vmatprep.mubr.f32.mxu0 0.0
        %3337 = vmatmul.mubr.f32.gmra.mrb[0].mxu0 %v2933
        %v3338 = vpop.f32.mrb[0].mxu0
        %v3339 = vadd.f32 %v3114, %v3338
        %v3340 = vpop.f32.mrb[0].mxu0
        %3341 = vmatprep.mubr.f32.mxu0 0.0
        %3342 = vmatmul.mubr.f32.gmra.mrb[0].mxu0 %v2935
        %v3343 = vpop.f32.mrb[0].mxu0
        %v3344 = vadd.f32 %v3119, %v3343
        %v3345 = vpop.f32.mrb[0].mxu0
        %3346 = vmatprep.mubr.f32.mxu0 0.0
        %3347 = vmatmul.mubr.f32.gmra.mrb[0].mxu0 %v2937
        %v3348 = vpop.f32.mrb[0].mxu0
        %v3349 = vadd.f32 %v3124, %v3348
        %v3350 = vpop.f32.mrb[0].mxu0
        %3351 = vmatprep.mubr.f32.mxu0 0.0
        %3352 = vmatmul.mubr.f32.gmra.mrb[0].mxu0 %v2939
        %v3353 = vpop.f32.mrb[0].mxu0
        %v3354 = vadd.f32 %v3129, %v3353
        %v3355 = vpop.f32.mrb[0].mxu0
        %3356 = vmatprep.mubr.f32.mxu0 0.0
        %3357 = vmatmul.mubr.f32.gmra.mrb[0].mxu0 %v2941
        %v3358 = vpop.f32.mrb[0].mxu0
        %v3359 = vadd.f32 %v3134, %v3358
        %v3360 = vpop.f32.mrb[0].mxu0
        %3361 = vmatprep.mubr.f32.mxu0 0.0
        %3362 = vmatmul.mubr.f32.gmra.mrb[0].mxu0 %v2943
        %v3363 = vpop.f32.mrb[0].mxu0
        %v3364 = vadd.f32 %v3139, %v3363
        %v3365 = vpop.f32.mrb[0].mxu0
        %3366 = vmatprep.mubr.f32.mxu0 0.0
        %3367 = vmatmul.mubr.f32.gmra.mrb[0].mxu0 %v2945
        %v3368 = vpop.f32.mrb[0].mxu0
        %v3369 = vadd.f32 %v3144, %v3368
        %v3370 = vpop.f32.mrb[0].mxu0
        %3371 = vmatprep.mubr.f32.mxu0 0.0
        %3372 = vmatmul.mubr.f32.gmra.mrb[0].mxu0 %v2947
        %v3373 = vpop.f32.mrb[0].mxu0
        %v3374 = vadd.f32 %v3149, %v3373
        %v3375 = vpop.f32.mrb[0].mxu0
        %3376 = vmatprep.mubr.f32.mxu0 0.0
        %3377 = vmatmul.mubr.f32.gmra.mrb[0].mxu0 %v2949
        %v3378 = vpop.f32.mrb[0].mxu0
        %v3379 = vadd.f32 %v3154, %v3378
        %v3380 = vpop.f32.mrb[0].mxu0
        %3381 = vmatprep.mubr.f32.mxu0 0.0
        %3382 = vmatmul.mubr.f32.gmra.mrb[0].mxu0 %v2951
        %v3383 = vpop.f32.mrb[0].mxu0
        %v3384 = vadd.f32 %v3159, %v3383
        %v3385 = vpop.f32.mrb[0].mxu0
        %3386 = vmatprep.mubr.f32.mxu0 0.0
        %3387 = vmatmul.mubr.f32.gmra.mrb[0].mxu0 %v2953
        %v3388 = vpop.f32.mrb[0].mxu0
        %v3389 = vadd.f32 %v3164, %v3388
        %v3390 = vpop.f32.mrb[0].mxu0
        %3391 = vmatprep.mubr.f32.mxu0 0.0
        %3392 = vmatmul.mubr.f32.gmra.mrb[0].mxu0 %v2955
        %v3393 = vpop.f32.mrb[0].mxu0
        %v3394 = vadd.f32 %v3169, %v3393
        %v3395 = vpop.f32.mrb[0].mxu0
        %3396 = vmatprep.mubr.f32.mxu0 0.0
        %3397 = vmatmul.mubr.f32.gmra.mrb[0].mxu0 %v2957
        %v3398 = vpop.f32.mrb[0].mxu0
        %v3399 = vadd.f32 %v3174, %v3398
        %v3400 = vpop.f32.mrb[0].mxu0
        %3401 = vmatprep.mubr.f32.mxu0 0.0
        %3402 = vmatmul.mubr.f32.gmra.mrb[0].mxu0 %v2959
        %v3403 = vpop.f32.mrb[0].mxu0
        %v3404 = vadd.f32 %v3179, %v3403
        %v3405 = vpop.f32.mrb[0].mxu0
        %3406 = vmatprep.mubr.f32.mxu0 0.0
        %3407 = vmatmul.mubr.f32.gmra.mrb[0].mxu0 %v2962
        %v3408 = vpop.f32.mrb[0].mxu0
        %v3409 = vadd.f32 %v3184, %v3408
        %v3410 = vpop.f32.mrb[0].mxu0
        %3411 = vmatprep.mubr.f32.mxu0 0.0
        %3412 = vmatmul.mubr.f32.gmra.mrb[0].mxu0 %v2965
        %v3413 = vpop.f32.mrb[0].mxu0
        %v3414 = vadd.f32 %v3189, %v3413
        %v3415 = vpop.f32.mrb[0].mxu0
        %3416 = vdwg.mxu0
        %3419 = vrot.lane.b32.xlu0 %v486, 64
        %v3420 = vpop.permute.xlu0 %3419
        %3421 = vrot.lane.b32.xlu0 %v487, 64
        %v3422 = vpop.permute.xlu0 %3421
        %3425 = vrot.lane.b32.xlu0 %v520, 64
        %v3426 = vpop.permute.xlu0 %3425
        %3427 = vrot.lane.b32.xlu0 %v521, 64
        %v3428 = vpop.permute.xlu0 %3427
        %v3431 = vsel %vm309, %v484, %v3420
        %v3432 = vsel %vm309, %v485, %v3422
        %v3433 = vsel %vm309, %v518, %v3426
        %v3434 = vsel %vm309, %v519, %v3428
        %s3435 = scalar_lea.vmem %s3, 640
        %v3436 = vld [vmem:[%s3435] sm:$0xff]
        %v3437 = vld [vmem:[%s3435 + $0x8] sm:$0xff]
        %v3438 = vld [vmem:[%s3435 + $0x10] sm:$0xff]
        %v3439 = vld [vmem:[%s3435 + $0x18] sm:$0xff]
        %v3440 = vld [vmem:[%s3435 + $0x20] sm:$0xff]
        %v3441 = vld [vmem:[%s3435 + $0x28] sm:$0xff]
        %v3442 = vld [vmem:[%s3435 + $0x30] sm:$0xff]
        %v3443 = vld [vmem:[%s3435 + $0x38] sm:$0xff]
        %v3444 = vld [vmem:[%s3435 + $0x40] sm:$0xff]
        %v3445 = vld [vmem:[%s3435 + $0x48] sm:$0xff]
        %v3446 = vld [vmem:[%s3435 + $0x50] sm:$0xff]
        %v3447 = vld [vmem:[%s3435 + $0x58] sm:$0xff]
        %v3448 = vld [vmem:[%s3435 + $0x60] sm:$0xff]
        %v3449 = vld [vmem:[%s3435 + $0x68] sm:$0xff]
        %v3450 = vld [vmem:[%s3435 + $0x70] sm:$0xff]
        %v3451 = vld [vmem:[%s3435 + $0x78] sm:$0xff]
        %v3452 = vld [vmem:[%s3435 + $0x80] sm:$0xff]
        %v3453 = vld [vmem:[%s3435 + $0x88] sm:$0xff]
        %v3454 = vld [vmem:[%s3435 + $0x90] sm:$0xff]
        %v3455 = vld [vmem:[%s3435 + $0x98] sm:$0xff]
        %v3456 = vld [vmem:[%s3435 + $0xa0] sm:$0xff]
        %v3457 = vld [vmem:[%s3435 + $0xa8] sm:$0xff]
        %v3458 = vld [vmem:[%s3435 + $0xb0] sm:$0xff]
        %v3459 = vld [vmem:[%s3435 + $0xb8] sm:$0xff]
        %v3460 = vld [vmem:[%s3435 + $0xc0] sm:$0xff]
        %v3461 = vld [vmem:[%s3435 + $0xc8] sm:$0xff]
        %v3462 = vld [vmem:[%s3435 + $0xd0] sm:$0xff]
        %v3463 = vld [vmem:[%s3435 + $0xd8] sm:$0xff]
        %v3464 = vld [vmem:[%s3435 + $0xe0] sm:$0xff]
        %v3465 = vld [vmem:[%s3435 + $0xe8] sm:$0xff]
        %v3466 = vld [vmem:[%s3435 + $0xf0] sm:$0xff]
        %v3467 = vld [vmem:[%s3435 + $0xf8] sm:$0xff]
        %v3468 = vld [vmem:[%s3435 + $0x100] sm:$0xff]
        %v3469 = vld [vmem:[%s3435 + $0x108] sm:$0xff]
        %v3470 = vld [vmem:[%s3435 + $0x110] sm:$0xff]
        %v3471 = vld [vmem:[%s3435 + $0x118] sm:$0xff]
        %v3472 = vld [vmem:[%s3435 + $0x120] sm:$0xff]
        %v3473 = vld [vmem:[%s3435 + $0x128] sm:$0xff]
        %v3474 = vld [vmem:[%s3435 + $0x130] sm:$0xff]
        %v3475 = vld [vmem:[%s3435 + $0x138] sm:$0xff]
        %v3477 = vsel %vm309, %v522, 0
        %v3480 = vsel %vm309, %v523, 0
        %3482 = vmatprep.subr.mxu0 0.0
        %3483 = vmatpush1.msra.mxu0 %v3436
        %3484 = vmatprep.subr.mxu0 0.0
        %3485 = vmatpush1.msra.mxu0 %v3437
        %3486 = vmatprep.subr.mxu0 0.0
        %3487 = vmatpush1.msra.mxu0 %v3438
        %3488 = vmatprep.subr.mxu0 0.0
        %3489 = vmatpush1.msra.mxu0 %v3439
        %3490 = vmatprep.subr.mxu0 0.0
        %3491 = vmatpush1.msra.mxu0 %v3440
        %3492 = vmatprep.subr.mxu0 0.0
        %3493 = vmatpush1.msra.mxu0 %v3441
        %3494 = vmatprep.subr.mxu0 0.0
        %3495 = vmatpush1.msra.mxu0 %v3442
        %3496 = vmatprep.subr.mxu0 0.0
        %3497 = vmatpush1.msra.mxu0 %v3443
        %3498 = vmatprep.subr.mxu0 0.0
        %3499 = vmatpush1.msra.mxu0 %v3444
        %3500 = vmatprep.subr.mxu0 0.0
        %3501 = vmatpush1.msra.mxu0 %v3445
        %3502 = vmatprep.subr.mxu0 0.0
        %3503 = vmatpush1.msra.mxu0 %v3446
        %3504 = vmatprep.subr.mxu0 0.0
        %3505 = vmatpush1.msra.mxu0 %v3447
        %3506 = vmatprep.subr.mxu0 0.0
        %3507 = vmatpush1.msra.mxu0 %v3448
        %3508 = vmatprep.subr.mxu0 0.0
        %3509 = vmatpush1.msra.mxu0 %v3449
        %3510 = vmatprep.subr.mxu0 0.0
        %3511 = vmatpush1.msra.mxu0 %v3450
        %3512 = vmatprep.subr.mxu0 0.0
        %3513 = vmatpush1.msra.mxu0 %v3451
        %3514 = vmatprep.subr.mxu0 0.0
        %3515 = vmatpush1.msra.mxu0 %v3452
        %3516 = vmatprep.subr.mxu0 0.0
        %3517 = vmatpush1.msra.mxu0 %v3453
        %3518 = vmatprep.subr.mxu0 0.0
        %3519 = vmatpush1.msra.mxu0 %v3454
        %3520 = vmatprep.subr.mxu0 0.0
        %3521 = vmatpush1.msra.mxu0 %v3455
        %3522 = vmatprep.subr.mxu0 0.0
        %3523 = vmatpush1.msra.mxu0 %v3456
        %3524 = vmatprep.subr.mxu0 0.0
        %3525 = vmatpush1.msra.mxu0 %v3457
        %3526 = vmatprep.subr.mxu0 0.0
        %3527 = vmatpush1.msra.mxu0 %v3458
        %3528 = vmatprep.subr.mxu0 0.0
        %3529 = vmatpush1.msra.mxu0 %v3459
        %3530 = vmatprep.subr.mxu0 0.0
        %3531 = vmatpush1.msra.mxu0 %v3460
        %3532 = vmatprep.subr.mxu0 0.0
        %3533 = vmatpush1.msra.mxu0 %v3461
        %3534 = vmatprep.subr.mxu0 0.0
        %3535 = vmatpush1.msra.mxu0 %v3462
        %3536 = vmatprep.subr.mxu0 0.0
        %3537 = vmatpush1.msra.mxu0 %v3463
        %3538 = vmatprep.subr.mxu0 0.0
        %3539 = vmatpush1.msra.mxu0 %v3464
        %3540 = vmatprep.subr.mxu0 0.0
        %3541 = vmatpush1.msra.mxu0 %v3465
        %3542 = vmatprep.subr.mxu0 0.0
        %3543 = vmatpush1.msra.mxu0 %v3466
        %3544 = vmatprep.subr.mxu0 0.0
        %3545 = vmatpush1.msra.mxu0 %v3467
        %3546 = vmatprep.mubr.f32.mxu0 %v918
        %3547 = vmatmul.mubr.f32.gmra.mrb[0].mxu0 %v3431
        %v3548 = vpop.f32.mrb[0].mxu0
        %v3549 = vadd.f32 0.0, %v3548
        %v3550 = vpop.f32.mrb[0].mxu0
        %3551 = vmatprep.mubr.f32.mxu0 %v919
        %3552 = vmatmul.mubr.f32.gmra.mrb[0].mxu0 %v3432
        %v3553 = vpop.f32.mrb[0].mxu0
        %v3554 = vadd.f32 0.0, %v3553
        %v3555 = vpop.f32.mrb[0].mxu0
        %3556 = vmatprep.mubr.f32.mxu0 %v920
        %3557 = vmatmul.mubr.f32.gmra.mrb[0].mxu0 %v916
        %v3558 = vpop.f32.mrb[0].mxu0
        %v3559 = vadd.f32 0.0, %v3558
        %v3560 = vpop.f32.mrb[0].mxu0
        %3561 = vmatprep.mubr.f32.mxu0 %v921
        %3562 = vmatmul.mubr.f32.gmra.mrb[0].mxu0 %v917
        %v3563 = vpop.f32.mrb[0].mxu0
        %v3564 = vadd.f32 0.0, %v3563
        %v3565 = vpop.f32.mrb[0].mxu0
        %3566 = vmatprep.mubr.f32.mxu0 %v922
        %3567 = vmatmul.mubr.f32.gmra.mrb[0].mxu0 %v918
        %v3568 = vpop.f32.mrb[0].mxu0
        %v3569 = vadd.f32 0.0, %v3568
        %v3570 = vpop.f32.mrb[0].mxu0
        %3571 = vmatprep.mubr.f32.mxu0 %v923
        %3572 = vmatmul.mubr.f32.gmra.mrb[0].mxu0 %v919
        %v3573 = vpop.f32.mrb[0].mxu0
        %v3574 = vadd.f32 0.0, %v3573
        %v3575 = vpop.f32.mrb[0].mxu0
        %3576 = vmatprep.mubr.f32.mxu0 %v924
        %3577 = vmatmul.mubr.f32.gmra.mrb[0].mxu0 %v920
        %v3578 = vpop.f32.mrb[0].mxu0
        %v3579 = vadd.f32 0.0, %v3578
        %v3580 = vpop.f32.mrb[0].mxu0
        %3581 = vmatprep.mubr.f32.mxu0 %v925
        %3582 = vmatmul.mubr.f32.gmra.mrb[0].mxu0 %v921
        %v3583 = vpop.f32.mrb[0].mxu0
        %v3584 = vadd.f32 0.0, %v3583
        %v3585 = vpop.f32.mrb[0].mxu0
        %3586 = vmatprep.mubr.f32.mxu0 %v926
        %3587 = vmatmul.mubr.f32.gmra.mrb[0].mxu0 %v922
        %v3588 = vpop.f32.mrb[0].mxu0
        %v3589 = vadd.f32 0.0, %v3588
        %v3590 = vpop.f32.mrb[0].mxu0
        %3591 = vmatprep.mubr.f32.mxu0 %v927
        %3592 = vmatmul.mubr.f32.gmra.mrb[0].mxu0 %v923
        %v3593 = vpop.f32.mrb[0].mxu0
        %v3594 = vadd.f32 0.0, %v3593
        %v3595 = vpop.f32.mrb[0].mxu0
        %3596 = vmatprep.mubr.f32.mxu0 %v928
        %3597 = vmatmul.mubr.f32.gmra.mrb[0].mxu0 %v924
        %v3598 = vpop.f32.mrb[0].mxu0
        %v3599 = vadd.f32 0.0, %v3598
        %v3600 = vpop.f32.mrb[0].mxu0
        %3601 = vmatprep.mubr.f32.mxu0 %v929
        %3602 = vmatmul.mubr.f32.gmra.mrb[0].mxu0 %v925
        %v3603 = vpop.f32.mrb[0].mxu0
        %v3604 = vadd.f32 0.0, %v3603
        %v3605 = vpop.f32.mrb[0].mxu0
        %3606 = vmatprep.mubr.f32.mxu0 %v930
        %3607 = vmatmul.mubr.f32.gmra.mrb[0].mxu0 %v926
        %v3608 = vpop.f32.mrb[0].mxu0
        %v3609 = vadd.f32 0.0, %v3608
        %v3610 = vpop.f32.mrb[0].mxu0
        %3611 = vmatprep.mubr.f32.mxu0 %v931
        %3612 = vmatmul.mubr.f32.gmra.mrb[0].mxu0 %v927
        %v3613 = vpop.f32.mrb[0].mxu0
        %v3614 = vadd.f32 0.0, %v3613
        %v3615 = vpop.f32.mrb[0].mxu0
        %3616 = vmatprep.mubr.f32.mxu0 %v932
        %3617 = vmatmul.mubr.f32.gmra.mrb[0].mxu0 %v928
        %v3618 = vpop.f32.mrb[0].mxu0
        %v3619 = vadd.f32 0.0, %v3618
        %v3620 = vpop.f32.mrb[0].mxu0
        %3621 = vmatprep.mubr.f32.mxu0 %v933
        %3622 = vmatmul.mubr.f32.gmra.mrb[0].mxu0 %v929
        %v3623 = vpop.f32.mrb[0].mxu0
        %v3624 = vadd.f32 0.0, %v3623
        %v3625 = vpop.f32.mrb[0].mxu0
        %3626 = vmatprep.mubr.f32.mxu0 %v934
        %3627 = vmatmul.mubr.f32.gmra.mrb[0].mxu0 %v930
        %v3628 = vpop.f32.mrb[0].mxu0
        %v3629 = vadd.f32 0.0, %v3628
        %v3630 = vpop.f32.mrb[0].mxu0
        %3631 = vmatprep.mubr.f32.mxu0 %v935
        %3632 = vmatmul.mubr.f32.gmra.mrb[0].mxu0 %v931
        %v3633 = vpop.f32.mrb[0].mxu0
        %v3634 = vadd.f32 0.0, %v3633
        %v3635 = vpop.f32.mrb[0].mxu0
        %3636 = vmatprep.mubr.f32.mxu0 %v936
        %3637 = vmatmul.mubr.f32.gmra.mrb[0].mxu0 %v932
        %v3638 = vpop.f32.mrb[0].mxu0
        %v3639 = vadd.f32 0.0, %v3638
        %v3640 = vpop.f32.mrb[0].mxu0
        %3641 = vmatprep.mubr.f32.mxu0 %v937
        %3642 = vmatmul.mubr.f32.gmra.mrb[0].mxu0 %v933
        %v3643 = vpop.f32.mrb[0].mxu0
        %v3644 = vadd.f32 0.0, %v3643
        %v3645 = vpop.f32.mrb[0].mxu0
        %3646 = vmatprep.mubr.f32.mxu0 %v938
        %3647 = vmatmul.mubr.f32.gmra.mrb[0].mxu0 %v934
        %v3648 = vpop.f32.mrb[0].mxu0
        %v3649 = vadd.f32 0.0, %v3648
        %v3650 = vpop.f32.mrb[0].mxu0
        %3651 = vmatprep.mubr.f32.mxu0 %v939
        %3652 = vmatmul.mubr.f32.gmra.mrb[0].mxu0 %v935
        %v3653 = vpop.f32.mrb[0].mxu0
        %v3654 = vadd.f32 0.0, %v3653
        %v3655 = vpop.f32.mrb[0].mxu0
        %3656 = vmatprep.mubr.f32.mxu0 %v940
        %3657 = vmatmul.mubr.f32.gmra.mrb[0].mxu0 %v936
        %v3658 = vpop.f32.mrb[0].mxu0
        %v3659 = vadd.f32 0.0, %v3658
        %v3660 = vpop.f32.mrb[0].mxu0
        %3661 = vmatprep.mubr.f32.mxu0 %v941
        %3662 = vmatmul.mubr.f32.gmra.mrb[0].mxu0 %v937
        %v3663 = vpop.f32.mrb[0].mxu0
        %v3664 = vadd.f32 0.0, %v3663
        %v3665 = vpop.f32.mrb[0].mxu0
        %3666 = vmatprep.mubr.f32.mxu0 %v942
        %3667 = vmatmul.mubr.f32.gmra.mrb[0].mxu0 %v938
        %v3668 = vpop.f32.mrb[0].mxu0
        %v3669 = vadd.f32 0.0, %v3668
        %v3670 = vpop.f32.mrb[0].mxu0
        %3671 = vmatprep.mubr.f32.mxu0 %v943
        %3672 = vmatmul.mubr.f32.gmra.mrb[0].mxu0 %v939
        %v3673 = vpop.f32.mrb[0].mxu0
        %v3674 = vadd.f32 0.0, %v3673
        %v3675 = vpop.f32.mrb[0].mxu0
        %3676 = vmatprep.mubr.f32.mxu0 %v944
        %3677 = vmatmul.mubr.f32.gmra.mrb[0].mxu0 %v940
        %v3678 = vpop.f32.mrb[0].mxu0
        %v3679 = vadd.f32 0.0, %v3678
        %v3680 = vpop.f32.mrb[0].mxu0
        %3681 = vmatprep.mubr.f32.mxu0 %v945
        %3682 = vmatmul.mubr.f32.gmra.mrb[0].mxu0 %v941
        %v3683 = vpop.f32.mrb[0].mxu0
        %v3684 = vadd.f32 0.0, %v3683
        %v3685 = vpop.f32.mrb[0].mxu0
        %3686 = vmatprep.mubr.f32.mxu0 %v946
        %3687 = vmatmul.mubr.f32.gmra.mrb[0].mxu0 %v942
        %v3688 = vpop.f32.mrb[0].mxu0
        %v3689 = vadd.f32 0.0, %v3688
        %v3690 = vpop.f32.mrb[0].mxu0
        %3691 = vmatprep.mubr.f32.mxu0 %v947
        %3692 = vmatmul.mubr.f32.gmra.mrb[0].mxu0 %v943
        %v3693 = vpop.f32.mrb[0].mxu0
        %v3694 = vadd.f32 0.0, %v3693
        %v3695 = vpop.f32.mrb[0].mxu0
        %3696 = vmatprep.mubr.f32.mxu0 %v3433
        %3697 = vmatmul.mubr.f32.gmra.mrb[0].mxu0 %v944
        %v3698 = vpop.f32.mrb[0].mxu0
        %v3699 = vadd.f32 0.0, %v3698
        %v3700 = vpop.f32.mrb[0].mxu0
        %3701 = vmatprep.mubr.f32.mxu0 %v3434
        %3702 = vmatmul.mubr.f32.gmra.mrb[0].mxu0 %v945
        %v3703 = vpop.f32.mrb[0].mxu0
        %v3704 = vadd.f32 0.0, %v3703
        %v3705 = vpop.f32.mrb[0].mxu0
        %3706 = vdwg.mxu0
        %3707 = vmatprep.subr.mxu0 0.0
        %3708 = vmatpush1.msra.mxu0 %v3468
        %3709 = vmatprep.subr.mxu0 0.0
        %3710 = vmatpush1.msra.mxu0 %v3469
        %3711 = vmatprep.subr.mxu0 0.0
        %3712 = vmatpush1.msra.mxu0 %v3470
        %3713 = vmatprep.subr.mxu0 0.0
        %3714 = vmatpush1.msra.mxu0 %v3471
        %3715 = vmatprep.subr.mxu0 0.0
        %3716 = vmatpush1.msra.mxu0 %v3472
        %3717 = vmatprep.subr.mxu0 0.0
        %3718 = vmatpush1.msra.mxu0 %v3473
        %3719 = vmatprep.subr.mxu0 0.0
        %3720 = vmatpush1.msra.mxu0 %v3474
        %3721 = vmatprep.subr.mxu0 0.0
        %3722 = vmatpush1.msra.mxu0 %v3475
        %3723 = vmatprep.subr.mxu0 0.0
        %3724 = vmatpush1.msra.mxu0 0.0
        %3725 = vmatprep.subr.mxu0 0.0
        %3726 = vmatpush1.msra.mxu0 0.0
        %3727 = vmatprep.subr.mxu0 0.0
        %3728 = vmatpush1.msra.mxu0 0.0
        %3729 = vmatprep.subr.mxu0 0.0
        %3730 = vmatpush1.msra.mxu0 0.0
        %3731 = vmatprep.subr.mxu0 0.0
        %3732 = vmatpush1.msra.mxu0 0.0
        %3733 = vmatprep.subr.mxu0 0.0
        %3734 = vmatpush1.msra.mxu0 0.0
        %3735 = vmatprep.subr.mxu0 0.0
        %3736 = vmatpush1.msra.mxu0 0.0
        %3737 = vmatprep.subr.mxu0 0.0
        %3738 = vmatpush1.msra.mxu0 0.0
        %3739 = vmatprep.subr.mxu0 0.0
        %3740 = vmatpush1.msra.mxu0 0.0
        %3741 = vmatprep.subr.mxu0 0.0
        %3742 = vmatpush1.msra.mxu0 0.0
        %3743 = vmatprep.subr.mxu0 0.0
        %3744 = vmatpush1.msra.mxu0 0.0
        %3745 = vmatprep.subr.mxu0 0.0
        %3746 = vmatpush1.msra.mxu0 0.0
        %3747 = vmatprep.subr.mxu0 0.0
        %3748 = vmatpush1.msra.mxu0 0.0
        %3749 = vmatprep.subr.mxu0 0.0
        %3750 = vmatpush1.msra.mxu0 0.0
        %3751 = vmatprep.subr.mxu0 0.0
        %3752 = vmatpush1.msra.mxu0 0.0
        %3753 = vmatprep.subr.mxu0 0.0
        %3754 = vmatpush1.msra.mxu0 0.0
        %3755 = vmatprep.subr.mxu0 0.0
        %3756 = vmatpush1.msra.mxu0 0.0
        %3757 = vmatprep.subr.mxu0 0.0
        %3758 = vmatpush1.msra.mxu0 0.0
        %3759 = vmatprep.subr.mxu0 0.0
        %3760 = vmatpush1.msra.mxu0 0.0
        %3761 = vmatprep.subr.mxu0 0.0
        %3762 = vmatpush1.msra.mxu0 0.0
        %3763 = vmatprep.subr.mxu0 0.0
        %3764 = vmatpush1.msra.mxu0 0.0
        %3765 = vmatprep.subr.mxu0 0.0
        %3766 = vmatpush1.msra.mxu0 0.0
        %3767 = vmatprep.subr.mxu0 0.0
        %3768 = vmatpush1.msra.mxu0 0.0
        %3769 = vmatprep.subr.mxu0 0.0
        %3770 = vmatpush1.msra.mxu0 0.0
        %3771 = vmatprep.mubr.f32.mxu0 0.0
        %3772 = vmatmul.mubr.f32.gmra.mrb[0].mxu0 %v977
        %v3773 = vpop.f32.mrb[0].mxu0
        %v3774 = vadd.f32 %v3549, %v3773
        %v3775 = vpop.f32.mrb[0].mxu0
        %3776 = vmatprep.mubr.f32.mxu0 0.0
        %3777 = vmatmul.mubr.f32.gmra.mrb[0].mxu0 %v979
        %v3778 = vpop.f32.mrb[0].mxu0
        %v3779 = vadd.f32 %v3554, %v3778
        %v3780 = vpop.f32.mrb[0].mxu0
        %3781 = vmatprep.mubr.f32.mxu0 0.0
        %3782 = vmatmul.mubr.f32.gmra.mrb[0].mxu0 %v981
        %v3783 = vpop.f32.mrb[0].mxu0
        %v3784 = vadd.f32 %v3559, %v3783
        %v3785 = vpop.f32.mrb[0].mxu0
        %3786 = vmatprep.mubr.f32.mxu0 0.0
        %3787 = vmatmul.mubr.f32.gmra.mrb[0].mxu0 %v983
        %v3788 = vpop.f32.mrb[0].mxu0
        %v3789 = vadd.f32 %v3564, %v3788
        %v3790 = vpop.f32.mrb[0].mxu0
        %3791 = vmatprep.mubr.f32.mxu0 0.0
        %3792 = vmatmul.mubr.f32.gmra.mrb[0].mxu0 %v985
        %v3793 = vpop.f32.mrb[0].mxu0
        %v3794 = vadd.f32 %v3569, %v3793
        %v3795 = vpop.f32.mrb[0].mxu0
        %3796 = vmatprep.mubr.f32.mxu0 0.0
        %3797 = vmatmul.mubr.f32.gmra.mrb[0].mxu0 %v987
        %v3798 = vpop.f32.mrb[0].mxu0
        %v3799 = vadd.f32 %v3574, %v3798
        %v3800 = vpop.f32.mrb[0].mxu0
        %3801 = vmatprep.mubr.f32.mxu0 0.0
        %3802 = vmatmul.mubr.f32.gmra.mrb[0].mxu0 %v989
        %v3803 = vpop.f32.mrb[0].mxu0
        %v3804 = vadd.f32 %v3579, %v3803
        %v3805 = vpop.f32.mrb[0].mxu0
        %3806 = vmatprep.mubr.f32.mxu0 0.0
        %3807 = vmatmul.mubr.f32.gmra.mrb[0].mxu0 %v991
        %v3808 = vpop.f32.mrb[0].mxu0
        %v3809 = vadd.f32 %v3584, %v3808
        %v3810 = vpop.f32.mrb[0].mxu0
        %3811 = vmatprep.mubr.f32.mxu0 0.0
        %3812 = vmatmul.mubr.f32.gmra.mrb[0].mxu0 %v993
        %v3813 = vpop.f32.mrb[0].mxu0
        %v3814 = vadd.f32 %v3589, %v3813
        %v3815 = vpop.f32.mrb[0].mxu0
        %3816 = vmatprep.mubr.f32.mxu0 0.0
        %3817 = vmatmul.mubr.f32.gmra.mrb[0].mxu0 %v995
        %v3818 = vpop.f32.mrb[0].mxu0
        %v3819 = vadd.f32 %v3594, %v3818
        %v3820 = vpop.f32.mrb[0].mxu0
        %3821 = vmatprep.mubr.f32.mxu0 0.0
        %3822 = vmatmul.mubr.f32.gmra.mrb[0].mxu0 %v997
        %v3823 = vpop.f32.mrb[0].mxu0
        %v3824 = vadd.f32 %v3599, %v3823
        %v3825 = vpop.f32.mrb[0].mxu0
        %3826 = vmatprep.mubr.f32.mxu0 0.0
        %3827 = vmatmul.mubr.f32.gmra.mrb[0].mxu0 %v999
        %v3828 = vpop.f32.mrb[0].mxu0
        %v3829 = vadd.f32 %v3604, %v3828
        %v3830 = vpop.f32.mrb[0].mxu0
        %3831 = vmatprep.mubr.f32.mxu0 0.0
        %3832 = vmatmul.mubr.f32.gmra.mrb[0].mxu0 %v1001
        %v3833 = vpop.f32.mrb[0].mxu0
        %v3834 = vadd.f32 %v3609, %v3833
        %v3835 = vpop.f32.mrb[0].mxu0
        %3836 = vmatprep.mubr.f32.mxu0 0.0
        %3837 = vmatmul.mubr.f32.gmra.mrb[0].mxu0 %v1003
        %v3838 = vpop.f32.mrb[0].mxu0
        %v3839 = vadd.f32 %v3614, %v3838
        %v3840 = vpop.f32.mrb[0].mxu0
        %3841 = vmatprep.mubr.f32.mxu0 0.0
        %3842 = vmatmul.mubr.f32.gmra.mrb[0].mxu0 %v1005
        %v3843 = vpop.f32.mrb[0].mxu0
        %v3844 = vadd.f32 %v3619, %v3843
        %v3845 = vpop.f32.mrb[0].mxu0
        %3846 = vmatprep.mubr.f32.mxu0 0.0
        %3847 = vmatmul.mubr.f32.gmra.mrb[0].mxu0 %v1007
        %v3848 = vpop.f32.mrb[0].mxu0
        %v3849 = vadd.f32 %v3624, %v3848
        %v3850 = vpop.f32.mrb[0].mxu0
        %3851 = vmatprep.mubr.f32.mxu0 0.0
        %3852 = vmatmul.mubr.f32.gmra.mrb[0].mxu0 %v1009
        %v3853 = vpop.f32.mrb[0].mxu0
        %v3854 = vadd.f32 %v3629, %v3853
        %v3855 = vpop.f32.mrb[0].mxu0
        %3856 = vmatprep.mubr.f32.mxu0 0.0
        %3857 = vmatmul.mubr.f32.gmra.mrb[0].mxu0 %v1011
        %v3858 = vpop.f32.mrb[0].mxu0
        %v3859 = vadd.f32 %v3634, %v3858
        %v3860 = vpop.f32.mrb[0].mxu0
        %3861 = vmatprep.mubr.f32.mxu0 0.0
        %3862 = vmatmul.mubr.f32.gmra.mrb[0].mxu0 %v1013
        %v3863 = vpop.f32.mrb[0].mxu0
        %v3864 = vadd.f32 %v3639, %v3863
        %v3865 = vpop.f32.mrb[0].mxu0
        %3866 = vmatprep.mubr.f32.mxu0 0.0
        %3867 = vmatmul.mubr.f32.gmra.mrb[0].mxu0 %v1015
        %v3868 = vpop.f32.mrb[0].mxu0
        %v3869 = vadd.f32 %v3644, %v3868
        %v3870 = vpop.f32.mrb[0].mxu0
        %3871 = vmatprep.mubr.f32.mxu0 0.0
        %3872 = vmatmul.mubr.f32.gmra.mrb[0].mxu0 %v1017
        %v3873 = vpop.f32.mrb[0].mxu0
        %v3874 = vadd.f32 %v3649, %v3873
        %v3875 = vpop.f32.mrb[0].mxu0
        %3876 = vmatprep.mubr.f32.mxu0 0.0
        %3877 = vmatmul.mubr.f32.gmra.mrb[0].mxu0 %v1019
        %v3878 = vpop.f32.mrb[0].mxu0
        %v3879 = vadd.f32 %v3654, %v3878
        %v3880 = vpop.f32.mrb[0].mxu0
        %3881 = vmatprep.mubr.f32.mxu0 0.0
        %3882 = vmatmul.mubr.f32.gmra.mrb[0].mxu0 %v1021
        %v3883 = vpop.f32.mrb[0].mxu0
        %v3884 = vadd.f32 %v3659, %v3883
        %v3885 = vpop.f32.mrb[0].mxu0
        %3886 = vmatprep.mubr.f32.mxu0 0.0
        %3887 = vmatmul.mubr.f32.gmra.mrb[0].mxu0 %v1023
        %v3888 = vpop.f32.mrb[0].mxu0
        %v3889 = vadd.f32 %v3664, %v3888
        %v3890 = vpop.f32.mrb[0].mxu0
        %3891 = vmatprep.mubr.f32.mxu0 0.0
        %3892 = vmatmul.mubr.f32.gmra.mrb[0].mxu0 %v1025
        %v3893 = vpop.f32.mrb[0].mxu0
        %v3894 = vadd.f32 %v3669, %v3893
        %v3895 = vpop.f32.mrb[0].mxu0
        %3896 = vmatprep.mubr.f32.mxu0 0.0
        %3897 = vmatmul.mubr.f32.gmra.mrb[0].mxu0 %v1027
        %v3898 = vpop.f32.mrb[0].mxu0
        %v3899 = vadd.f32 %v3674, %v3898
        %v3900 = vpop.f32.mrb[0].mxu0
        %3901 = vmatprep.mubr.f32.mxu0 0.0
        %3902 = vmatmul.mubr.f32.gmra.mrb[0].mxu0 %v1029
        %v3903 = vpop.f32.mrb[0].mxu0
        %v3904 = vadd.f32 %v3679, %v3903
        %v3905 = vpop.f32.mrb[0].mxu0
        %3906 = vmatprep.mubr.f32.mxu0 0.0
        %3907 = vmatmul.mubr.f32.gmra.mrb[0].mxu0 %v1031
        %v3908 = vpop.f32.mrb[0].mxu0
        %v3909 = vadd.f32 %v3684, %v3908
        %v3910 = vpop.f32.mrb[0].mxu0
        %3911 = vmatprep.mubr.f32.mxu0 0.0
        %3912 = vmatmul.mubr.f32.gmra.mrb[0].mxu0 %v1034
        %v3913 = vpop.f32.mrb[0].mxu0
        %v3914 = vadd.f32 %v3689, %v3913
        %v3915 = vpop.f32.mrb[0].mxu0
        %3916 = vmatprep.mubr.f32.mxu0 0.0
        %3917 = vmatmul.mubr.f32.gmra.mrb[0].mxu0 %v1037
        %v3918 = vpop.f32.mrb[0].mxu0
        %v3919 = vadd.f32 %v3694, %v3918
        %v3920 = vpop.f32.mrb[0].mxu0
        %3921 = vmatprep.mubr.f32.mxu0 0.0
        %3922 = vmatmul.mubr.f32.gmra.mrb[0].mxu0 %v3477
        %v3923 = vpop.f32.mrb[0].mxu0
        %v3924 = vadd.f32 %v3699, %v3923
        %v3925 = vpop.f32.mrb[0].mxu0
        %3926 = vmatprep.mubr.f32.mxu0 0.0
        %3927 = vmatmul.mubr.f32.gmra.mrb[0].mxu0 %v3480
        %v3928 = vpop.f32.mrb[0].mxu0
        %v3929 = vadd.f32 %v3704, %v3928
        %v3930 = vpop.f32.mrb[0].mxu0
        %3931 = vdwg.mxu0
        %v3932 = vadd.f32 %v3259, %v3774
        %v3933 = vadd.f32 %v3264, %v3779
        %v3934 = vadd.f32 %v3269, %v3784
        %v3935 = vadd.f32 %v3274, %v3789
        %v3936 = vadd.f32 %v3279, %v3794
        %v3937 = vadd.f32 %v3284, %v3799
        %v3938 = vadd.f32 %v3289, %v3804
        %v3939 = vadd.f32 %v3294, %v3809
        %v3940 = vadd.f32 %v3299, %v3814
        %v3941 = vadd.f32 %v3304, %v3819
        %v3942 = vadd.f32 %v3309, %v3824
        %v3943 = vadd.f32 %v3314, %v3829
        %v3944 = vadd.f32 %v3319, %v3834
        %v3945 = vadd.f32 %v3324, %v3839
        %v3946 = vadd.f32 %v3329, %v3844
        %v3947 = vadd.f32 %v3334, %v3849
        %v3948 = vadd.f32 %v3339, %v3854
        %v3949 = vadd.f32 %v3344, %v3859
        %v3950 = vadd.f32 %v3349, %v3864
        %v3951 = vadd.f32 %v3354, %v3869
        %v3952 = vadd.f32 %v3359, %v3874
        %v3953 = vadd.f32 %v3364, %v3879
        %v3954 = vadd.f32 %v3369, %v3884
        %v3955 = vadd.f32 %v3374, %v3889
        %v3956 = vadd.f32 %v3379, %v3894
        %v3957 = vadd.f32 %v3384, %v3899
        %v3958 = vadd.f32 %v3389, %v3904
        %v3959 = vadd.f32 %v3394, %v3909
        %v3960 = vadd.f32 %v3399, %v3914
        %v3961 = vadd.f32 %v3404, %v3919
        %v3962 = vadd.f32 %v3409, %v3924
        %v3963 = vadd.f32 %v3414, %v3929
        %3966 = vrot.lane.b32.xlu0 %v526, 64
        %v3967 = vpop.permute.xlu0 %3966
        %3968 = vrot.lane.b32.xlu0 %v527, 64
        %v3969 = vpop.permute.xlu0 %3968
        %3972 = vrot.lane.b32.xlu0 %v560, 64
        %v3973 = vpop.permute.xlu0 %3972
        %3974 = vrot.lane.b32.xlu0 %v561, 64
        %v3975 = vpop.permute.xlu0 %3974
        %v3978 = vsel %vm309, %v524, %v3967
        %v3979 = vsel %vm309, %v525, %v3969
        %v3980 = vsel %vm309, %v558, %v3973
        %v3981 = vsel %vm309, %v559, %v3975
        %s3982 = scalar_lea.vmem %s3, 960
        %v3983 = vld [vmem:[%s3982] sm:$0xff]
        %v3984 = vld [vmem:[%s3982 + $0x8] sm:$0xff]
        %v3985 = vld [vmem:[%s3982 + $0x10] sm:$0xff]
        %v3986 = vld [vmem:[%s3982 + $0x18] sm:$0xff]
        %v3987 = vld [vmem:[%s3982 + $0x20] sm:$0xff]
        %v3988 = vld [vmem:[%s3982 + $0x28] sm:$0xff]
        %v3989 = vld [vmem:[%s3982 + $0x30] sm:$0xff]
        %v3990 = vld [vmem:[%s3982 + $0x38] sm:$0xff]
        %v3991 = vld [vmem:[%s3982 + $0x40] sm:$0xff]
        %v3992 = vld [vmem:[%s3982 + $0x48] sm:$0xff]
        %v3993 = vld [vmem:[%s3982 + $0x50] sm:$0xff]
        %v3994 = vld [vmem:[%s3982 + $0x58] sm:$0xff]
        %v3995 = vld [vmem:[%s3982 + $0x60] sm:$0xff]
        %v3996 = vld [vmem:[%s3982 + $0x68] sm:$0xff]
        %v3997 = vld [vmem:[%s3982 + $0x70] sm:$0xff]
        %v3998 = vld [vmem:[%s3982 + $0x78] sm:$0xff]
        %v3999 = vld [vmem:[%s3982 + $0x80] sm:$0xff]
        %v4000 = vld [vmem:[%s3982 + $0x88] sm:$0xff]
        %v4001 = vld [vmem:[%s3982 + $0x90] sm:$0xff]
        %v4002 = vld [vmem:[%s3982 + $0x98] sm:$0xff]
        %v4003 = vld [vmem:[%s3982 + $0xa0] sm:$0xff]
        %v4004 = vld [vmem:[%s3982 + $0xa8] sm:$0xff]
        %v4005 = vld [vmem:[%s3982 + $0xb0] sm:$0xff]
        %v4006 = vld [vmem:[%s3982 + $0xb8] sm:$0xff]
        %v4007 = vld [vmem:[%s3982 + $0xc0] sm:$0xff]
        %v4008 = vld [vmem:[%s3982 + $0xc8] sm:$0xff]
        %v4009 = vld [vmem:[%s3982 + $0xd0] sm:$0xff]
        %v4010 = vld [vmem:[%s3982 + $0xd8] sm:$0xff]
        %v4011 = vld [vmem:[%s3982 + $0xe0] sm:$0xff]
        %v4012 = vld [vmem:[%s3982 + $0xe8] sm:$0xff]
        %v4013 = vld [vmem:[%s3982 + $0xf0] sm:$0xff]
        %v4014 = vld [vmem:[%s3982 + $0xf8] sm:$0xff]
        %v4015 = vld [vmem:[%s3982 + $0x100] sm:$0xff]
        %v4016 = vld [vmem:[%s3982 + $0x108] sm:$0xff]
        %v4017 = vld [vmem:[%s3982 + $0x110] sm:$0xff]
        %v4018 = vld [vmem:[%s3982 + $0x118] sm:$0xff]
        %v4019 = vld [vmem:[%s3982 + $0x120] sm:$0xff]
        %v4020 = vld [vmem:[%s3982 + $0x128] sm:$0xff]
        %v4021 = vld [vmem:[%s3982 + $0x130] sm:$0xff]
        %v4022 = vld [vmem:[%s3982 + $0x138] sm:$0xff]
        %v4024 = vsel %vm309, %v562, 0
        %v4027 = vsel %vm309, %v563, 0
        %4029 = vmatprep.subr.mxu0 0.0
        %4030 = vmatpush1.msra.mxu0 %v3983
        %4031 = vmatprep.subr.mxu0 0.0
        %4032 = vmatpush1.msra.mxu0 %v3984
        %4033 = vmatprep.subr.mxu0 0.0
        %4034 = vmatpush1.msra.mxu0 %v3985
        %4035 = vmatprep.subr.mxu0 0.0
        %4036 = vmatpush1.msra.mxu0 %v3986
        %4037 = vmatprep.subr.mxu0 0.0
        %4038 = vmatpush1.msra.mxu0 %v3987
        %4039 = vmatprep.subr.mxu0 0.0
        %4040 = vmatpush1.msra.mxu0 %v3988
        %4041 = vmatprep.subr.mxu0 0.0
        %4042 = vmatpush1.msra.mxu0 %v3989
        %4043 = vmatprep.subr.mxu0 0.0
        %4044 = vmatpush1.msra.mxu0 %v3990
        %4045 = vmatprep.subr.mxu0 0.0
        %4046 = vmatpush1.msra.mxu0 %v3991
        %4047 = vmatprep.subr.mxu0 0.0
        %4048 = vmatpush1.msra.mxu0 %v3992
        %4049 = vmatprep.subr.mxu0 0.0
        %4050 = vmatpush1.msra.mxu0 %v3993
        %4051 = vmatprep.subr.mxu0 0.0
        %4052 = vmatpush1.msra.mxu0 %v3994
        %4053 = vmatprep.subr.mxu0 0.0
        %4054 = vmatpush1.msra.mxu0 %v3995
        %4055 = vmatprep.subr.mxu0 0.0
        %4056 = vmatpush1.msra.mxu0 %v3996
        %4057 = vmatprep.subr.mxu0 0.0
        %4058 = vmatpush1.msra.mxu0 %v3997
        %4059 = vmatprep.subr.mxu0 0.0
        %4060 = vmatpush1.msra.mxu0 %v3998
        %4061 = vmatprep.subr.mxu0 0.0
        %4062 = vmatpush1.msra.mxu0 %v3999
        %4063 = vmatprep.subr.mxu0 0.0
        %4064 = vmatpush1.msra.mxu0 %v4000
        %4065 = vmatprep.subr.mxu0 0.0
        %4066 = vmatpush1.msra.mxu0 %v4001
        %4067 = vmatprep.subr.mxu0 0.0
        %4068 = vmatpush1.msra.mxu0 %v4002
        %4069 = vmatprep.subr.mxu0 0.0
        %4070 = vmatpush1.msra.mxu0 %v4003
        %4071 = vmatprep.subr.mxu0 0.0
        %4072 = vmatpush1.msra.mxu0 %v4004
        %4073 = vmatprep.subr.mxu0 0.0
        %4074 = vmatpush1.msra.mxu0 %v4005
        %4075 = vmatprep.subr.mxu0 0.0
        %4076 = vmatpush1.msra.mxu0 %v4006
        %4077 = vmatprep.subr.mxu0 0.0
        %4078 = vmatpush1.msra.mxu0 %v4007
        %4079 = vmatprep.subr.mxu0 0.0
        %4080 = vmatpush1.msra.mxu0 %v4008
        %4081 = vmatprep.subr.mxu0 0.0
        %4082 = vmatpush1.msra.mxu0 %v4009
        %4083 = vmatprep.subr.mxu0 0.0
        %4084 = vmatpush1.msra.mxu0 %v4010
        %4085 = vmatprep.subr.mxu0 0.0
        %4086 = vmatpush1.msra.mxu0 %v4011
        %4087 = vmatprep.subr.mxu0 0.0
        %4088 = vmatpush1.msra.mxu0 %v4012
        %4089 = vmatprep.subr.mxu0 0.0
        %4090 = vmatpush1.msra.mxu0 %v4013
        %4091 = vmatprep.subr.mxu0 0.0
        %4092 = vmatpush1.msra.mxu0 %v4014
        %4093 = vmatprep.mubr.f32.mxu0 %v1685
        %4094 = vmatmul.mubr.f32.gmra.mrb[0].mxu0 %v3978
        %v4095 = vpop.f32.mrb[0].mxu0
        %v4096 = vadd.f32 0.0, %v4095
        %v4097 = vpop.f32.mrb[0].mxu0
        %4098 = vmatprep.mubr.f32.mxu0 %v1686
        %4099 = vmatmul.mubr.f32.gmra.mrb[0].mxu0 %v3979
        %v4100 = vpop.f32.mrb[0].mxu0
        %v4101 = vadd.f32 0.0, %v4100
        %v4102 = vpop.f32.mrb[0].mxu0
        %4103 = vmatprep.mubr.f32.mxu0 %v1687
        %4104 = vmatmul.mubr.f32.gmra.mrb[0].mxu0 %v1683
        %v4105 = vpop.f32.mrb[0].mxu0
        %v4106 = vadd.f32 0.0, %v4105
        %v4107 = vpop.f32.mrb[0].mxu0
        %4108 = vmatprep.mubr.f32.mxu0 %v1688
        %4109 = vmatmul.mubr.f32.gmra.mrb[0].mxu0 %v1684
        %v4110 = vpop.f32.mrb[0].mxu0
        %v4111 = vadd.f32 0.0, %v4110
        %v4112 = vpop.f32.mrb[0].mxu0
        %4113 = vmatprep.mubr.f32.mxu0 %v1689
        %4114 = vmatmul.mubr.f32.gmra.mrb[0].mxu0 %v1685
        %v4115 = vpop.f32.mrb[0].mxu0
        %v4116 = vadd.f32 0.0, %v4115
        %v4117 = vpop.f32.mrb[0].mxu0
        %4118 = vmatprep.mubr.f32.mxu0 %v1690
        %4119 = vmatmul.mubr.f32.gmra.mrb[0].mxu0 %v1686
        %v4120 = vpop.f32.mrb[0].mxu0
        %v4121 = vadd.f32 0.0, %v4120
        %v4122 = vpop.f32.mrb[0].mxu0
        %4123 = vmatprep.mubr.f32.mxu0 %v1691
        %4124 = vmatmul.mubr.f32.gmra.mrb[0].mxu0 %v1687
        %v4125 = vpop.f32.mrb[0].mxu0
        %v4126 = vadd.f32 0.0, %v4125
        %v4127 = vpop.f32.mrb[0].mxu0
        %4128 = vmatprep.mubr.f32.mxu0 %v1692
        %4129 = vmatmul.mubr.f32.gmra.mrb[0].mxu0 %v1688
        %v4130 = vpop.f32.mrb[0].mxu0
        %v4131 = vadd.f32 0.0, %v4130
        %v4132 = vpop.f32.mrb[0].mxu0
        %4133 = vmatprep.mubr.f32.mxu0 %v1693
        %4134 = vmatmul.mubr.f32.gmra.mrb[0].mxu0 %v1689
        %v4135 = vpop.f32.mrb[0].mxu0
        %v4136 = vadd.f32 0.0, %v4135
        %v4137 = vpop.f32.mrb[0].mxu0
        %4138 = vmatprep.mubr.f32.mxu0 %v1694
        %4139 = vmatmul.mubr.f32.gmra.mrb[0].mxu0 %v1690
        %v4140 = vpop.f32.mrb[0].mxu0
        %v4141 = vadd.f32 0.0, %v4140
        %v4142 = vpop.f32.mrb[0].mxu0
        %4143 = vmatprep.mubr.f32.mxu0 %v1695
        %4144 = vmatmul.mubr.f32.gmra.mrb[0].mxu0 %v1691
        %v4145 = vpop.f32.mrb[0].mxu0
        %v4146 = vadd.f32 0.0, %v4145
        %v4147 = vpop.f32.mrb[0].mxu0
        %4148 = vmatprep.mubr.f32.mxu0 %v1696
        %4149 = vmatmul.mubr.f32.gmra.mrb[0].mxu0 %v1692
        %v4150 = vpop.f32.mrb[0].mxu0
        %v4151 = vadd.f32 0.0, %v4150
        %v4152 = vpop.f32.mrb[0].mxu0
        %4153 = vmatprep.mubr.f32.mxu0 %v1697
        %4154 = vmatmul.mubr.f32.gmra.mrb[0].mxu0 %v1693
        %v4155 = vpop.f32.mrb[0].mxu0
        %v4156 = vadd.f32 0.0, %v4155
        %v4157 = vpop.f32.mrb[0].mxu0
        %4158 = vmatprep.mubr.f32.mxu0 %v1698
        %4159 = vmatmul.mubr.f32.gmra.mrb[0].mxu0 %v1694
        %v4160 = vpop.f32.mrb[0].mxu0
        %v4161 = vadd.f32 0.0, %v4160
        %v4162 = vpop.f32.mrb[0].mxu0
        %4163 = vmatprep.mubr.f32.mxu0 %v1699
        %4164 = vmatmul.mubr.f32.gmra.mrb[0].mxu0 %v1695
        %v4165 = vpop.f32.mrb[0].mxu0
        %v4166 = vadd.f32 0.0, %v4165
        %v4167 = vpop.f32.mrb[0].mxu0
        %4168 = vmatprep.mubr.f32.mxu0 %v1700
        %4169 = vmatmul.mubr.f32.gmra.mrb[0].mxu0 %v1696
        %v4170 = vpop.f32.mrb[0].mxu0
        %v4171 = vadd.f32 0.0, %v4170
        %v4172 = vpop.f32.mrb[0].mxu0
        %4173 = vmatprep.mubr.f32.mxu0 %v1701
        %4174 = vmatmul.mubr.f32.gmra.mrb[0].mxu0 %v1697
        %v4175 = vpop.f32.mrb[0].mxu0
        %v4176 = vadd.f32 0.0, %v4175
        %v4177 = vpop.f32.mrb[0].mxu0
        %4178 = vmatprep.mubr.f32.mxu0 %v1702
        %4179 = vmatmul.mubr.f32.gmra.mrb[0].mxu0 %v1698
        %v4180 = vpop.f32.mrb[0].mxu0
        %v4181 = vadd.f32 0.0, %v4180
        %v4182 = vpop.f32.mrb[0].mxu0
        %4183 = vmatprep.mubr.f32.mxu0 %v1703
        %4184 = vmatmul.mubr.f32.gmra.mrb[0].mxu0 %v1699
        %v4185 = vpop.f32.mrb[0].mxu0
        %v4186 = vadd.f32 0.0, %v4185
        %v4187 = vpop.f32.mrb[0].mxu0
        %4188 = vmatprep.mubr.f32.mxu0 %v1704
        %4189 = vmatmul.mubr.f32.gmra.mrb[0].mxu0 %v1700
        %v4190 = vpop.f32.mrb[0].mxu0
        %v4191 = vadd.f32 0.0, %v4190
        %v4192 = vpop.f32.mrb[0].mxu0
        %4193 = vmatprep.mubr.f32.mxu0 %v1705
        %4194 = vmatmul.mubr.f32.gmra.mrb[0].mxu0 %v1701
        %v4195 = vpop.f32.mrb[0].mxu0
        %v4196 = vadd.f32 0.0, %v4195
        %v4197 = vpop.f32.mrb[0].mxu0
        %4198 = vmatprep.mubr.f32.mxu0 %v1706
        %4199 = vmatmul.mubr.f32.gmra.mrb[0].mxu0 %v1702
        %v4200 = vpop.f32.mrb[0].mxu0
        %v4201 = vadd.f32 0.0, %v4200
        %v4202 = vpop.f32.mrb[0].mxu0
        %4203 = vmatprep.mubr.f32.mxu0 %v1707
        %4204 = vmatmul.mubr.f32.gmra.mrb[0].mxu0 %v1703
        %v4205 = vpop.f32.mrb[0].mxu0
        %v4206 = vadd.f32 0.0, %v4205
        %v4207 = vpop.f32.mrb[0].mxu0
        %4208 = vmatprep.mubr.f32.mxu0 %v1708
        %4209 = vmatmul.mubr.f32.gmra.mrb[0].mxu0 %v1704
        %v4210 = vpop.f32.mrb[0].mxu0
        %v4211 = vadd.f32 0.0, %v4210
        %v4212 = vpop.f32.mrb[0].mxu0
        %4213 = vmatprep.mubr.f32.mxu0 %v1709
        %4214 = vmatmul.mubr.f32.gmra.mrb[0].mxu0 %v1705
        %v4215 = vpop.f32.mrb[0].mxu0
        %v4216 = vadd.f32 0.0, %v4215
        %v4217 = vpop.f32.mrb[0].mxu0
        %4218 = vmatprep.mubr.f32.mxu0 %v1710
        %4219 = vmatmul.mubr.f32.gmra.mrb[0].mxu0 %v1706
        %v4220 = vpop.f32.mrb[0].mxu0
        %v4221 = vadd.f32 0.0, %v4220
        %v4222 = vpop.f32.mrb[0].mxu0
        %4223 = vmatprep.mubr.f32.mxu0 %v1711
        %4224 = vmatmul.mubr.f32.gmra.mrb[0].mxu0 %v1707
        %v4225 = vpop.f32.mrb[0].mxu0
        %v4226 = vadd.f32 0.0, %v4225
        %v4227 = vpop.f32.mrb[0].mxu0
        %4228 = vmatprep.mubr.f32.mxu0 %v1712
        %4229 = vmatmul.mubr.f32.gmra.mrb[0].mxu0 %v1708
        %v4230 = vpop.f32.mrb[0].mxu0
        %v4231 = vadd.f32 0.0, %v4230
        %v4232 = vpop.f32.mrb[0].mxu0
        %4233 = vmatprep.mubr.f32.mxu0 %v1713
        %4234 = vmatmul.mubr.f32.gmra.mrb[0].mxu0 %v1709
        %v4235 = vpop.f32.mrb[0].mxu0
        %v4236 = vadd.f32 0.0, %v4235
        %v4237 = vpop.f32.mrb[0].mxu0
        %4238 = vmatprep.mubr.f32.mxu0 %v1714
        %4239 = vmatmul.mubr.f32.gmra.mrb[0].mxu0 %v1710
        %v4240 = vpop.f32.mrb[0].mxu0
        %v4241 = vadd.f32 0.0, %v4240
        %v4242 = vpop.f32.mrb[0].mxu0
        %4243 = vmatprep.mubr.f32.mxu0 %v3980
        %4244 = vmatmul.mubr.f32.gmra.mrb[0].mxu0 %v1711
        %v4245 = vpop.f32.mrb[0].mxu0
        %v4246 = vadd.f32 0.0, %v4245
        %v4247 = vpop.f32.mrb[0].mxu0
        %4248 = vmatprep.mubr.f32.mxu0 %v3981
        %4249 = vmatmul.mubr.f32.gmra.mrb[0].mxu0 %v1712
        %v4250 = vpop.f32.mrb[0].mxu0
        %v4251 = vadd.f32 0.0, %v4250
        %v4252 = vpop.f32.mrb[0].mxu0
        %4253 = vdwg.mxu0
        %4254 = vmatprep.subr.mxu0 0.0
        %4255 = vmatpush1.msra.mxu0 %v4015
        %4256 = vmatprep.subr.mxu0 0.0
        %4257 = vmatpush1.msra.mxu0 %v4016
        %4258 = vmatprep.subr.mxu0 0.0
        %4259 = vmatpush1.msra.mxu0 %v4017
        %4260 = vmatprep.subr.mxu0 0.0
        %4261 = vmatpush1.msra.mxu0 %v4018
        %4262 = vmatprep.subr.mxu0 0.0
        %4263 = vmatpush1.msra.mxu0 %v4019
        %4264 = vmatprep.subr.mxu0 0.0
        %4265 = vmatpush1.msra.mxu0 %v4020
        %4266 = vmatprep.subr.mxu0 0.0
        %4267 = vmatpush1.msra.mxu0 %v4021
        %4268 = vmatprep.subr.mxu0 0.0
        %4269 = vmatpush1.msra.mxu0 %v4022
        %4270 = vmatprep.subr.mxu0 0.0
        %4271 = vmatpush1.msra.mxu0 0.0
        %4272 = vmatprep.subr.mxu0 0.0
        %4273 = vmatpush1.msra.mxu0 0.0
        %4274 = vmatprep.subr.mxu0 0.0
        %4275 = vmatpush1.msra.mxu0 0.0
        %4276 = vmatprep.subr.mxu0 0.0
        %4277 = vmatpush1.msra.mxu0 0.0
        %4278 = vmatprep.subr.mxu0 0.0
        %4279 = vmatpush1.msra.mxu0 0.0
        %4280 = vmatprep.subr.mxu0 0.0
        %4281 = vmatpush1.msra.mxu0 0.0
        %4282 = vmatprep.subr.mxu0 0.0
        %4283 = vmatpush1.msra.mxu0 0.0
        %4284 = vmatprep.subr.mxu0 0.0
        %4285 = vmatpush1.msra.mxu0 0.0
        %4286 = vmatprep.subr.mxu0 0.0
        %4287 = vmatpush1.msra.mxu0 0.0
        %4288 = vmatprep.subr.mxu0 0.0
        %4289 = vmatpush1.msra.mxu0 0.0
        %4290 = vmatprep.subr.mxu0 0.0
        %4291 = vmatpush1.msra.mxu0 0.0
        %4292 = vmatprep.subr.mxu0 0.0
        %4293 = vmatpush1.msra.mxu0 0.0
        %4294 = vmatprep.subr.mxu0 0.0
        %4295 = vmatpush1.msra.mxu0 0.0
        %4296 = vmatprep.subr.mxu0 0.0
        %4297 = vmatpush1.msra.mxu0 0.0
        %4298 = vmatprep.subr.mxu0 0.0
        %4299 = vmatpush1.msra.mxu0 0.0
        %4300 = vmatprep.subr.mxu0 0.0
        %4301 = vmatpush1.msra.mxu0 0.0
        %4302 = vmatprep.subr.mxu0 0.0
        %4303 = vmatpush1.msra.mxu0 0.0
        %4304 = vmatprep.subr.mxu0 0.0
        %4305 = vmatpush1.msra.mxu0 0.0
        %4306 = vmatprep.subr.mxu0 0.0
        %4307 = vmatpush1.msra.mxu0 0.0
        %4308 = vmatprep.subr.mxu0 0.0
        %4309 = vmatpush1.msra.mxu0 0.0
        %4310 = vmatprep.subr.mxu0 0.0
        %4311 = vmatpush1.msra.mxu0 0.0
        %4312 = vmatprep.subr.mxu0 0.0
        %4313 = vmatpush1.msra.mxu0 0.0
        %4314 = vmatprep.subr.mxu0 0.0
        %4315 = vmatpush1.msra.mxu0 0.0
        %4316 = vmatprep.subr.mxu0 0.0
        %4317 = vmatpush1.msra.mxu0 0.0
        %4318 = vmatprep.mubr.f32.mxu0 0.0
        %4319 = vmatmul.mubr.f32.gmra.mrb[0].mxu0 %v1744
        %v4320 = vpop.f32.mrb[0].mxu0
        %v4321 = vadd.f32 %v4096, %v4320
        %v4322 = vpop.f32.mrb[0].mxu0
        %4323 = vmatprep.mubr.f32.mxu0 0.0
        %4324 = vmatmul.mubr.f32.gmra.mrb[0].mxu0 %v1746
        %v4325 = vpop.f32.mrb[0].mxu0
        %v4326 = vadd.f32 %v4101, %v4325
        %v4327 = vpop.f32.mrb[0].mxu0
        %4328 = vmatprep.mubr.f32.mxu0 0.0
        %4329 = vmatmul.mubr.f32.gmra.mrb[0].mxu0 %v1748
        %v4330 = vpop.f32.mrb[0].mxu0
        %v4331 = vadd.f32 %v4106, %v4330
        %v4332 = vpop.f32.mrb[0].mxu0
        %4333 = vmatprep.mubr.f32.mxu0 0.0
        %4334 = vmatmul.mubr.f32.gmra.mrb[0].mxu0 %v1750
        %v4335 = vpop.f32.mrb[0].mxu0
        %v4336 = vadd.f32 %v4111, %v4335
        %v4337 = vpop.f32.mrb[0].mxu0
        %4338 = vmatprep.mubr.f32.mxu0 0.0
        %4339 = vmatmul.mubr.f32.gmra.mrb[0].mxu0 %v1752
        %v4340 = vpop.f32.mrb[0].mxu0
        %v4341 = vadd.f32 %v4116, %v4340
        %v4342 = vpop.f32.mrb[0].mxu0
        %4343 = vmatprep.mubr.f32.mxu0 0.0
        %4344 = vmatmul.mubr.f32.gmra.mrb[0].mxu0 %v1754
        %v4345 = vpop.f32.mrb[0].mxu0
        %v4346 = vadd.f32 %v4121, %v4345
        %v4347 = vpop.f32.mrb[0].mxu0
        %4348 = vmatprep.mubr.f32.mxu0 0.0
        %4349 = vmatmul.mubr.f32.gmra.mrb[0].mxu0 %v1756
        %v4350 = vpop.f32.mrb[0].mxu0
        %v4351 = vadd.f32 %v4126, %v4350
        %v4352 = vpop.f32.mrb[0].mxu0
        %4353 = vmatprep.mubr.f32.mxu0 0.0
        %4354 = vmatmul.mubr.f32.gmra.mrb[0].mxu0 %v1758
        %v4355 = vpop.f32.mrb[0].mxu0
        %v4356 = vadd.f32 %v4131, %v4355
        %v4357 = vpop.f32.mrb[0].mxu0
        %4358 = vmatprep.mubr.f32.mxu0 0.0
        %4359 = vmatmul.mubr.f32.gmra.mrb[0].mxu0 %v1760
        %v4360 = vpop.f32.mrb[0].mxu0
        %v4361 = vadd.f32 %v4136, %v4360
        %v4362 = vpop.f32.mrb[0].mxu0
        %4363 = vmatprep.mubr.f32.mxu0 0.0
        %4364 = vmatmul.mubr.f32.gmra.mrb[0].mxu0 %v1762
        %v4365 = vpop.f32.mrb[0].mxu0
        %v4366 = vadd.f32 %v4141, %v4365
        %v4367 = vpop.f32.mrb[0].mxu0
        %4368 = vmatprep.mubr.f32.mxu0 0.0
        %4369 = vmatmul.mubr.f32.gmra.mrb[0].mxu0 %v1764
        %v4370 = vpop.f32.mrb[0].mxu0
        %v4371 = vadd.f32 %v4146, %v4370
        %v4372 = vpop.f32.mrb[0].mxu0
        %4373 = vmatprep.mubr.f32.mxu0 0.0
        %4374 = vmatmul.mubr.f32.gmra.mrb[0].mxu0 %v1766
        %v4375 = vpop.f32.mrb[0].mxu0
        %v4376 = vadd.f32 %v4151, %v4375
        %v4377 = vpop.f32.mrb[0].mxu0
        %4378 = vmatprep.mubr.f32.mxu0 0.0
        %4379 = vmatmul.mubr.f32.gmra.mrb[0].mxu0 %v1768
        %v4380 = vpop.f32.mrb[0].mxu0
        %v4381 = vadd.f32 %v4156, %v4380
        %v4382 = vpop.f32.mrb[0].mxu0
        %4383 = vmatprep.mubr.f32.mxu0 0.0
        %4384 = vmatmul.mubr.f32.gmra.mrb[0].mxu0 %v1770
        %v4385 = vpop.f32.mrb[0].mxu0
        %v4386 = vadd.f32 %v4161, %v4385
        %v4387 = vpop.f32.mrb[0].mxu0
        %4388 = vmatprep.mubr.f32.mxu0 0.0
        %4389 = vmatmul.mubr.f32.gmra.mrb[0].mxu0 %v1772
        %v4390 = vpop.f32.mrb[0].mxu0
        %v4391 = vadd.f32 %v4166, %v4390
        %v4392 = vpop.f32.mrb[0].mxu0
        %4393 = vmatprep.mubr.f32.mxu0 0.0
        %4394 = vmatmul.mubr.f32.gmra.mrb[0].mxu0 %v1774
        %v4395 = vpop.f32.mrb[0].mxu0
        %v4396 = vadd.f32 %v4171, %v4395
        %v4397 = vpop.f32.mrb[0].mxu0
        %4398 = vmatprep.mubr.f32.mxu0 0.0
        %4399 = vmatmul.mubr.f32.gmra.mrb[0].mxu0 %v1776
        %v4400 = vpop.f32.mrb[0].mxu0
        %v4401 = vadd.f32 %v4176, %v4400
        %v4402 = vpop.f32.mrb[0].mxu0
        %4403 = vmatprep.mubr.f32.mxu0 0.0
        %4404 = vmatmul.mubr.f32.gmra.mrb[0].mxu0 %v1778
        %v4405 = vpop.f32.mrb[0].mxu0
        %v4406 = vadd.f32 %v4181, %v4405
        %v4407 = vpop.f32.mrb[0].mxu0
        %4408 = vmatprep.mubr.f32.mxu0 0.0
        %4409 = vmatmul.mubr.f32.gmra.mrb[0].mxu0 %v1780
        %v4410 = vpop.f32.mrb[0].mxu0
        %v4411 = vadd.f32 %v4186, %v4410
        %v4412 = vpop.f32.mrb[0].mxu0
        %4413 = vmatprep.mubr.f32.mxu0 0.0
        %4414 = vmatmul.mubr.f32.gmra.mrb[0].mxu0 %v1782
        %v4415 = vpop.f32.mrb[0].mxu0
        %v4416 = vadd.f32 %v4191, %v4415
        %v4417 = vpop.f32.mrb[0].mxu0
        %4418 = vmatprep.mubr.f32.mxu0 0.0
        %4419 = vmatmul.mubr.f32.gmra.mrb[0].mxu0 %v1784
        %v4420 = vpop.f32.mrb[0].mxu0
        %v4421 = vadd.f32 %v4196, %v4420
        %v4422 = vpop.f32.mrb[0].mxu0
        %4423 = vmatprep.mubr.f32.mxu0 0.0
        %4424 = vmatmul.mubr.f32.gmra.mrb[0].mxu0 %v1786
        %v4425 = vpop.f32.mrb[0].mxu0
        %v4426 = vadd.f32 %v4201, %v4425
        %v4427 = vpop.f32.mrb[0].mxu0
        %4428 = vmatprep.mubr.f32.mxu0 0.0
        %4429 = vmatmul.mubr.f32.gmra.mrb[0].mxu0 %v1788
        %v4430 = vpop.f32.mrb[0].mxu0
        %v4431 = vadd.f32 %v4206, %v4430
        %v4432 = vpop.f32.mrb[0].mxu0
        %4433 = vmatprep.mubr.f32.mxu0 0.0
        %4434 = vmatmul.mubr.f32.gmra.mrb[0].mxu0 %v1790
        %v4435 = vpop.f32.mrb[0].mxu0
        %v4436 = vadd.f32 %v4211, %v4435
        %v4437 = vpop.f32.mrb[0].mxu0
        %4438 = vmatprep.mubr.f32.mxu0 0.0
        %4439 = vmatmul.mubr.f32.gmra.mrb[0].mxu0 %v1792
        %v4440 = vpop.f32.mrb[0].mxu0
        %v4441 = vadd.f32 %v4216, %v4440
        %v4442 = vpop.f32.mrb[0].mxu0
        %4443 = vmatprep.mubr.f32.mxu0 0.0
        %4444 = vmatmul.mubr.f32.gmra.mrb[0].mxu0 %v1794
        %v4445 = vpop.f32.mrb[0].mxu0
        %v4446 = vadd.f32 %v4221, %v4445
        %v4447 = vpop.f32.mrb[0].mxu0
        %4448 = vmatprep.mubr.f32.mxu0 0.0
        %4449 = vmatmul.mubr.f32.gmra.mrb[0].mxu0 %v1796
        %v4450 = vpop.f32.mrb[0].mxu0
        %v4451 = vadd.f32 %v4226, %v4450
        %v4452 = vpop.f32.mrb[0].mxu0
        %4453 = vmatprep.mubr.f32.mxu0 0.0
        %4454 = vmatmul.mubr.f32.gmra.mrb[0].mxu0 %v1798
        %v4455 = vpop.f32.mrb[0].mxu0
        %v4456 = vadd.f32 %v4231, %v4455
        %v4457 = vpop.f32.mrb[0].mxu0
        %4458 = vmatprep.mubr.f32.mxu0 0.0
        %4459 = vmatmul.mubr.f32.gmra.mrb[0].mxu0 %v1801
        %v4460 = vpop.f32.mrb[0].mxu0
        %v4461 = vadd.f32 %v4236, %v4460
        %v4462 = vpop.f32.mrb[0].mxu0
        %4463 = vmatprep.mubr.f32.mxu0 0.0
        %4464 = vmatmul.mubr.f32.gmra.mrb[0].mxu0 %v1804
        %v4465 = vpop.f32.mrb[0].mxu0
        %v4466 = vadd.f32 %v4241, %v4465
        %v4467 = vpop.f32.mrb[0].mxu0
        %4468 = vmatprep.mubr.f32.mxu0 0.0
        %4469 = vmatmul.mubr.f32.gmra.mrb[0].mxu0 %v4024
        %v4470 = vpop.f32.mrb[0].mxu0
        %v4471 = vadd.f32 %v4246, %v4470
        %v4472 = vpop.f32.mrb[0].mxu0
        %4473 = vmatprep.mubr.f32.mxu0 0.0
        %4474 = vmatmul.mubr.f32.gmra.mrb[0].mxu0 %v4027
        %v4475 = vpop.f32.mrb[0].mxu0
        %v4476 = vadd.f32 %v4251, %v4475
        %v4477 = vpop.f32.mrb[0].mxu0
        %4478 = vdwg.mxu0
        %v4479 = vadd.f32 %v3932, %v4321
        %v4480 = vadd.f32 %v3933, %v4326
        %v4481 = vadd.f32 %v3934, %v4331
        %v4482 = vadd.f32 %v3935, %v4336
        %v4483 = vadd.f32 %v3936, %v4341
        %v4484 = vadd.f32 %v3937, %v4346
        %v4485 = vadd.f32 %v3938, %v4351
        %v4486 = vadd.f32 %v3939, %v4356
        %v4487 = vadd.f32 %v3940, %v4361
        %v4488 = vadd.f32 %v3941, %v4366
        %v4489 = vadd.f32 %v3942, %v4371
        %v4490 = vadd.f32 %v3943, %v4376
        %v4491 = vadd.f32 %v3944, %v4381
        %v4492 = vadd.f32 %v3945, %v4386
        %v4493 = vadd.f32 %v3946, %v4391
        %v4494 = vadd.f32 %v3947, %v4396
        %v4495 = vadd.f32 %v3948, %v4401
        %v4496 = vadd.f32 %v3949, %v4406
        %v4497 = vadd.f32 %v3950, %v4411
        %v4498 = vadd.f32 %v3951, %v4416
        %v4499 = vadd.f32 %v3952, %v4421
        %v4500 = vadd.f32 %v3953, %v4426
        %v4501 = vadd.f32 %v3954, %v4431
        %v4502 = vadd.f32 %v3955, %v4436
        %v4503 = vadd.f32 %v3956, %v4441
        %v4504 = vadd.f32 %v3957, %v4446
        %v4505 = vadd.f32 %v3958, %v4451
        %v4506 = vadd.f32 %v3959, %v4456
        %v4507 = vadd.f32 %v3960, %v4461
        %v4508 = vadd.f32 %v3961, %v4466
        %v4509 = vadd.f32 %v3962, %v4471
        %v4510 = vadd.f32 %v3963, %v4476
        %4543 = vrot.lane.b32.xlu0 %v566, 64
        %v4544 = vpop.permute.xlu0 %4543
        %4545 = vrot.lane.b32.xlu0 %v567, 64
        %v4546 = vpop.permute.xlu0 %4545
        %4547 = vrot.lane.b32.xlu0 %v568, 64
        %v4548 = vpop.permute.xlu0 %4547
        %4549 = vrot.lane.b32.xlu0 %v569, 64
        %v4550 = vpop.permute.xlu0 %4549
        %4551 = vrot.lane.b32.xlu0 %v570, 64
        %v4552 = vpop.permute.xlu0 %4551
        %4553 = vrot.lane.b32.xlu0 %v571, 64
        %v4554 = vpop.permute.xlu0 %4553
        %4555 = vrot.lane.b32.xlu0 %v572, 64
        %v4556 = vpop.permute.xlu0 %4555
        %4557 = vrot.lane.b32.xlu0 %v573, 64
        %v4558 = vpop.permute.xlu0 %4557
        %4559 = vrot.lane.b32.xlu0 %v574, 64
        %v4560 = vpop.permute.xlu0 %4559
        %4561 = vrot.lane.b32.xlu0 %v575, 64
        %v4562 = vpop.permute.xlu0 %4561
        %4563 = vrot.lane.b32.xlu0 %v576, 64
        %v4564 = vpop.permute.xlu0 %4563
        %4565 = vrot.lane.b32.xlu0 %v577, 64
        %v4566 = vpop.permute.xlu0 %4565
        %4567 = vrot.lane.b32.xlu0 %v578, 64
        %v4568 = vpop.permute.xlu0 %4567
        %4569 = vrot.lane.b32.xlu0 %v579, 64
        %v4570 = vpop.permute.xlu0 %4569
        %4571 = vrot.lane.b32.xlu0 %v580, 64
        %v4572 = vpop.permute.xlu0 %4571
        %4573 = vrot.lane.b32.xlu0 %v581, 64
        %v4574 = vpop.permute.xlu0 %4573
        %4575 = vrot.lane.b32.xlu0 %v582, 64
        %v4576 = vpop.permute.xlu0 %4575
        %4577 = vrot.lane.b32.xlu0 %v583, 64
        %v4578 = vpop.permute.xlu0 %4577
        %4579 = vrot.lane.b32.xlu0 %v584, 64
        %v4580 = vpop.permute.xlu0 %4579
        %4581 = vrot.lane.b32.xlu0 %v585, 64
        %v4582 = vpop.permute.xlu0 %4581
        %4583 = vrot.lane.b32.xlu0 %v586, 64
        %v4584 = vpop.permute.xlu0 %4583
        %4585 = vrot.lane.b32.xlu0 %v587, 64
        %v4586 = vpop.permute.xlu0 %4585
        %4587 = vrot.lane.b32.xlu0 %v588, 64
        %v4588 = vpop.permute.xlu0 %4587
        %4589 = vrot.lane.b32.xlu0 %v589, 64
        %v4590 = vpop.permute.xlu0 %4589
        %4591 = vrot.lane.b32.xlu0 %v590, 64
        %v4592 = vpop.permute.xlu0 %4591
        %4593 = vrot.lane.b32.xlu0 %v591, 64
        %v4594 = vpop.permute.xlu0 %4593
        %4595 = vrot.lane.b32.xlu0 %v592, 64
        %v4596 = vpop.permute.xlu0 %4595
        %4597 = vrot.lane.b32.xlu0 %v593, 64
        %v4598 = vpop.permute.xlu0 %4597
        %4599 = vrot.lane.b32.xlu0 %v594, 64
        %v4600 = vpop.permute.xlu0 %4599
        %4601 = vrot.lane.b32.xlu0 %v595, 64
        %v4602 = vpop.permute.xlu0 %4601
        %4603 = vrot.lane.b32.xlu0 %v596, 64
        %v4604 = vpop.permute.xlu0 %4603
        %4605 = vrot.lane.b32.xlu0 %v597, 64
        %v4606 = vpop.permute.xlu0 %4605
        %4643 = vrot.lane.b32.xlu0 %v598, 64
        %v4644 = vpop.permute.xlu0 %4643
        %4645 = vrot.lane.b32.xlu0 %v599, 64
        %v4646 = vpop.permute.xlu0 %4645
        %4647 = vrot.lane.b32.xlu0 %v600, 64
        %v4648 = vpop.permute.xlu0 %4647
        %4649 = vrot.lane.b32.xlu0 %v601, 64
        %v4650 = vpop.permute.xlu0 %4649
        %v4655 = vsel %vm309, %v564, %v4544
        %v4656 = vsel %vm309, %v565, %v4546
        %v4657 = vsel %vm309, %v566, %v4548
        %v4658 = vsel %vm309, %v567, %v4550
        %v4659 = vsel %vm309, %v568, %v4552
        %v4660 = vsel %vm309, %v569, %v4554
        %v4661 = vsel %vm309, %v570, %v4556
        %v4662 = vsel %vm309, %v571, %v4558
        %v4663 = vsel %vm309, %v572, %v4560
        %v4664 = vsel %vm309, %v573, %v4562
        %v4665 = vsel %vm309, %v574, %v4564
        %v4666 = vsel %vm309, %v575, %v4566
        %v4667 = vsel %vm309, %v576, %v4568
        %v4668 = vsel %vm309, %v577, %v4570
        %v4669 = vsel %vm309, %v578, %v4572
        %v4670 = vsel %vm309, %v579, %v4574
        %v4671 = vsel %vm309, %v580, %v4576
        %v4672 = vsel %vm309, %v581, %v4578
        %v4673 = vsel %vm309, %v582, %v4580
        %v4674 = vsel %vm309, %v583, %v4582
        %v4675 = vsel %vm309, %v584, %v4584
        %v4676 = vsel %vm309, %v585, %v4586
        %v4677 = vsel %vm309, %v586, %v4588
        %v4678 = vsel %vm309, %v587, %v4590
        %v4679 = vsel %vm309, %v588, %v4592
        %v4680 = vsel %vm309, %v589, %v4594
        %v4681 = vsel %vm309, %v590, %v4596
        %v4682 = vsel %vm309, %v591, %v4598
        %v4683 = vsel %vm309, %v592, %v4600
        %v4684 = vsel %vm309, %v593, %v4602
        %v4685 = vsel %vm309, %v594, %v4604
        %v4686 = vsel %vm309, %v595, %v4606
        %v4687 = vsel %vm309, %v596, %v4644
        %v4688 = vsel %vm309, %v597, %v4646
        %v4689 = vsel %vm309, %v598, %v4648
        %v4690 = vsel %vm309, %v599, %v4650
        %s4691 = scalar_lea.vmem %s3, 1280
        %v4692 = vld [vmem:[%s4691] sm:$0xff]
        %v4693 = vld [vmem:[%s4691 + $0x8] sm:$0xff]
        %v4694 = vld [vmem:[%s4691 + $0x10] sm:$0xff]
        %v4695 = vld [vmem:[%s4691 + $0x18] sm:$0xff]
        %v4696 = vld [vmem:[%s4691 + $0x20] sm:$0xff]
        %v4697 = vld [vmem:[%s4691 + $0x28] sm:$0xff]
        %v4698 = vld [vmem:[%s4691 + $0x30] sm:$0xff]
        %v4699 = vld [vmem:[%s4691 + $0x38] sm:$0xff]
        %v4700 = vld [vmem:[%s4691 + $0x40] sm:$0xff]
        %v4701 = vld [vmem:[%s4691 + $0x48] sm:$0xff]
        %v4702 = vld [vmem:[%s4691 + $0x50] sm:$0xff]
        %v4703 = vld [vmem:[%s4691 + $0x58] sm:$0xff]
        %v4704 = vld [vmem:[%s4691 + $0x60] sm:$0xff]
        %v4705 = vld [vmem:[%s4691 + $0x68] sm:$0xff]
        %v4706 = vld [vmem:[%s4691 + $0x70] sm:$0xff]
        %v4707 = vld [vmem:[%s4691 + $0x78] sm:$0xff]
        %v4708 = vld [vmem:[%s4691 + $0x80] sm:$0xff]
        %v4709 = vld [vmem:[%s4691 + $0x88] sm:$0xff]
        %v4710 = vld [vmem:[%s4691 + $0x90] sm:$0xff]
        %v4711 = vld [vmem:[%s4691 + $0x98] sm:$0xff]
        %v4712 = vld [vmem:[%s4691 + $0xa0] sm:$0xff]
        %v4713 = vld [vmem:[%s4691 + $0xa8] sm:$0xff]
        %v4714 = vld [vmem:[%s4691 + $0xb0] sm:$0xff]
        %v4715 = vld [vmem:[%s4691 + $0xb8] sm:$0xff]
        %v4716 = vld [vmem:[%s4691 + $0xc0] sm:$0xff]
        %v4717 = vld [vmem:[%s4691 + $0xc8] sm:$0xff]
        %v4718 = vld [vmem:[%s4691 + $0xd0] sm:$0xff]
        %v4719 = vld [vmem:[%s4691 + $0xd8] sm:$0xff]
        %v4720 = vld [vmem:[%s4691 + $0xe0] sm:$0xff]
        %v4721 = vld [vmem:[%s4691 + $0xe8] sm:$0xff]
        %v4722 = vld [vmem:[%s4691 + $0xf0] sm:$0xff]
        %v4723 = vld [vmem:[%s4691 + $0xf8] sm:$0xff]
        %v4724 = vld [vmem:[%s4691 + $0x100] sm:$0xff]
        %v4725 = vld [vmem:[%s4691 + $0x108] sm:$0xff]
        %v4726 = vld [vmem:[%s4691 + $0x110] sm:$0xff]
        %v4727 = vld [vmem:[%s4691 + $0x118] sm:$0xff]
        %v4728 = vld [vmem:[%s4691 + $0x120] sm:$0xff]
        %v4729 = vld [vmem:[%s4691 + $0x128] sm:$0xff]
        %v4730 = vld [vmem:[%s4691 + $0x130] sm:$0xff]
        %v4731 = vld [vmem:[%s4691 + $0x138] sm:$0xff]
        %v4732 = vsel %vm309, %v572, 0
        %v4734 = vsel %vm309, %v573, 0
        %v4736 = vsel %vm309, %v574, 0
        %v4738 = vsel %vm309, %v575, 0
        %v4740 = vsel %vm309, %v576, 0
        %v4742 = vsel %vm309, %v577, 0
        %v4744 = vsel %vm309, %v578, 0
        %v4746 = vsel %vm309, %v579, 0
        %v4748 = vsel %vm309, %v580, 0
        %v4750 = vsel %vm309, %v581, 0
        %v4752 = vsel %vm309, %v582, 0
        %v4754 = vsel %vm309, %v583, 0
        %v4756 = vsel %vm309, %v584, 0
        %v4758 = vsel %vm309, %v585, 0
        %v4760 = vsel %vm309, %v586, 0
        %v4762 = vsel %vm309, %v587, 0
        %v4764 = vsel %vm309, %v588, 0
        %v4766 = vsel %vm309, %v589, 0
        %v4768 = vsel %vm309, %v590, 0
        %v4770 = vsel %vm309, %v591, 0
        %v4772 = vsel %vm309, %v592, 0
        %v4774 = vsel %vm309, %v593, 0
        %v4776 = vsel %vm309, %v594, 0
        %v4778 = vsel %vm309, %v595, 0
        %v4780 = vsel %vm309, %v596, 0
        %v4782 = vsel %vm309, %v597, 0
        %v4784 = vsel %vm309, %v598, 0
        %v4786 = vsel %vm309, %v599, 0
        %v4788 = vsel %vm309, %v600, 0
        %v4790 = vsel %vm309, %v601, 0
        %v4793 = vsel %vm309, %v602, 0
        %v4796 = vsel %vm309, %v603, 0
        %4798 = vmatprep.subr.mxu0 0.0
        %4799 = vmatpush1.msra.mxu0 %v4692
        %4800 = vmatprep.subr.mxu0 0.0
        %4801 = vmatpush1.msra.mxu0 %v4693
        %4802 = vmatprep.subr.mxu0 0.0
        %4803 = vmatpush1.msra.mxu0 %v4694
        %4804 = vmatprep.subr.mxu0 0.0
        %4805 = vmatpush1.msra.mxu0 %v4695
        %4806 = vmatprep.subr.mxu0 0.0
        %4807 = vmatpush1.msra.mxu0 %v4696
        %4808 = vmatprep.subr.mxu0 0.0
        %4809 = vmatpush1.msra.mxu0 %v4697
        %4810 = vmatprep.subr.mxu0 0.0
        %4811 = vmatpush1.msra.mxu0 %v4698
        %4812 = vmatprep.subr.mxu0 0.0
        %4813 = vmatpush1.msra.mxu0 %v4699
        %4814 = vmatprep.subr.mxu0 0.0
        %4815 = vmatpush1.msra.mxu0 %v4700
        %4816 = vmatprep.subr.mxu0 0.0
        %4817 = vmatpush1.msra.mxu0 %v4701
        %4818 = vmatprep.subr.mxu0 0.0
        %4819 = vmatpush1.msra.mxu0 %v4702
        %4820 = vmatprep.subr.mxu0 0.0
        %4821 = vmatpush1.msra.mxu0 %v4703
        %4822 = vmatprep.subr.mxu0 0.0
        %4823 = vmatpush1.msra.mxu0 %v4704
        %4824 = vmatprep.subr.mxu0 0.0
        %4825 = vmatpush1.msra.mxu0 %v4705
        %4826 = vmatprep.subr.mxu0 0.0
        %4827 = vmatpush1.msra.mxu0 %v4706
        %4828 = vmatprep.subr.mxu0 0.0
        %4829 = vmatpush1.msra.mxu0 %v4707
        %4830 = vmatprep.subr.mxu0 0.0
        %4831 = vmatpush1.msra.mxu0 %v4708
        %4832 = vmatprep.subr.mxu0 0.0
        %4833 = vmatpush1.msra.mxu0 %v4709
        %4834 = vmatprep.subr.mxu0 0.0
        %4835 = vmatpush1.msra.mxu0 %v4710
        %4836 = vmatprep.subr.mxu0 0.0
        %4837 = vmatpush1.msra.mxu0 %v4711
        %4838 = vmatprep.subr.mxu0 0.0
        %4839 = vmatpush1.msra.mxu0 %v4712
        %4840 = vmatprep.subr.mxu0 0.0
        %4841 = vmatpush1.msra.mxu0 %v4713
        %4842 = vmatprep.subr.mxu0 0.0
        %4843 = vmatpush1.msra.mxu0 %v4714
        %4844 = vmatprep.subr.mxu0 0.0
        %4845 = vmatpush1.msra.mxu0 %v4715
        %4846 = vmatprep.subr.mxu0 0.0
        %4847 = vmatpush1.msra.mxu0 %v4716
        %4848 = vmatprep.subr.mxu0 0.0
        %4849 = vmatpush1.msra.mxu0 %v4717
        %4850 = vmatprep.subr.mxu0 0.0
        %4851 = vmatpush1.msra.mxu0 %v4718
        %4852 = vmatprep.subr.mxu0 0.0
        %4853 = vmatpush1.msra.mxu0 %v4719
        %4854 = vmatprep.subr.mxu0 0.0
        %4855 = vmatpush1.msra.mxu0 %v4720
        %4856 = vmatprep.subr.mxu0 0.0
        %4857 = vmatpush1.msra.mxu0 %v4721
        %4858 = vmatprep.subr.mxu0 0.0
        %4859 = vmatpush1.msra.mxu0 %v4722
        %4860 = vmatprep.subr.mxu0 0.0
        %4861 = vmatpush1.msra.mxu0 %v4723
        %4862 = vmatprep.mubr.f32.mxu0 %v4659
        %4863 = vmatmul.mubr.f32.gmra.mrb[0].mxu0 %v4655
        %v4864 = vpop.f32.mrb[0].mxu0
        %v4865 = vadd.f32 0.0, %v4864
        %v4866 = vpop.f32.mrb[0].mxu0
        %4867 = vmatprep.mubr.f32.mxu0 %v4660
        %4868 = vmatmul.mubr.f32.gmra.mrb[0].mxu0 %v4656
        %v4869 = vpop.f32.mrb[0].mxu0
        %v4870 = vadd.f32 0.0, %v4869
        %v4871 = vpop.f32.mrb[0].mxu0
        %4872 = vmatprep.mubr.f32.mxu0 %v4661
        %4873 = vmatmul.mubr.f32.gmra.mrb[0].mxu0 %v4657
        %v4874 = vpop.f32.mrb[0].mxu0
        %v4875 = vadd.f32 0.0, %v4874
        %v4876 = vpop.f32.mrb[0].mxu0
        %4877 = vmatprep.mubr.f32.mxu0 %v4662
        %4878 = vmatmul.mubr.f32.gmra.mrb[0].mxu0 %v4658
        %v4879 = vpop.f32.mrb[0].mxu0
        %v4880 = vadd.f32 0.0, %v4879
        %v4881 = vpop.f32.mrb[0].mxu0
        %4882 = vmatprep.mubr.f32.mxu0 %v4663
        %4883 = vmatmul.mubr.f32.gmra.mrb[0].mxu0 %v4659
        %v4884 = vpop.f32.mrb[0].mxu0
        %v4885 = vadd.f32 0.0, %v4884
        %v4886 = vpop.f32.mrb[0].mxu0
        %4887 = vmatprep.mubr.f32.mxu0 %v4664
        %4888 = vmatmul.mubr.f32.gmra.mrb[0].mxu0 %v4660
        %v4889 = vpop.f32.mrb[0].mxu0
        %v4890 = vadd.f32 0.0, %v4889
        %v4891 = vpop.f32.mrb[0].mxu0
        %4892 = vmatprep.mubr.f32.mxu0 %v4665
        %4893 = vmatmul.mubr.f32.gmra.mrb[0].mxu0 %v4661
        %v4894 = vpop.f32.mrb[0].mxu0
        %v4895 = vadd.f32 0.0, %v4894
        %v4896 = vpop.f32.mrb[0].mxu0
        %4897 = vmatprep.mubr.f32.mxu0 %v4666
        %4898 = vmatmul.mubr.f32.gmra.mrb[0].mxu0 %v4662
        %v4899 = vpop.f32.mrb[0].mxu0
        %v4900 = vadd.f32 0.0, %v4899
        %v4901 = vpop.f32.mrb[0].mxu0
        %4902 = vmatprep.mubr.f32.mxu0 %v4667
        %4903 = vmatmul.mubr.f32.gmra.mrb[0].mxu0 %v4663
        %v4904 = vpop.f32.mrb[0].mxu0
        %v4905 = vadd.f32 0.0, %v4904
        %v4906 = vpop.f32.mrb[0].mxu0
        %4907 = vmatprep.mubr.f32.mxu0 %v4668
        %4908 = vmatmul.mubr.f32.gmra.mrb[0].mxu0 %v4664
        %v4909 = vpop.f32.mrb[0].mxu0
        %v4910 = vadd.f32 0.0, %v4909
        %v4911 = vpop.f32.mrb[0].mxu0
        %4912 = vmatprep.mubr.f32.mxu0 %v4669
        %4913 = vmatmul.mubr.f32.gmra.mrb[0].mxu0 %v4665
        %v4914 = vpop.f32.mrb[0].mxu0
        %v4915 = vadd.f32 0.0, %v4914
        %v4916 = vpop.f32.mrb[0].mxu0
        %4917 = vmatprep.mubr.f32.mxu0 %v4670
        %4918 = vmatmul.mubr.f32.gmra.mrb[0].mxu0 %v4666
        %v4919 = vpop.f32.mrb[0].mxu0
        %v4920 = vadd.f32 0.0, %v4919
        %v4921 = vpop.f32.mrb[0].mxu0
        %4922 = vmatprep.mubr.f32.mxu0 %v4671
        %4923 = vmatmul.mubr.f32.gmra.mrb[0].mxu0 %v4667
        %v4924 = vpop.f32.mrb[0].mxu0
        %v4925 = vadd.f32 0.0, %v4924
        %v4926 = vpop.f32.mrb[0].mxu0
        %4927 = vmatprep.mubr.f32.mxu0 %v4672
        %4928 = vmatmul.mubr.f32.gmra.mrb[0].mxu0 %v4668
        %v4929 = vpop.f32.mrb[0].mxu0
        %v4930 = vadd.f32 0.0, %v4929
        %v4931 = vpop.f32.mrb[0].mxu0
        %4932 = vmatprep.mubr.f32.mxu0 %v4673
        %4933 = vmatmul.mubr.f32.gmra.mrb[0].mxu0 %v4669
        %v4934 = vpop.f32.mrb[0].mxu0
        %v4935 = vadd.f32 0.0, %v4934
        %v4936 = vpop.f32.mrb[0].mxu0
        %4937 = vmatprep.mubr.f32.mxu0 %v4674
        %4938 = vmatmul.mubr.f32.gmra.mrb[0].mxu0 %v4670
        %v4939 = vpop.f32.mrb[0].mxu0
        %v4940 = vadd.f32 0.0, %v4939
        %v4941 = vpop.f32.mrb[0].mxu0
        %4942 = vmatprep.mubr.f32.mxu0 %v4675
        %4943 = vmatmul.mubr.f32.gmra.mrb[0].mxu0 %v4671
        %v4944 = vpop.f32.mrb[0].mxu0
        %v4945 = vadd.f32 0.0, %v4944
        %v4946 = vpop.f32.mrb[0].mxu0
        %4947 = vmatprep.mubr.f32.mxu0 %v4676
        %4948 = vmatmul.mubr.f32.gmra.mrb[0].mxu0 %v4672
        %v4949 = vpop.f32.mrb[0].mxu0
        %v4950 = vadd.f32 0.0, %v4949
        %v4951 = vpop.f32.mrb[0].mxu0
        %4952 = vmatprep.mubr.f32.mxu0 %v4677
        %4953 = vmatmul.mubr.f32.gmra.mrb[0].mxu0 %v4673
        %v4954 = vpop.f32.mrb[0].mxu0
        %v4955 = vadd.f32 0.0, %v4954
        %v4956 = vpop.f32.mrb[0].mxu0
        %4957 = vmatprep.mubr.f32.mxu0 %v4678
        %4958 = vmatmul.mubr.f32.gmra.mrb[0].mxu0 %v4674
        %v4959 = vpop.f32.mrb[0].mxu0
        %v4960 = vadd.f32 0.0, %v4959
        %v4961 = vpop.f32.mrb[0].mxu0
        %4962 = vmatprep.mubr.f32.mxu0 %v4679
        %4963 = vmatmul.mubr.f32.gmra.mrb[0].mxu0 %v4675
        %v4964 = vpop.f32.mrb[0].mxu0
        %v4965 = vadd.f32 0.0, %v4964
        %v4966 = vpop.f32.mrb[0].mxu0
        %4967 = vmatprep.mubr.f32.mxu0 %v4680
        %4968 = vmatmul.mubr.f32.gmra.mrb[0].mxu0 %v4676
        %v4969 = vpop.f32.mrb[0].mxu0
        %v4970 = vadd.f32 0.0, %v4969
        %v4971 = vpop.f32.mrb[0].mxu0
        %4972 = vmatprep.mubr.f32.mxu0 %v4681
        %4973 = vmatmul.mubr.f32.gmra.mrb[0].mxu0 %v4677
        %v4974 = vpop.f32.mrb[0].mxu0
        %v4975 = vadd.f32 0.0, %v4974
        %v4976 = vpop.f32.mrb[0].mxu0
        %4977 = vmatprep.mubr.f32.mxu0 %v4682
        %4978 = vmatmul.mubr.f32.gmra.mrb[0].mxu0 %v4678
        %v4979 = vpop.f32.mrb[0].mxu0
        %v4980 = vadd.f32 0.0, %v4979
        %v4981 = vpop.f32.mrb[0].mxu0
        %4982 = vmatprep.mubr.f32.mxu0 %v4683
        %4983 = vmatmul.mubr.f32.gmra.mrb[0].mxu0 %v4679
        %v4984 = vpop.f32.mrb[0].mxu0
        %v4985 = vadd.f32 0.0, %v4984
        %v4986 = vpop.f32.mrb[0].mxu0
        %4987 = vmatprep.mubr.f32.mxu0 %v4684
        %4988 = vmatmul.mubr.f32.gmra.mrb[0].mxu0 %v4680
        %v4989 = vpop.f32.mrb[0].mxu0
        %v4990 = vadd.f32 0.0, %v4989
        %v4991 = vpop.f32.mrb[0].mxu0
        %4992 = vmatprep.mubr.f32.mxu0 %v4685
        %4993 = vmatmul.mubr.f32.gmra.mrb[0].mxu0 %v4681
        %v4994 = vpop.f32.mrb[0].mxu0
        %v4995 = vadd.f32 0.0, %v4994
        %v4996 = vpop.f32.mrb[0].mxu0
        %4997 = vmatprep.mubr.f32.mxu0 %v4686
        %4998 = vmatmul.mubr.f32.gmra.mrb[0].mxu0 %v4682
        %v4999 = vpop.f32.mrb[0].mxu0
        %v5000 = vadd.f32 0.0, %v4999
        %v5001 = vpop.f32.mrb[0].mxu0
        %5002 = vmatprep.mubr.f32.mxu0 %v4687
        %5003 = vmatmul.mubr.f32.gmra.mrb[0].mxu0 %v4683
        %v5004 = vpop.f32.mrb[0].mxu0
        %v5005 = vadd.f32 0.0, %v5004
        %v5006 = vpop.f32.mrb[0].mxu0
        %5007 = vmatprep.mubr.f32.mxu0 %v4688
        %5008 = vmatmul.mubr.f32.gmra.mrb[0].mxu0 %v4684
        %v5009 = vpop.f32.mrb[0].mxu0
        %v5010 = vadd.f32 0.0, %v5009
        %v5011 = vpop.f32.mrb[0].mxu0
        %5012 = vmatprep.mubr.f32.mxu0 %v4689
        %5013 = vmatmul.mubr.f32.gmra.mrb[0].mxu0 %v4685
        %v5014 = vpop.f32.mrb[0].mxu0
        %v5015 = vadd.f32 0.0, %v5014
        %v5016 = vpop.f32.mrb[0].mxu0
        %5017 = vmatprep.mubr.f32.mxu0 %v4690
        %5018 = vmatmul.mubr.f32.gmra.mrb[0].mxu0 %v4686
        %v5019 = vpop.f32.mrb[0].mxu0
        %v5020 = vadd.f32 0.0, %v5019
        %v5021 = vpop.f32.mrb[0].mxu0
        %5022 = vdwg.mxu0
        %5023 = vmatprep.subr.mxu0 0.0
        %5024 = vmatpush1.msra.mxu0 %v4724
        %5025 = vmatprep.subr.mxu0 0.0
        %5026 = vmatpush1.msra.mxu0 %v4725
        %5027 = vmatprep.subr.mxu0 0.0
        %5028 = vmatpush1.msra.mxu0 %v4726
        %5029 = vmatprep.subr.mxu0 0.0
        %5030 = vmatpush1.msra.mxu0 %v4727
        %5031 = vmatprep.subr.mxu0 0.0
        %5032 = vmatpush1.msra.mxu0 %v4728
        %5033 = vmatprep.subr.mxu0 0.0
        %5034 = vmatpush1.msra.mxu0 %v4729
        %5035 = vmatprep.subr.mxu0 0.0
        %5036 = vmatpush1.msra.mxu0 %v4730
        %5037 = vmatprep.subr.mxu0 0.0
        %5038 = vmatpush1.msra.mxu0 %v4731
        %5039 = vmatprep.subr.mxu0 0.0
        %5040 = vmatpush1.msra.mxu0 0.0
        %5041 = vmatprep.subr.mxu0 0.0
        %5042 = vmatpush1.msra.mxu0 0.0
        %5043 = vmatprep.subr.mxu0 0.0
        %5044 = vmatpush1.msra.mxu0 0.0
        %5045 = vmatprep.subr.mxu0 0.0
        %5046 = vmatpush1.msra.mxu0 0.0
        %5047 = vmatprep.subr.mxu0 0.0
        %5048 = vmatpush1.msra.mxu0 0.0
        %5049 = vmatprep.subr.mxu0 0.0
        %5050 = vmatpush1.msra.mxu0 0.0
        %5051 = vmatprep.subr.mxu0 0.0
        %5052 = vmatpush1.msra.mxu0 0.0
        %5053 = vmatprep.subr.mxu0 0.0
        %5054 = vmatpush1.msra.mxu0 0.0
        %5055 = vmatprep.subr.mxu0 0.0
        %5056 = vmatpush1.msra.mxu0 0.0
        %5057 = vmatprep.subr.mxu0 0.0
        %5058 = vmatpush1.msra.mxu0 0.0
        %5059 = vmatprep.subr.mxu0 0.0
        %5060 = vmatpush1.msra.mxu0 0.0
        %5061 = vmatprep.subr.mxu0 0.0
        %5062 = vmatpush1.msra.mxu0 0.0
        %5063 = vmatprep.subr.mxu0 0.0
        %5064 = vmatpush1.msra.mxu0 0.0
        %5065 = vmatprep.subr.mxu0 0.0
        %5066 = vmatpush1.msra.mxu0 0.0
        %5067 = vmatprep.subr.mxu0 0.0
        %5068 = vmatpush1.msra.mxu0 0.0
        %5069 = vmatprep.subr.mxu0 0.0
        %5070 = vmatpush1.msra.mxu0 0.0
        %5071 = vmatprep.subr.mxu0 0.0
        %5072 = vmatpush1.msra.mxu0 0.0
        %5073 = vmatprep.subr.mxu0 0.0
        %5074 = vmatpush1.msra.mxu0 0.0
        %5075 = vmatprep.subr.mxu0 0.0
        %5076 = vmatpush1.msra.mxu0 0.0
        %5077 = vmatprep.subr.mxu0 0.0
        %5078 = vmatpush1.msra.mxu0 0.0
        %5079 = vmatprep.subr.mxu0 0.0
        %5080 = vmatpush1.msra.mxu0 0.0
        %5081 = vmatprep.subr.mxu0 0.0
        %5082 = vmatpush1.msra.mxu0 0.0
        %5083 = vmatprep.subr.mxu0 0.0
        %5084 = vmatpush1.msra.mxu0 0.0
        %5085 = vmatprep.subr.mxu0 0.0
        %5086 = vmatpush1.msra.mxu0 0.0
        %5087 = vmatprep.mubr.f32.mxu0 0.0
        %5088 = vmatmul.mubr.f32.gmra.mrb[0].mxu0 %v4732
        %v5089 = vpop.f32.mrb[0].mxu0
        %v5090 = vadd.f32 %v4865, %v5089
        %v5091 = vpop.f32.mrb[0].mxu0
        %5092 = vmatprep.mubr.f32.mxu0 0.0
        %5093 = vmatmul.mubr.f32.gmra.mrb[0].mxu0 %v4734
        %v5094 = vpop.f32.mrb[0].mxu0
        %v5095 = vadd.f32 %v4870, %v5094
        %v5096 = vpop.f32.mrb[0].mxu0
        %5097 = vmatprep.mubr.f32.mxu0 0.0
        %5098 = vmatmul.mubr.f32.gmra.mrb[0].mxu0 %v4736
        %v5099 = vpop.f32.mrb[0].mxu0
        %v5100 = vadd.f32 %v4875, %v5099
        %v5101 = vpop.f32.mrb[0].mxu0
        %5102 = vmatprep.mubr.f32.mxu0 0.0
        %5103 = vmatmul.mubr.f32.gmra.mrb[0].mxu0 %v4738
        %v5104 = vpop.f32.mrb[0].mxu0
        %v5105 = vadd.f32 %v4880, %v5104
        %v5106 = vpop.f32.mrb[0].mxu0
        %5107 = vmatprep.mubr.f32.mxu0 0.0
        %5108 = vmatmul.mubr.f32.gmra.mrb[0].mxu0 %v4740
        %v5109 = vpop.f32.mrb[0].mxu0
        %v5110 = vadd.f32 %v4885, %v5109
        %v5111 = vpop.f32.mrb[0].mxu0
        %5112 = vmatprep.mubr.f32.mxu0 0.0
        %5113 = vmatmul.mubr.f32.gmra.mrb[0].mxu0 %v4742
        %v5114 = vpop.f32.mrb[0].mxu0
        %v5115 = vadd.f32 %v4890, %v5114
        %v5116 = vpop.f32.mrb[0].mxu0
        %5117 = vmatprep.mubr.f32.mxu0 0.0
        %5118 = vmatmul.mubr.f32.gmra.mrb[0].mxu0 %v4744
        %v5119 = vpop.f32.mrb[0].mxu0
        %v5120 = vadd.f32 %v4895, %v5119
        %v5121 = vpop.f32.mrb[0].mxu0
        %5122 = vmatprep.mubr.f32.mxu0 0.0
        %5123 = vmatmul.mubr.f32.gmra.mrb[0].mxu0 %v4746
        %v5124 = vpop.f32.mrb[0].mxu0
        %v5125 = vadd.f32 %v4900, %v5124
        %v5126 = vpop.f32.mrb[0].mxu0
        %5127 = vmatprep.mubr.f32.mxu0 0.0
        %5128 = vmatmul.mubr.f32.gmra.mrb[0].mxu0 %v4748
        %v5129 = vpop.f32.mrb[0].mxu0
        %v5130 = vadd.f32 %v4905, %v5129
        %v5131 = vpop.f32.mrb[0].mxu0
        %5132 = vmatprep.mubr.f32.mxu0 0.0
        %5133 = vmatmul.mubr.f32.gmra.mrb[0].mxu0 %v4750
        %v5134 = vpop.f32.mrb[0].mxu0
        %v5135 = vadd.f32 %v4910, %v5134
        %v5136 = vpop.f32.mrb[0].mxu0
        %5137 = vmatprep.mubr.f32.mxu0 0.0
        %5138 = vmatmul.mubr.f32.gmra.mrb[0].mxu0 %v4752
        %v5139 = vpop.f32.mrb[0].mxu0
        %v5140 = vadd.f32 %v4915, %v5139
        %v5141 = vpop.f32.mrb[0].mxu0
        %5142 = vmatprep.mubr.f32.mxu0 0.0
        %5143 = vmatmul.mubr.f32.gmra.mrb[0].mxu0 %v4754
        %v5144 = vpop.f32.mrb[0].mxu0
        %v5145 = vadd.f32 %v4920, %v5144
        %v5146 = vpop.f32.mrb[0].mxu0
        %5147 = vmatprep.mubr.f32.mxu0 0.0
        %5148 = vmatmul.mubr.f32.gmra.mrb[0].mxu0 %v4756
        %v5149 = vpop.f32.mrb[0].mxu0
        %v5150 = vadd.f32 %v4925, %v5149
        %v5151 = vpop.f32.mrb[0].mxu0
        %5152 = vmatprep.mubr.f32.mxu0 0.0
        %5153 = vmatmul.mubr.f32.gmra.mrb[0].mxu0 %v4758
        %v5154 = vpop.f32.mrb[0].mxu0
        %v5155 = vadd.f32 %v4930, %v5154
        %v5156 = vpop.f32.mrb[0].mxu0
        %5157 = vmatprep.mubr.f32.mxu0 0.0
        %5158 = vmatmul.mubr.f32.gmra.mrb[0].mxu0 %v4760
        %v5159 = vpop.f32.mrb[0].mxu0
        %v5160 = vadd.f32 %v4935, %v5159
        %v5161 = vpop.f32.mrb[0].mxu0
        %5162 = vmatprep.mubr.f32.mxu0 0.0
        %5163 = vmatmul.mubr.f32.gmra.mrb[0].mxu0 %v4762
        %v5164 = vpop.f32.mrb[0].mxu0
        %v5165 = vadd.f32 %v4940, %v5164
        %v5166 = vpop.f32.mrb[0].mxu0
        %5167 = vmatprep.mubr.f32.mxu0 0.0
        %5168 = vmatmul.mubr.f32.gmra.mrb[0].mxu0 %v4764
        %v5169 = vpop.f32.mrb[0].mxu0
        %v5170 = vadd.f32 %v4945, %v5169
        %v5171 = vpop.f32.mrb[0].mxu0
        %5172 = vmatprep.mubr.f32.mxu0 0.0
        %5173 = vmatmul.mubr.f32.gmra.mrb[0].mxu0 %v4766
        %v5174 = vpop.f32.mrb[0].mxu0
        %v5175 = vadd.f32 %v4950, %v5174
        %v5176 = vpop.f32.mrb[0].mxu0
        %5177 = vmatprep.mubr.f32.mxu0 0.0
        %5178 = vmatmul.mubr.f32.gmra.mrb[0].mxu0 %v4768
        %v5179 = vpop.f32.mrb[0].mxu0
        %v5180 = vadd.f32 %v4955, %v5179
        %v5181 = vpop.f32.mrb[0].mxu0
        %5182 = vmatprep.mubr.f32.mxu0 0.0
        %5183 = vmatmul.mubr.f32.gmra.mrb[0].mxu0 %v4770
        %v5184 = vpop.f32.mrb[0].mxu0
        %v5185 = vadd.f32 %v4960, %v5184
        %v5186 = vpop.f32.mrb[0].mxu0
        %5187 = vmatprep.mubr.f32.mxu0 0.0
        %5188 = vmatmul.mubr.f32.gmra.mrb[0].mxu0 %v4772
        %v5189 = vpop.f32.mrb[0].mxu0
        %v5190 = vadd.f32 %v4965, %v5189
        %v5191 = vpop.f32.mrb[0].mxu0
        %5192 = vmatprep.mubr.f32.mxu0 0.0
        %5193 = vmatmul.mubr.f32.gmra.mrb[0].mxu0 %v4774
        %v5194 = vpop.f32.mrb[0].mxu0
        %v5195 = vadd.f32 %v4970, %v5194
        %v5196 = vpop.f32.mrb[0].mxu0
        %5197 = vmatprep.mubr.f32.mxu0 0.0
        %5198 = vmatmul.mubr.f32.gmra.mrb[0].mxu0 %v4776
        %v5199 = vpop.f32.mrb[0].mxu0
        %v5200 = vadd.f32 %v4975, %v5199
        %v5201 = vpop.f32.mrb[0].mxu0
        %5202 = vmatprep.mubr.f32.mxu0 0.0
        %5203 = vmatmul.mubr.f32.gmra.mrb[0].mxu0 %v4778
        %v5204 = vpop.f32.mrb[0].mxu0
        %v5205 = vadd.f32 %v4980, %v5204
        %v5206 = vpop.f32.mrb[0].mxu0
        %5207 = vmatprep.mubr.f32.mxu0 0.0
        %5208 = vmatmul.mubr.f32.gmra.mrb[0].mxu0 %v4780
        %v5209 = vpop.f32.mrb[0].mxu0
        %v5210 = vadd.f32 %v4985, %v5209
        %v5211 = vpop.f32.mrb[0].mxu0
        %5212 = vmatprep.mubr.f32.mxu0 0.0
        %5213 = vmatmul.mubr.f32.gmra.mrb[0].mxu0 %v4782
        %v5214 = vpop.f32.mrb[0].mxu0
        %v5215 = vadd.f32 %v4990, %v5214
        %v5216 = vpop.f32.mrb[0].mxu0
        %5217 = vmatprep.mubr.f32.mxu0 0.0
        %5218 = vmatmul.mubr.f32.gmra.mrb[0].mxu0 %v4784
        %v5219 = vpop.f32.mrb[0].mxu0
        %v5220 = vadd.f32 %v4995, %v5219
        %v5221 = vpop.f32.mrb[0].mxu0
        %5222 = vmatprep.mubr.f32.mxu0 0.0
        %5223 = vmatmul.mubr.f32.gmra.mrb[0].mxu0 %v4786
        %v5224 = vpop.f32.mrb[0].mxu0
        %v5225 = vadd.f32 %v5000, %v5224
        %v5226 = vpop.f32.mrb[0].mxu0
        %5227 = vmatprep.mubr.f32.mxu0 0.0
        %5228 = vmatmul.mubr.f32.gmra.mrb[0].mxu0 %v4788
        %v5229 = vpop.f32.mrb[0].mxu0
        %v5230 = vadd.f32 %v5005, %v5229
        %v5231 = vpop.f32.mrb[0].mxu0
        %5232 = vmatprep.mubr.f32.mxu0 0.0
        %5233 = vmatmul.mubr.f32.gmra.mrb[0].mxu0 %v4790
        %v5234 = vpop.f32.mrb[0].mxu0
        %v5235 = vadd.f32 %v5010, %v5234
        %v5236 = vpop.f32.mrb[0].mxu0
        %5237 = vmatprep.mubr.f32.mxu0 0.0
        %5238 = vmatmul.mubr.f32.gmra.mrb[0].mxu0 %v4793
        %v5239 = vpop.f32.mrb[0].mxu0
        %v5240 = vadd.f32 %v5015, %v5239
        %v5241 = vpop.f32.mrb[0].mxu0
        %5242 = vmatprep.mubr.f32.mxu0 0.0
        %5243 = vmatmul.mubr.f32.gmra.mrb[0].mxu0 %v4796
        %v5244 = vpop.f32.mrb[0].mxu0
        %v5245 = vadd.f32 %v5020, %v5244
        %v5246 = vpop.f32.mrb[0].mxu0
        %5247 = vdwg.mxu0
        %v5248 = vadd.f32 %v4479, %v5090
        %v5249 = vadd.f32 %v4480, %v5095
        %v5250 = vadd.f32 %v4481, %v5100
        %v5251 = vadd.f32 %v4482, %v5105
        %v5252 = vadd.f32 %v4483, %v5110
        %v5253 = vadd.f32 %v4484, %v5115
        %v5254 = vadd.f32 %v4485, %v5120
        %v5255 = vadd.f32 %v4486, %v5125
        %v5256 = vadd.f32 %v4487, %v5130
        %v5257 = vadd.f32 %v4488, %v5135
        %v5258 = vadd.f32 %v4489, %v5140
        %v5259 = vadd.f32 %v4490, %v5145
        %v5260 = vadd.f32 %v4491, %v5150
        %v5261 = vadd.f32 %v4492, %v5155
        %v5262 = vadd.f32 %v4493, %v5160
        %v5263 = vadd.f32 %v4494, %v5165
        %v5264 = vadd.f32 %v4495, %v5170
        %v5265 = vadd.f32 %v4496, %v5175
        %v5266 = vadd.f32 %v4497, %v5180
        %v5267 = vadd.f32 %v4498, %v5185
        %v5268 = vadd.f32 %v4499, %v5190
        %v5269 = vadd.f32 %v4500, %v5195
        %v5270 = vadd.f32 %v4501, %v5200
        %v5271 = vadd.f32 %v4502, %v5205
        %v5272 = vadd.f32 %v4503, %v5210
        %v5273 = vadd.f32 %v4504, %v5215
        %v5274 = vadd.f32 %v4505, %v5220
        %v5275 = vadd.f32 %v4506, %v5225
        %v5276 = vadd.f32 %v4507, %v5230
        %v5277 = vadd.f32 %v4508, %v5235
        %v5278 = vadd.f32 %v4509, %v5240
        %v5279 = vadd.f32 %v4510, %v5245
        %v5280 = vld [vmem:[%s4] sm:$0x1]
        %v5282 = vlaneseq
        %v5283 = vshrl.u32 %v5282, 7
        %v5284 = vsub.s32 0, %v5283
        %v5285 = vrot.slane %v5280, %v5284
        %v5287 = vadd.f32 %v5248, %v5285
        %v5288 = vadd.f32 %v5249, %v5285
        %v5289 = vadd.f32 %v5250, %v5285
        %v5290 = vadd.f32 %v5251, %v5285
        %v5291 = vadd.f32 %v5252, %v5285
        %v5292 = vadd.f32 %v5253, %v5285
        %v5293 = vadd.f32 %v5254, %v5285
        %v5294 = vadd.f32 %v5255, %v5285
        %v5295 = vadd.f32 %v5256, %v5285
        %v5296 = vadd.f32 %v5257, %v5285
        %v5297 = vadd.f32 %v5258, %v5285
        %v5298 = vadd.f32 %v5259, %v5285
        %v5299 = vadd.f32 %v5260, %v5285
        %v5300 = vadd.f32 %v5261, %v5285
        %v5301 = vadd.f32 %v5262, %v5285
        %v5302 = vadd.f32 %v5263, %v5285
        %v5303 = vadd.f32 %v5264, %v5285
        %v5304 = vadd.f32 %v5265, %v5285
        %v5305 = vadd.f32 %v5266, %v5285
        %v5306 = vadd.f32 %v5267, %v5285
        %v5307 = vadd.f32 %v5268, %v5285
        %v5308 = vadd.f32 %v5269, %v5285
        %v5309 = vadd.f32 %v5270, %v5285
        %v5310 = vadd.f32 %v5271, %v5285
        %v5311 = vadd.f32 %v5272, %v5285
        %v5312 = vadd.f32 %v5273, %v5285
        %v5313 = vadd.f32 %v5274, %v5285
        %v5314 = vadd.f32 %v5275, %v5285
        %v5315 = vadd.f32 %v5276, %v5285
        %v5316 = vadd.f32 %v5277, %v5285
        %v5317 = vadd.f32 %v5278, %v5285
        %v5318 = vadd.f32 %v5279, %v5285
        %v5319 = vmul.f32 %v5287, 0.05
        %v5320 = vmul.f32 %v5288, 0.05
        %v5321 = vmul.f32 %v5289, 0.05
        %v5322 = vmul.f32 %v5290, 0.05
        %v5323 = vmul.f32 %v5291, 0.05
        %v5324 = vmul.f32 %v5292, 0.05
        %v5325 = vmul.f32 %v5293, 0.05
        %v5326 = vmul.f32 %v5294, 0.05
        %v5327 = vmul.f32 %v5295, 0.05
        %v5328 = vmul.f32 %v5296, 0.05
        %v5329 = vmul.f32 %v5297, 0.05
        %v5330 = vmul.f32 %v5298, 0.05
        %v5331 = vmul.f32 %v5299, 0.05
        %v5332 = vmul.f32 %v5300, 0.05
        %v5333 = vmul.f32 %v5301, 0.05
        %v5334 = vmul.f32 %v5302, 0.05
        %v5335 = vmul.f32 %v5303, 0.05
        %v5336 = vmul.f32 %v5304, 0.05
        %v5337 = vmul.f32 %v5305, 0.05
        %v5338 = vmul.f32 %v5306, 0.05
        %v5339 = vmul.f32 %v5307, 0.05
        %v5340 = vmul.f32 %v5308, 0.05
        %v5341 = vmul.f32 %v5309, 0.05
        %v5342 = vmul.f32 %v5310, 0.05
        %v5343 = vmul.f32 %v5311, 0.05
        %v5344 = vmul.f32 %v5312, 0.05
        %v5345 = vmul.f32 %v5313, 0.05
        %v5346 = vmul.f32 %v5314, 0.05
        %v5347 = vmul.f32 %v5315, 0.05
        %v5348 = vmul.f32 %v5316, 0.05
        %v5349 = vmul.f32 %v5317, 0.05
        %v5350 = vmul.f32 %v5318, 0.05
        %v5351 = vmax.f32 %v5287, %v5319
        %v5352 = vmax.f32 %v5288, %v5320
        %v5353 = vmax.f32 %v5289, %v5321
        %v5354 = vmax.f32 %v5290, %v5322
        %v5355 = vmax.f32 %v5291, %v5323
        %v5356 = vmax.f32 %v5292, %v5324
        %v5357 = vmax.f32 %v5293, %v5325
        %v5358 = vmax.f32 %v5294, %v5326
        %v5359 = vmax.f32 %v5295, %v5327
        %v5360 = vmax.f32 %v5296, %v5328
        %v5361 = vmax.f32 %v5297, %v5329
        %v5362 = vmax.f32 %v5298, %v5330
        %v5363 = vmax.f32 %v5299, %v5331
        %v5364 = vmax.f32 %v5300, %v5332
        %v5365 = vmax.f32 %v5301, %v5333
        %v5366 = vmax.f32 %v5302, %v5334
        %v5367 = vmax.f32 %v5303, %v5335
        %v5368 = vmax.f32 %v5304, %v5336
        %v5369 = vmax.f32 %v5305, %v5337
        %v5370 = vmax.f32 %v5306, %v5338
        %v5371 = vmax.f32 %v5307, %v5339
        %v5372 = vmax.f32 %v5308, %v5340
        %v5373 = vmax.f32 %v5309, %v5341
        %v5374 = vmax.f32 %v5310, %v5342
        %v5375 = vmax.f32 %v5311, %v5343
        %v5376 = vmax.f32 %v5312, %v5344
        %v5377 = vmax.f32 %v5313, %v5345
        %v5378 = vmax.f32 %v5314, %v5346
        %v5379 = vmax.f32 %v5315, %v5347
        %v5380 = vmax.f32 %v5316, %v5348
        %v5381 = vmax.f32 %v5317, %v5349
        %v5382 = vmax.f32 %v5318, %v5350
        %v5383 = vld [vmem:[%s5] sm:$0xff]
        %v5384 = vld [vmem:[%s5 + $0x8] sm:$0xff]
        %v5385 = vld [vmem:[%s5 + $0x10] sm:$0xff]
        %v5386 = vld [vmem:[%s5 + $0x18] sm:$0xff]
        %v5387 = vld [vmem:[%s5 + $0x20] sm:$0xff]
        %v5388 = vld [vmem:[%s5 + $0x28] sm:$0xff]
        %v5389 = vld [vmem:[%s5 + $0x30] sm:$0xff]
        %v5390 = vld [vmem:[%s5 + $0x38] sm:$0xff]
        %v5391 = vld [vmem:[%s5 + $0x40] sm:$0xff]
        %v5392 = vld [vmem:[%s5 + $0x48] sm:$0xff]
        %v5393 = vld [vmem:[%s5 + $0x50] sm:$0xff]
        %v5394 = vld [vmem:[%s5 + $0x58] sm:$0xff]
        %v5395 = vld [vmem:[%s5 + $0x60] sm:$0xff]
        %v5396 = vld [vmem:[%s5 + $0x68] sm:$0xff]
        %v5397 = vld [vmem:[%s5 + $0x70] sm:$0xff]
        %v5398 = vld [vmem:[%s5 + $0x78] sm:$0xff]
        %v5399 = vld [vmem:[%s5 + $0x80] sm:$0xff]
        %v5400 = vld [vmem:[%s5 + $0x88] sm:$0xff]
        %v5401 = vld [vmem:[%s5 + $0x90] sm:$0xff]
        %v5402 = vld [vmem:[%s5 + $0x98] sm:$0xff]
        %v5403 = vld [vmem:[%s5 + $0xa0] sm:$0xff]
        %v5404 = vld [vmem:[%s5 + $0xa8] sm:$0xff]
        %v5405 = vld [vmem:[%s5 + $0xb0] sm:$0xff]
        %v5406 = vld [vmem:[%s5 + $0xb8] sm:$0xff]
        %v5407 = vld [vmem:[%s6] sm:$0x1]
        %v5409 = vlaneseq
        %v5410 = vshrl.u32 %v5409, 7
        %v5411 = vsub.s32 0, %v5410
        %v5412 = vrot.slane %v5407, %v5411
        %v5415 = vsel %vm309, %v5351, 0
        %v5418 = vsel %vm309, %v5352, 0
        %v5421 = vsel %vm309, %v5353, 0
        %v5424 = vsel %vm309, %v5354, 0
        %v5427 = vsel %vm309, %v5355, 0
        %v5430 = vsel %vm309, %v5356, 0
        %v5433 = vsel %vm309, %v5357, 0
        %v5436 = vsel %vm309, %v5358, 0
        %v5439 = vsel %vm309, %v5359, 0
        %v5442 = vsel %vm309, %v5360, 0
        %v5445 = vsel %vm309, %v5361, 0
        %v5448 = vsel %vm309, %v5362, 0
        %v5451 = vsel %vm309, %v5363, 0
        %v5454 = vsel %vm309, %v5364, 0
        %v5457 = vsel %vm309, %v5365, 0
        %v5460 = vsel %vm309, %v5366, 0
        %v5463 = vsel %vm309, %v5367, 0
        %v5466 = vsel %vm309, %v5368, 0
        %v5469 = vsel %vm309, %v5369, 0
        %v5472 = vsel %vm309, %v5370, 0
        %v5475 = vsel %vm309, %v5371, 0
        %v5478 = vsel %vm309, %v5372, 0
        %v5481 = vsel %vm309, %v5373, 0
        %v5484 = vsel %vm309, %v5374, 0
        %v5487 = vsel %vm309, %v5375, 0
        %v5490 = vsel %vm309, %v5376, 0
        %v5493 = vsel %vm309, %v5377, 0
        %v5496 = vsel %vm309, %v5378, 0
        %v5499 = vsel %vm309, %v5379, 0
        %v5502 = vsel %vm309, %v5380, 0
        %v5505 = vsel %vm309, %v5381, 0
        %v5508 = vsel %vm309, %v5382, 0
        %5510 = vmatprep.subr.mxu0 0.0
        %5511 = vmatpush1.msra.mxu0 %v5383
        %5512 = vmatprep.subr.mxu0 0.0
        %5513 = vmatpush1.msra.mxu0 %v5384
        %5514 = vmatprep.subr.mxu0 0.0
        %5515 = vmatpush1.msra.mxu0 %v5385
        %5516 = vmatprep.subr.mxu0 0.0
        %5517 = vmatpush1.msra.mxu0 %v5386
        %5518 = vmatprep.subr.mxu0 0.0
        %5519 = vmatpush1.msra.mxu0 %v5387
        %5520 = vmatprep.subr.mxu0 0.0
        %5521 = vmatpush1.msra.mxu0 %v5388
        %5522 = vmatprep.subr.mxu0 0.0
        %5523 = vmatpush1.msra.mxu0 %v5389
        %5524 = vmatprep.subr.mxu0 0.0
        %5525 = vmatpush1.msra.mxu0 %v5390
        %5526 = vmatprep.subr.mxu0 0.0
        %5527 = vmatpush1.msra.mxu0 %v5391
        %5528 = vmatprep.subr.mxu0 0.0
        %5529 = vmatpush1.msra.mxu0 %v5392
        %5530 = vmatprep.subr.mxu0 0.0
        %5531 = vmatpush1.msra.mxu0 %v5393
        %5532 = vmatprep.subr.mxu0 0.0
        %5533 = vmatpush1.msra.mxu0 %v5394
        %5534 = vmatprep.subr.mxu0 0.0
        %5535 = vmatpush1.msra.mxu0 %v5395
        %5536 = vmatprep.subr.mxu0 0.0
        %5537 = vmatpush1.msra.mxu0 %v5396
        %5538 = vmatprep.subr.mxu0 0.0
        %5539 = vmatpush1.msra.mxu0 %v5397
        %5540 = vmatprep.subr.mxu0 0.0
        %5541 = vmatpush1.msra.mxu0 %v5398
        %5542 = vmatprep.subr.mxu0 0.0
        %5543 = vmatpush1.msra.mxu0 %v5399
        %5544 = vmatprep.subr.mxu0 0.0
        %5545 = vmatpush1.msra.mxu0 %v5400
        %5546 = vmatprep.subr.mxu0 0.0
        %5547 = vmatpush1.msra.mxu0 %v5401
        %5548 = vmatprep.subr.mxu0 0.0
        %5549 = vmatpush1.msra.mxu0 %v5402
        %5550 = vmatprep.subr.mxu0 0.0
        %5551 = vmatpush1.msra.mxu0 %v5403
        %5552 = vmatprep.subr.mxu0 0.0
        %5553 = vmatpush1.msra.mxu0 %v5404
        %5554 = vmatprep.subr.mxu0 0.0
        %5555 = vmatpush1.msra.mxu0 %v5405
        %5556 = vmatprep.subr.mxu0 0.0
        %5557 = vmatpush1.msra.mxu0 %v5406
        %5558 = vmatprep.subr.mxu0 0.0
        %5559 = vmatpush1.msra.mxu0 0.0
        %5560 = vmatprep.subr.mxu0 0.0
        %5561 = vmatpush1.msra.mxu0 0.0
        %5562 = vmatprep.subr.mxu0 0.0
        %5563 = vmatpush1.msra.mxu0 0.0
        %5564 = vmatprep.subr.mxu0 0.0
        %5565 = vmatpush1.msra.mxu0 0.0
        %5566 = vmatprep.subr.mxu0 0.0
        %5567 = vmatpush1.msra.mxu0 0.0
        %5568 = vmatprep.subr.mxu0 0.0
        %5569 = vmatpush1.msra.mxu0 0.0
        %5570 = vmatprep.subr.mxu0 0.0
        %5571 = vmatpush1.msra.mxu0 0.0
        %5572 = vmatprep.subr.mxu0 0.0
        %5573 = vmatpush1.msra.mxu0 0.0
        %5574 = vmatprep.mubr.f32.mxu0 %v5415
        %5575 = vmatmul.mubr.f32.gmra.mrb[0].mxu0 %v2134
        %v5576 = vpop.f32.mrb[0].mxu0
        %v5577 = vadd.f32 %v5412, %v5576
        %v5578 = vpop.f32.mrb[0].mxu0
        %5579 = vmatprep.mubr.f32.mxu0 %v5418
        %5580 = vmatmul.mubr.f32.gmra.mrb[0].mxu0 %v2135
        %v5581 = vpop.f32.mrb[0].mxu0
        %v5582 = vadd.f32 %v5412, %v5581
        %v5583 = vpop.f32.mrb[0].mxu0
        %5584 = vmatprep.mubr.f32.mxu0 %v5421
        %5585 = vmatmul.mubr.f32.gmra.mrb[0].mxu0 %v2136
        %v5586 = vpop.f32.mrb[0].mxu0
        %v5587 = vadd.f32 %v5412, %v5586
        %v5588 = vpop.f32.mrb[0].mxu0
        %5589 = vmatprep.mubr.f32.mxu0 %v5424
        %5590 = vmatmul.mubr.f32.gmra.mrb[0].mxu0 %v2137
        %v5591 = vpop.f32.mrb[0].mxu0
        %v5592 = vadd.f32 %v5412, %v5591
        %v5593 = vpop.f32.mrb[0].mxu0
        %5594 = vmatprep.mubr.f32.mxu0 %v5427
        %5595 = vmatmul.mubr.f32.gmra.mrb[0].mxu0 %v2138
        %v5596 = vpop.f32.mrb[0].mxu0
        %v5597 = vadd.f32 %v5412, %v5596
        %v5598 = vpop.f32.mrb[0].mxu0
        %5599 = vmatprep.mubr.f32.mxu0 %v5430
        %5600 = vmatmul.mubr.f32.gmra.mrb[0].mxu0 %v2139
        %v5601 = vpop.f32.mrb[0].mxu0
        %v5602 = vadd.f32 %v5412, %v5601
        %v5603 = vpop.f32.mrb[0].mxu0
        %5604 = vmatprep.mubr.f32.mxu0 %v5433
        %5605 = vmatmul.mubr.f32.gmra.mrb[0].mxu0 %v2140
        %v5606 = vpop.f32.mrb[0].mxu0
        %v5607 = vadd.f32 %v5412, %v5606
        %v5608 = vpop.f32.mrb[0].mxu0
        %5609 = vmatprep.mubr.f32.mxu0 %v5436
        %5610 = vmatmul.mubr.f32.gmra.mrb[0].mxu0 %v2141
        %v5611 = vpop.f32.mrb[0].mxu0
        %v5612 = vadd.f32 %v5412, %v5611
        %v5613 = vpop.f32.mrb[0].mxu0
        %5614 = vmatprep.mubr.f32.mxu0 %v5439
        %5615 = vmatmul.mubr.f32.gmra.mrb[0].mxu0 %v2142
        %v5616 = vpop.f32.mrb[0].mxu0
        %v5617 = vadd.f32 %v5412, %v5616
        %v5618 = vpop.f32.mrb[0].mxu0
        %5619 = vmatprep.mubr.f32.mxu0 %v5442
        %5620 = vmatmul.mubr.f32.gmra.mrb[0].mxu0 %v2143
        %v5621 = vpop.f32.mrb[0].mxu0
        %v5622 = vadd.f32 %v5412, %v5621
        %v5623 = vpop.f32.mrb[0].mxu0
        %5624 = vmatprep.mubr.f32.mxu0 %v5445
        %5625 = vmatmul.mubr.f32.gmra.mrb[0].mxu0 %v2144
        %v5626 = vpop.f32.mrb[0].mxu0
        %v5627 = vadd.f32 %v5412, %v5626
        %v5628 = vpop.f32.mrb[0].mxu0
        %5629 = vmatprep.mubr.f32.mxu0 %v5448
        %5630 = vmatmul.mubr.f32.gmra.mrb[0].mxu0 %v2145
        %v5631 = vpop.f32.mrb[0].mxu0
        %v5632 = vadd.f32 %v5412, %v5631
        %v5633 = vpop.f32.mrb[0].mxu0
        %5634 = vmatprep.mubr.f32.mxu0 %v5451
        %5635 = vmatmul.mubr.f32.gmra.mrb[0].mxu0 %v2146
        %v5636 = vpop.f32.mrb[0].mxu0
        %v5637 = vadd.f32 %v5412, %v5636
        %v5638 = vpop.f32.mrb[0].mxu0
        %5639 = vmatprep.mubr.f32.mxu0 %v5454
        %5640 = vmatmul.mubr.f32.gmra.mrb[0].mxu0 %v2147
        %v5641 = vpop.f32.mrb[0].mxu0
        %v5642 = vadd.f32 %v5412, %v5641
        %v5643 = vpop.f32.mrb[0].mxu0
        %5644 = vmatprep.mubr.f32.mxu0 %v5457
        %5645 = vmatmul.mubr.f32.gmra.mrb[0].mxu0 %v2148
        %v5646 = vpop.f32.mrb[0].mxu0
        %v5647 = vadd.f32 %v5412, %v5646
        %v5648 = vpop.f32.mrb[0].mxu0
        %5649 = vmatprep.mubr.f32.mxu0 %v5460
        %5650 = vmatmul.mubr.f32.gmra.mrb[0].mxu0 %v2149
        %v5651 = vpop.f32.mrb[0].mxu0
        %v5652 = vadd.f32 %v5412, %v5651
        %v5653 = vpop.f32.mrb[0].mxu0
        %5654 = vmatprep.mubr.f32.mxu0 %v5463
        %5655 = vmatmul.mubr.f32.gmra.mrb[0].mxu0 %v2150
        %v5656 = vpop.f32.mrb[0].mxu0
        %v5657 = vadd.f32 %v5412, %v5656
        %v5658 = vpop.f32.mrb[0].mxu0
        %5659 = vmatprep.mubr.f32.mxu0 %v5466
        %5660 = vmatmul.mubr.f32.gmra.mrb[0].mxu0 %v2151
        %v5661 = vpop.f32.mrb[0].mxu0
        %v5662 = vadd.f32 %v5412, %v5661
        %v5663 = vpop.f32.mrb[0].mxu0
        %5664 = vmatprep.mubr.f32.mxu0 %v5469
        %5665 = vmatmul.mubr.f32.gmra.mrb[0].mxu0 %v2152
        %v5666 = vpop.f32.mrb[0].mxu0
        %v5667 = vadd.f32 %v5412, %v5666
        %v5668 = vpop.f32.mrb[0].mxu0
        %5669 = vmatprep.mubr.f32.mxu0 %v5472
        %5670 = vmatmul.mubr.f32.gmra.mrb[0].mxu0 %v2153
        %v5671 = vpop.f32.mrb[0].mxu0
        %v5672 = vadd.f32 %v5412, %v5671
        %v5673 = vpop.f32.mrb[0].mxu0
        %5674 = vmatprep.mubr.f32.mxu0 %v5475
        %5675 = vmatmul.mubr.f32.gmra.mrb[0].mxu0 %v2154
        %v5676 = vpop.f32.mrb[0].mxu0
        %v5677 = vadd.f32 %v5412, %v5676
        %v5678 = vpop.f32.mrb[0].mxu0
        %5679 = vmatprep.mubr.f32.mxu0 %v5478
        %5680 = vmatmul.mubr.f32.gmra.mrb[0].mxu0 %v2155
        %v5681 = vpop.f32.mrb[0].mxu0
        %v5682 = vadd.f32 %v5412, %v5681
        %v5683 = vpop.f32.mrb[0].mxu0
        %5684 = vmatprep.mubr.f32.mxu0 %v5481
        %5685 = vmatmul.mubr.f32.gmra.mrb[0].mxu0 %v2156
        %v5686 = vpop.f32.mrb[0].mxu0
        %v5687 = vadd.f32 %v5412, %v5686
        %v5688 = vpop.f32.mrb[0].mxu0
        %5689 = vmatprep.mubr.f32.mxu0 %v5484
        %5690 = vmatmul.mubr.f32.gmra.mrb[0].mxu0 %v2157
        %v5691 = vpop.f32.mrb[0].mxu0
        %v5692 = vadd.f32 %v5412, %v5691
        %v5693 = vpop.f32.mrb[0].mxu0
        %5694 = vmatprep.mubr.f32.mxu0 %v5487
        %5695 = vmatmul.mubr.f32.gmra.mrb[0].mxu0 %v2158
        %v5696 = vpop.f32.mrb[0].mxu0
        %v5697 = vadd.f32 %v5412, %v5696
        %v5698 = vpop.f32.mrb[0].mxu0
        %5699 = vmatprep.mubr.f32.mxu0 %v5490
        %5700 = vmatmul.mubr.f32.gmra.mrb[0].mxu0 %v2159
        %v5701 = vpop.f32.mrb[0].mxu0
        %v5702 = vadd.f32 %v5412, %v5701
        %v5703 = vpop.f32.mrb[0].mxu0
        %5704 = vmatprep.mubr.f32.mxu0 %v5493
        %5705 = vmatmul.mubr.f32.gmra.mrb[0].mxu0 %v2160
        %v5706 = vpop.f32.mrb[0].mxu0
        %v5707 = vadd.f32 %v5412, %v5706
        %v5708 = vpop.f32.mrb[0].mxu0
        %5709 = vmatprep.mubr.f32.mxu0 %v5496
        %5710 = vmatmul.mubr.f32.gmra.mrb[0].mxu0 %v2161
        %v5711 = vpop.f32.mrb[0].mxu0
        %v5712 = vadd.f32 %v5412, %v5711
        %v5713 = vpop.f32.mrb[0].mxu0
        %5714 = vmatprep.mubr.f32.mxu0 %v5499
        %5715 = vmatmul.mubr.f32.gmra.mrb[0].mxu0 %v2162
        %v5716 = vpop.f32.mrb[0].mxu0
        %v5717 = vadd.f32 %v5412, %v5716
        %v5718 = vpop.f32.mrb[0].mxu0
        %5719 = vmatprep.mubr.f32.mxu0 %v5502
        %5720 = vmatmul.mubr.f32.gmra.mrb[0].mxu0 %v2163
        %v5721 = vpop.f32.mrb[0].mxu0
        %v5722 = vadd.f32 %v5412, %v5721
        %v5723 = vpop.f32.mrb[0].mxu0
        %5724 = vmatprep.mubr.f32.mxu0 %v5505
        %5725 = vmatmul.mubr.f32.gmra.mrb[0].mxu0 %v2164
        %v5726 = vpop.f32.mrb[0].mxu0
        %v5727 = vadd.f32 %v5412, %v5726
        %v5728 = vpop.f32.mrb[0].mxu0
        %5729 = vmatprep.mubr.f32.mxu0 %v5508
        %5730 = vmatmul.mubr.f32.gmra.mrb[0].mxu0 %v2165
        %v5731 = vpop.f32.mrb[0].mxu0
        %v5732 = vadd.f32 %v5412, %v5731
        %v5733 = vpop.f32.mrb[0].mxu0
        %5734 = vdwg.mxu0
        %v5735 = vmul.f32 %v5577, 0.05
        %v5736 = vmul.f32 %v5582, 0.05
        %v5737 = vmul.f32 %v5587, 0.05
        %v5738 = vmul.f32 %v5592, 0.05
        %v5739 = vmul.f32 %v5597, 0.05
        %v5740 = vmul.f32 %v5602, 0.05
        %v5741 = vmul.f32 %v5607, 0.05
        %v5742 = vmul.f32 %v5612, 0.05
        %v5743 = vmul.f32 %v5617, 0.05
        %v5744 = vmul.f32 %v5622, 0.05
        %v5745 = vmul.f32 %v5627, 0.05
        %v5746 = vmul.f32 %v5632, 0.05
        %v5747 = vmul.f32 %v5637, 0.05
        %v5748 = vmul.f32 %v5642, 0.05
        %v5749 = vmul.f32 %v5647, 0.05
        %v5750 = vmul.f32 %v5652, 0.05
        %v5751 = vmul.f32 %v5657, 0.05
        %v5752 = vmul.f32 %v5662, 0.05
        %v5753 = vmul.f32 %v5667, 0.05
        %v5754 = vmul.f32 %v5672, 0.05
        %v5755 = vmul.f32 %v5677, 0.05
        %v5756 = vmul.f32 %v5682, 0.05
        %v5757 = vmul.f32 %v5687, 0.05
        %v5758 = vmul.f32 %v5692, 0.05
        %v5759 = vmul.f32 %v5697, 0.05
        %v5760 = vmul.f32 %v5702, 0.05
        %v5761 = vmul.f32 %v5707, 0.05
        %v5762 = vmul.f32 %v5712, 0.05
        %v5763 = vmul.f32 %v5717, 0.05
        %v5764 = vmul.f32 %v5722, 0.05
        %v5765 = vmul.f32 %v5727, 0.05
        %v5766 = vmul.f32 %v5732, 0.05
        %v5767 = vmax.f32 %v5577, %v5735
        %v5768 = vmax.f32 %v5582, %v5736
        %v5769 = vmax.f32 %v5587, %v5737
        %v5770 = vmax.f32 %v5592, %v5738
        %v5771 = vmax.f32 %v5597, %v5739
        %v5772 = vmax.f32 %v5602, %v5740
        %v5773 = vmax.f32 %v5607, %v5741
        %v5774 = vmax.f32 %v5612, %v5742
        %v5775 = vmax.f32 %v5617, %v5743
        %v5776 = vmax.f32 %v5622, %v5744
        %v5777 = vmax.f32 %v5627, %v5745
        %v5778 = vmax.f32 %v5632, %v5746
        %v5779 = vmax.f32 %v5637, %v5747
        %v5780 = vmax.f32 %v5642, %v5748
        %v5781 = vmax.f32 %v5647, %v5749
        %v5782 = vmax.f32 %v5652, %v5750
        %v5783 = vmax.f32 %v5657, %v5751
        %v5784 = vmax.f32 %v5662, %v5752
        %v5785 = vmax.f32 %v5667, %v5753
        %v5786 = vmax.f32 %v5672, %v5754
        %v5787 = vmax.f32 %v5677, %v5755
        %v5788 = vmax.f32 %v5682, %v5756
        %v5789 = vmax.f32 %v5687, %v5757
        %v5790 = vmax.f32 %v5692, %v5758
        %v5791 = vmax.f32 %v5697, %v5759
        %v5792 = vmax.f32 %v5702, %v5760
        %v5793 = vmax.f32 %v5707, %v5761
        %v5794 = vmax.f32 %v5712, %v5762
        %v5795 = vmax.f32 %v5717, %v5763
        %v5796 = vmax.f32 %v5722, %v5764
        %v5797 = vmax.f32 %v5727, %v5765
        %v5798 = vmax.f32 %v5732, %v5766
        %v5799 = vadd.f32 %v277, %v5767
        %v5800 = vadd.f32 %v278, %v5768
        %v5801 = vadd.f32 %v279, %v5769
        %v5802 = vadd.f32 %v280, %v5770
        %v5803 = vadd.f32 %v281, %v5771
        %v5804 = vadd.f32 %v282, %v5772
        %v5805 = vadd.f32 %v283, %v5773
        %v5806 = vadd.f32 %v284, %v5774
        %v5807 = vadd.f32 %v285, %v5775
        %v5808 = vadd.f32 %v286, %v5776
        %v5809 = vadd.f32 %v287, %v5777
        %v5810 = vadd.f32 %v288, %v5778
        %v5811 = vadd.f32 %v289, %v5779
        %v5812 = vadd.f32 %v290, %v5780
        %v5813 = vadd.f32 %v291, %v5781
        %v5814 = vadd.f32 %v292, %v5782
        %v5815 = vadd.f32 %v293, %v5783
        %v5816 = vadd.f32 %v294, %v5784
        %v5817 = vadd.f32 %v295, %v5785
        %v5818 = vadd.f32 %v296, %v5786
        %v5819 = vadd.f32 %v297, %v5787
        %v5820 = vadd.f32 %v298, %v5788
        %v5821 = vadd.f32 %v299, %v5789
        %v5822 = vadd.f32 %v300, %v5790
        %v5823 = vadd.f32 %v301, %v5791
        %v5824 = vadd.f32 %v302, %v5792
        %v5825 = vadd.f32 %v303, %v5793
        %v5826 = vadd.f32 %v304, %v5794
        %v5827 = vadd.f32 %v305, %v5795
        %v5828 = vadd.f32 %v306, %v5796
        %v5829 = vadd.f32 %v307, %v5797
        %v5830 = vadd.f32 %v308, %v5798
        %5831 = vst.msk [vmem:[%s271] sm:$0xff] %vm309, %v5799
        %5832 = vst.msk [vmem:[%s271 + $0x8] sm:$0xff] %vm309, %v5800
        %5833 = vst.msk [vmem:[%s271 + $0x10] sm:$0xff] %vm309, %v5801
        %5834 = vst.msk [vmem:[%s271 + $0x18] sm:$0xff] %vm309, %v5802
        %5835 = vst.msk [vmem:[%s271 + $0x20] sm:$0xff] %vm309, %v5803
        %5836 = vst.msk [vmem:[%s271 + $0x28] sm:$0xff] %vm309, %v5804
        %5837 = vst.msk [vmem:[%s271 + $0x30] sm:$0xff] %vm309, %v5805
        %5838 = vst.msk [vmem:[%s271 + $0x38] sm:$0xff] %vm309, %v5806
        %5839 = vst.msk [vmem:[%s271 + $0x40] sm:$0xff] %vm309, %v5807
        %5840 = vst.msk [vmem:[%s271 + $0x48] sm:$0xff] %vm309, %v5808
        %5841 = vst.msk [vmem:[%s271 + $0x50] sm:$0xff] %vm309, %v5809
        %5842 = vst.msk [vmem:[%s271 + $0x58] sm:$0xff] %vm309, %v5810
        %5843 = vst.msk [vmem:[%s271 + $0x60] sm:$0xff] %vm309, %v5811
        %5844 = vst.msk [vmem:[%s271 + $0x68] sm:$0xff] %vm309, %v5812
        %5845 = vst.msk [vmem:[%s271 + $0x70] sm:$0xff] %vm309, %v5813
        %5846 = vst.msk [vmem:[%s271 + $0x78] sm:$0xff] %vm309, %v5814
        %5847 = vst.msk [vmem:[%s271 + $0x80] sm:$0xff] %vm309, %v5815
        %5848 = vst.msk [vmem:[%s271 + $0x88] sm:$0xff] %vm309, %v5816
        %5849 = vst.msk [vmem:[%s271 + $0x90] sm:$0xff] %vm309, %v5817
        %5850 = vst.msk [vmem:[%s271 + $0x98] sm:$0xff] %vm309, %v5818
        %5851 = vst.msk [vmem:[%s271 + $0xa0] sm:$0xff] %vm309, %v5819
        %5852 = vst.msk [vmem:[%s271 + $0xa8] sm:$0xff] %vm309, %v5820
        %5853 = vst.msk [vmem:[%s271 + $0xb0] sm:$0xff] %vm309, %v5821
        %5854 = vst.msk [vmem:[%s271 + $0xb8] sm:$0xff] %vm309, %v5822
        %5855 = vst.msk [vmem:[%s271 + $0xc0] sm:$0xff] %vm309, %v5823
        %5856 = vst.msk [vmem:[%s271 + $0xc8] sm:$0xff] %vm309, %v5824
        %5857 = vst.msk [vmem:[%s271 + $0xd0] sm:$0xff] %vm309, %v5825
        %5858 = vst.msk [vmem:[%s271 + $0xd8] sm:$0xff] %vm309, %v5826
        %5859 = vst.msk [vmem:[%s271 + $0xe0] sm:$0xff] %vm309, %v5827
        %5860 = vst.msk [vmem:[%s271 + $0xe8] sm:$0xff] %vm309, %v5828
        %5861 = vst.msk [vmem:[%s271 + $0xf0] sm:$0xff] %vm309, %v5829
        %5862 = vst.msk [vmem:[%s271 + $0xf8] sm:$0xff] %vm309, %v5830
        %s5863 = sand.u32 %s181, 1
        %s5864 = scalar_lea.sflag [#allocation4], %s5863
        %s5865 = sand.u32 %s181, 1
        %s5866 = smul.addr %s5865, 256
        %s5867 = scalar_lea.vmem [#allocation3], %s5866
        // Predicated region
        $region49: #{tpu_custom_call.1} parent=47 // pred_check
          %p5868 = pneg %p191
        $region50: #{tpu_custom_call.1} parent=47 // pred_check_branch
          %5870 = sbr.rel (%p5868) target = $region52
        $region51: #{tpu_custom_call.1} parent=47 // pred_region
          %s5872 = ssub.s32 4096, 4096
          %5873 = vsyncadd %s5864, %s5872
          %s5874 = smul.addr %s21, 32
          %s5875 = smul.addr %s5874, 128
          %s5876 = scalar_lea.hbm %s7, %s5875
          %s5877 = sshll.u32 %s5867, 4
          %s5878 = int_to_ptr.vmem [resolvable:$true] %s5877
          %5883 = dma.vmem_to_hbm [thread:$0]  %s5878, 4096, %s5876, %s5864, 128, 128, 8
        $region52: #{tpu_custom_call.1} parent=47 // pred_fallthru
          _
      $region48: #{tpu_custom_call.1} parent=5 // pred_fallthru
        _
      %p5884 = scmp.le.s32.totalorder 2, %s16
      // Predicated region
      $region53: #{tpu_custom_call.1} parent=5 // pred_check
        %p5885 = pneg %p5884
      $region54: #{tpu_custom_call.1} parent=5 // pred_check_branch
        %5887 = sbr.rel (%p5885) target = $region56
      $region55: #{tpu_custom_call.1} parent=5 // pred_region
        %s5888 = ssub.s32 %s16, 2
        // Predicated region
        $region57: #{tpu_custom_call.1} parent=55 // pred_check
          %p5889 = pneg %p197
        $region58: #{tpu_custom_call.1} parent=55 // pred_check_branch
          %5891 = sbr.rel (%p5889) target = $region60
        $region59: #{tpu_custom_call.1} parent=55 // pred_region
          %s5892 = sand.u32 %s182, 1
          %s5893 = scalar_lea.sflag [#allocation4], %s5892
          %s5894 = sand.u32 %s182, 1
          %s5895 = smul.addr %s5894, 256
          %s5896 = scalar_lea.vmem [#allocation3], %s5895
          %5897 = dma.done %s5893, 4096
        $region60: #{tpu_custom_call.1} parent=55 // pred_fallthru
          _
      $region56: #{tpu_custom_call.1} parent=5 // pred_fallthru
        _
    $region6: #{tpu_custom_call.1} parent=1 // loop_footer
      %s20 = sadd.s32 1, %s16
    $region7: #{tpu_custom_call.1} parent=1 // loop_footer_branch
      %15 = sbr.rel target = $region3
    $region8: #{tpu_custom_call.1} parent=1 // loop_exit
      _
    %5898 = vsyncpa [#allocation4], 1
    %s5899 = scalar_lea.sflag [#allocation4], 1
    %5900 = vsyncpa %s5899, 1

</llo_original>
